<compile_context>
chip_gen: v5e
topology: v5e:2x2
jax: 0.10.0
libtpu: 0.0.40
codegen_flags: <defaults>
</compile_context>

<pallas_src>
import functools

import jax
import jax.numpy as jnp
from jax import lax
from jax.experimental import pallas as pl
from jax.experimental.pallas import tpu as pltpu

EPS = 1e-5


def _round_up(a, b):
    return (a + b - 1) // b * b


# ---------------------------------------------------------------------------
# Flat-layout geometry shared by both layers (spatial dims are preserved).
# Flat index of padded coord (n, pd, ph, pw) = ((n*Dp + pd)*Hp + ph)*Wp + pw.
# The conv output for original voxel (d, h, w) is stored at the flat index of
# padded coord (d, h, w) ("anchor-corner" layout); taps read anchor + offset.
# ---------------------------------------------------------------------------
def make_flat_geom(N, D, H, W, tile_m=2048):
    Dp, Hp, Wp = D + 2, H + 2, W + 2
    Mp = N * Dp * Hp * Wp                                   # flat padded-volume length
    tile_m = _round_up(min(tile_m, _round_up(Mp, 128)), 128)
    Ma = _round_up(Mp, tile_m)                              # lane-dense output width
    max_off = 2 * Hp * Wp + 2 * Wp + 2                      # largest tap offset
    offpad = _round_up(max_off, 128)                        # slab tail, lane-aligned
    Lin = Ma + offpad                                       # flat input length
    offsets = tuple(kd * Hp * Wp + kh * Wp + kw
                    for kd in range(3) for kh in range(3) for kw in range(3))
    return dict(Dp=Dp, Hp=Hp, Wp=Wp, Mp=Mp, Ma=Ma, Lin=Lin, tile_m=tile_m,
                offpad=offpad, offsets=offsets, count=N * D * H * W,
                shift=Hp * Wp + Wp + 1)                     # anchor-corner -> padded-input shift


def make_valid_mask(N, D, H, W, geom):
    """(1, Ma) f32 mask: 1.0 at flat indices that are valid conv-output anchors."""
    m = jnp.pad(jnp.ones((N, D, H, W), jnp.float32), ((0, 0), (0, 2), (0, 2), (0, 2)))
    return jnp.pad(m.reshape(1, geom["Mp"]), ((0, 0), (0, geom["Ma"] - geom["Mp"])))


def _pack_input(x, cin_p, geom, dtype):
    """(N, Cin, D, H, W) -> flat padded channel-first (cin_p, Lin)."""
    N, Cin, D, H, W = x.shape
    xc = jnp.transpose(x, (1, 0, 2, 3, 4))                                  # (Cin, N, D, H, W)
    xc = jnp.pad(xc, ((0, cin_p - Cin), (0, 0), (1, 1), (1, 1), (1, 1)))    # zero "same" padding
    xflat = xc.reshape(cin_p, geom["Mp"])
    xflat = jnp.pad(xflat, ((0, 0), (0, geom["Lin"] - geom["Mp"])))
    return xflat.astype(dtype)


def _unpack_output(outflat, N, Cout, D, H, W, geom):
    """Flat (Cout, Ma) anchor-corner layout -> (N, Cout, D, H, W) f32."""
    o = outflat[:, :geom["Mp"]].reshape(Cout, N, geom["Dp"], geom["Hp"], geom["Wp"])
    o = o[:, :, :D, :H, :W]
    return jnp.transpose(o, (1, 0, 2, 3, 4)).astype(jnp.float32)


# ---------------------------------------------------------------------------
# Kernel A: per-M-tile conv (one slab DMA, double-buffered, 27 accumulating
# MXU dots over static tap slices) + per-tile partial BN statistics.
# ---------------------------------------------------------------------------
def _conv_stats_kernel(x_hbm, w_ref, mask_ref, y_ref, psum_ref, psq_ref,
                       xbuf, sems, *, offsets, cin_p, tile_m, slab_w, nt):
    i = pl.program_id(0)
    slot = i % 2

    def start_fetch(tile, slot_idx):
        start = pl.multiple_of(tile * tile_m, 128)
        pltpu.make_async_copy(
            x_hbm.at[:, pl.ds(start, slab_w)],     # (cin_p, slab_w) slab in HBM
            xbuf.at[slot_idx],
            sems.at[slot_idx]).start()

    # Prime the double buffer on the first grid step.
    @pl.when(i == 0)
    def _():
        start_fetch(0, 0)

    # Wait for the current tile's slab.
    pltpu.make_async_copy(
        x_hbm.at[:, pl.ds(0, slab_w)], xbuf.at[slot], sems.at[slot]).wait()

    # Prefetch the next tile's slab into the other slot (overlaps with compute below).
    @pl.when(i + 1 < nt)
    def _():
        start_fetch(i + 1, 1 - slot)

    # 27 accumulating MXU contractions over static tap windows of the VMEM slab.
    slab = xbuf[slot]                              # (cin_p, slab_w)
    w = w_ref[...]                                 # (Cout, 27*cin_p)
    acc = None
    for k, off in enumerate(offsets):              # static 27-way unroll
        part = jnp.dot(w[:, k * cin_p:(k + 1) * cin_p],
                       slab[:, off:off + tile_m],
                       preferred_element_type=jnp.float32)
        acc = part if acc is None else acc + part  # (Cout, tile_m) f32

    # Per-tile partial BatchNorm statistics over valid output voxels only.
    mask = mask_ref[...]                           # (1, tile_m) in {0, 1}
    ym = acc * mask
    psum_ref[0] = jnp.sum(ym, axis=1, keepdims=True)        # (Cout, 1)
    psq_ref[0] = jnp.sum(ym * acc, axis=1, keepdims=True)   # sum of y^2 over valid voxels

    y_ref[...] = acc                               # lane-dense conv output, f32


# ---------------------------------------------------------------------------
# Kernel B: folded BN affine (single FMA) + ReLU + valid-voxel mask (so the
# flat output can be reused directly as the next layer's padded input).
# ---------------------------------------------------------------------------
def _bn_relu_apply_kernel(y_ref, a_ref, b_ref, mask_ref, o_ref):
    o_ref[...] = (jnp.maximum(y_ref[...] * a_ref[...] + b_ref[...], 0.0)
                  * mask_ref[...]).astype(o_ref.dtype)


# ---------------------------------------------------------------------------
# One layer, flat layout in / flat layout out.
# xflat: (cin_p, Lin)   ->   (Cout, Ma) with padded-anchor columns zeroed.
# ---------------------------------------------------------------------------
def conv3d_bn_relu_flat(xflat, w, gamma, beta, mask, geom, *, eps=EPS,
                        mxu_dtype=jnp.float32):
    Cout, Cin = w.shape[0], w.shape[1]
    cin_p = _round_up(Cin, 8)
    assert xflat.shape == (cin_p, geom["Lin"])
    Kp = 27 * cin_p
    TM = geom["tile_m"]
    Ma = geom["Ma"]
    nt = Ma // TM
    slab_w = TM + geom["offpad"]

    # Weights -> (Cout, 27*cin_p), tap-major / channel-minor (matches kernel slices).
    wt = jnp.transpose(w, (2, 3, 4, 1, 0))                               # (3,3,3,Cin,Cout)
    wt = jnp.pad(wt, ((0, 0), (0, 0), (0, 0), (0, cin_p - Cin), (0, 0)))
    w2 = jnp.transpose(wt.reshape(Kp, Cout), (1, 0)).astype(mxu_dtype)   # (Cout, Kp)

    y, psum, psq = pl.pallas_call(
        functools.partial(_conv_stats_kernel, offsets=geom["offsets"], cin_p=cin_p,
                          tile_m=TM, slab_w=slab_w, nt=nt),
        out_shape=(jax.ShapeDtypeStruct((Cout, Ma), jnp.float32),
                   jax.ShapeDtypeStruct((nt, Cout, 1), jnp.float32),
                   jax.ShapeDtypeStruct((nt, Cout, 1), jnp.float32)),
        grid_spec=pltpu.PrefetchScalarGridSpec(
            num_scalar_prefetch=0,
            grid=(nt,),
            in_specs=[
                pl.BlockSpec(memory_space=pl.ANY),               # activation stays in HBM
                pl.BlockSpec((Cout, Kp), lambda i: (0, 0)),      # weights: VMEM-resident
                pl.BlockSpec((1, TM), lambda i: (0, i)),         # per-tile valid mask
            ],
            out_specs=[
                pl.BlockSpec((Cout, TM), lambda i: (0, i)),      # conv output tile
                pl.BlockSpec((1, Cout, 1), lambda i: (i, 0, 0)), # partial sum
                pl.BlockSpec((1, Cout, 1), lambda i: (i, 0, 0)), # partial sum of squares
            ],
            scratch_shapes=[
                pltpu.VMEM((2, cin_p, slab_w), mxu_dtype),       # double-buffered slab
                pltpu.SemaphoreType.DMA((2,)),
            ]),
        compiler_params=pltpu.CompilerParams(
            # "arbitrary": manual slab double-buffer primes on grid step 0 (see TODO above).
            dimension_semantics=("arbitrary",),
            vmem_limit_bytes=48 * 1024 * 1024),                  # safe on v5e/v6e/v7x
    )(xflat, w2, mask)

    # Combine partial stats; fold BN into a single per-channel FMA: y*a + b.
    count = jnp.float32(geom["count"])
    total = jnp.sum(psum, axis=0)                                # (Cout, 1)
    total_sq = jnp.sum(psq, axis=0)
    mean = total / count
    var = jnp.maximum(total_sq / count - mean * mean, 0.0)       # biased (train-mode) variance
    a = gamma.reshape(Cout, 1) * lax.rsqrt(var + eps)
    b = beta.reshape(Cout, 1) - mean * a

    out = pl.pallas_call(
        _bn_relu_apply_kernel,
        out_shape=jax.ShapeDtypeStruct((Cout, Ma), mxu_dtype),
        grid_spec=pltpu.PrefetchScalarGridSpec(
            num_scalar_prefetch=0,
            grid=(nt,),
            in_specs=[
                pl.BlockSpec((Cout, TM), lambda i: (0, i)),
                pl.BlockSpec((Cout, 1), lambda i: (0, 0)),
                pl.BlockSpec((Cout, 1), lambda i: (0, 0)),
                pl.BlockSpec((1, TM), lambda i: (0, i)),
            ],
            out_specs=pl.BlockSpec((Cout, TM), lambda i: (0, i)),
        ),
        compiler_params=pltpu.CompilerParams(
            dimension_semantics=("parallel",)),
    )(y, a.astype(jnp.float32), b.astype(jnp.float32), mask)
    return out


# ---------------------------------------------------------------------------
# encoder1 parameters + forward
# ---------------------------------------------------------------------------
def init_encoder1_params(key, in_channel, out_channel):
    k1, k2 = jax.random.split(key)

    def conv_init(k, cout, cin):
        scale = 1.0 / jnp.sqrt(jnp.float32(cin * 27))
        return jax.random.normal(k, (cout, cin, 3, 3, 3), jnp.float32) * scale

    return {
        "conv1_w": conv_init(k1, out_channel, in_channel),
        "bn1_gamma": jnp.ones((out_channel,), jnp.float32),
        "bn1_beta": jnp.zeros((out_channel,), jnp.float32),
        "conv2_w": conv_init(k2, out_channel, out_channel),
        "bn2_gamma": jnp.ones((out_channel,), jnp.float32),
        "bn2_beta": jnp.zeros((out_channel,), jnp.float32),
    }


def encoder1_forward(params, x_ncdhw, *, mxu_dtype=jnp.float32, tile_m=2048):
    """x_ncdhw: (N, Cin, D, H, W) f32 -> (N, Cout, D, H, W) f32.

    mxu_dtype=jnp.bfloat16 is recommended on v6e/v7x (bf16 MXU operands, f32 accumulation
    and f32 BN statistics); halves HBM gather traffic and the slab VMEM footprint.
    """
    N, Cin, D, H, W = x_ncdhw.shape
    Cout = params["conv1_w"].shape[0]
    geom = make_flat_geom(N, D, H, W, tile_m=tile_m)
    mask = make_valid_mask(N, D, H, W, geom)

    # Layer 1
    cin1_p = _round_up(Cin, 8)
    xflat = _pack_input(x_ncdhw, cin1_p, geom, mxu_dtype)
    y1 = conv3d_bn_relu_flat(xflat, params["conv1_w"], params["bn1_gamma"],
                             params["bn1_beta"], mask, geom, mxu_dtype=mxu_dtype)

    # Stay in the flat padded layout between layers: layer-1's masked output (zeros at all
    # invalid anchors) becomes layer-2's padded input by a single column shift + pad.
    cin2_p = _round_up(Cout, 8)
    s = geom["shift"]
    x2 = jnp.pad(y1, ((0, cin2_p - Cout), (s, geom["Lin"] - geom["Ma"] - s)))

    # Layer 2
    y2 = conv3d_bn_relu_flat(x2, params["conv2_w"], params["bn2_gamma"],
                             params["bn2_beta"], mask, geom, mxu_dtype=mxu_dtype)

    return _unpack_output(y2, N, Cout, D, H, W, geom)


# ---------------------------------------------------------------------------
# Pure-JAX reference (independent path via lax.conv_general_dilated)
# ---------------------------------------------------------------------------
def _ref_layer(x, w, gamma, beta, eps=EPS):
    y = lax.conv_general_dilated(
        x, w, window_strides=(1, 1, 1), padding=[(1, 1)] * 3,
        dimension_numbers=("NCDHW", "OIDHW", "NCDHW"))
    mean = jnp.mean(y, axis=(0, 2, 3, 4), keepdims=True)
    var = jnp.mean((y - mean) ** 2, axis=(0, 2, 3, 4), keepdims=True)   # biased, train-mode
    yhat = (y - mean) * lax.rsqrt(var + eps)
    out = yhat * gamma.reshape(1, -1, 1, 1, 1) + beta.reshape(1, -1, 1, 1, 1)
    return jnp.maximum(out, 0.0)


def encoder1_reference(params, x):
    y = _ref_layer(x, params["conv1_w"], params["bn1_gamma"], params["bn1_beta"])
    y = _ref_layer(y, params["conv2_w"], params["bn2_gamma"], params["bn2_beta"])
    return y


# ---------------------------------------------------------------------------
if __name__ == "__main__":
    in_channel, out_channel = 4, 8
    N, D, H, W = 2, 8, 8, 8

    key = jax.random.PRNGKey(0)
    kp, kx = jax.random.split(key)
    params = init_encoder1_params(kp, in_channel, out_channel)
    x = jax.random.normal(kx, (N, in_channel, D, H, W), jnp.float32)

    # tile_m=512 so the small test volume exercises the multi-tile, double-buffered path
    # (Ma=2048 -> 4 grid steps per kernel).
    fwd = jax.jit(functools.partial(encoder1_forward, tile_m=512))
    y = jax.block_until_ready(fwd(params, x))
    assert y.shape == (N, out_channel, D, H, W)

    y_ref = jax.block_until_ready(encoder1_reference(params, x))
    assert jnp.allclose(y, y_ref, atol=1e-2, rtol=1e-2), "f32 path mismatch vs JAX reference"

    # bf16 MXU-operand path (recommended on v6e/v7x); f32 accumulation + f32 BN stats.
    fwd_bf16 = jax.jit(functools.partial(encoder1_forward, tile_m=512,
                                         mxu_dtype=jnp.bfloat16))
    y_bf16 = jax.block_until_ready(fwd_bf16(params, x))
    assert jnp.allclose(y_bf16, y_ref, atol=5e-2, rtol=5e-2), "bf16 path mismatch vs reference"

    print("KERNEL_OK")
</pallas_src>

<mosaic_0001>
module attributes {stable_mosaic.version = 11 : i64} {
  func.func @_conv_stats_kernel(%arg0: i32, %arg1: memref<8x2304xf32, #tpu.memory_space<any>>, %arg2: memref<8x216xf32, #tpu.memory_space<vmem>>, %arg3: memref<1x512xf32, #tpu.memory_space<vmem>>, %arg4: memref<8x512xf32, #tpu.memory_space<vmem>>, %arg5: memref<1x8x1xf32, #tpu.memory_space<vmem>>, %arg6: memref<1x8x1xf32, #tpu.memory_space<vmem>>, %arg7: memref<2x8x768xf32, #tpu.memory_space<vmem>>, %arg8: memref<2x!tpu.dma_semaphore, #tpu.memory_space<semaphore_mem>>) attributes {dimension_semantics = [#tpu.dimension_semantics<arbitrary>], iteration_bounds = array<i64: 4>, scalar_prefetch = 0 : i64, scratch_operands = 2 : i64, tpu.core_type = #tpu.core_type<tc>, window_params = [{}, {pipeline_mode = #tpu.pipeline_mode<synchronous>, transform_indices = @transform_1, window_bounds = array<i64: 8, 216>}, {transform_indices = @transform_2, window_bounds = array<i64: 1, 512>}, {transform_indices = @transform_3, window_bounds = array<i64: 8, 512>}, {transform_indices = @transform_4, window_bounds = array<i64: 1, 8, 1>}, {transform_indices = @transform_5, window_bounds = array<i64: 1, 8, 1>}]} {
    %c2_i32 = arith.constant 2 : i32
    %c0_i32 = arith.constant 0 : i32
    %0 = arith.cmpi eq, %c2_i32, %c0_i32 : i32
    %c1_i32 = arith.constant 1 : i32
    %1 = arith.select %0, %c1_i32, %c2_i32 : i32
    %2 = arith.remsi %arg0, %1 : i32
    %c0_i32_0 = arith.constant 0 : i32
    %3 = arith.cmpi ne, %2, %c0_i32_0 : i32
    %c0_i32_1 = arith.constant 0 : i32
    %4 = arith.cmpi slt, %2, %c0_i32_1 : i32
    %c0_i32_2 = arith.constant 0 : i32
    %5 = arith.cmpi slt, %1, %c0_i32_2 : i32
    %6 = arith.xori %4, %5 : i1
    %7 = arith.andi %6, %3 : i1
    %8 = arith.addi %2, %1 : i32
    %9 = arith.select %7, %8, %2 : i32
    %c0_i32_3 = arith.constant 0 : i32
    %10 = arith.cmpi eq, %arg0, %c0_i32_3 : i32
    %11 = arith.extui %10 : i1 to i32
    %c0_i32_4 = arith.constant 0 : i32
    %12 = arith.cmpi ne, %11, %c0_i32_4 : i32
    scf.if %12 {
      %c0_i32_52 = arith.constant 0 : i32
      %148 = tpu.assume_multiple %c0_i32_52, 128 : i32
      %c0_i32_53 = arith.constant 0 : i32
      %c0_i32_54 = arith.constant 0 : i32
      %c0_i32_55 = arith.constant 0 : i32
      %149 = tpu.memref_slice %arg1[%c0_i32_55, %148] : memref<8x2304xf32, #tpu.memory_space<any>> -> memref<8x768xf32, #tpu.memory_space<any>>
      %c0_i32_56 = arith.constant 0 : i32
      %c0_i32_57 = arith.constant 0 : i32
      %150 = tpu.memref_slice %arg7[%c0_i32_53, %c0_i32_56, %c0_i32_57] : memref<2x8x768xf32, #tpu.memory_space<vmem>> -> memref<1x8x768xf32, #tpu.memory_space<vmem>>
      %151 = tpu.memref_squeeze %150 : memref<1x8x768xf32, #tpu.memory_space<vmem>> -> memref<8x768xf32, #tpu.memory_space<vmem>>
      %152 = tpu.memref_slice %arg8[%c0_i32_54] : memref<2x!tpu.dma_semaphore, #tpu.memory_space<semaphore_mem>> -> memref<1x!tpu.dma_semaphore, #tpu.memory_space<semaphore_mem>>
      %153 = tpu.memref_squeeze %152 : memref<1x!tpu.dma_semaphore, #tpu.memory_space<semaphore_mem>> -> memref<!tpu.dma_semaphore, #tpu.memory_space<semaphore_mem>>
      tpu.enqueue_dma source(%149 : memref<8x768xf32, #tpu.memory_space<any>>) target(%151 : memref<8x768xf32, #tpu.memory_space<vmem>>) target_semaphore(%153 : memref<!tpu.dma_semaphore, #tpu.memory_space<semaphore_mem>>)
    } else {
    }
    %c0_i32_5 = arith.constant 0 : i32
    %c0_i32_6 = arith.constant 0 : i32
    %13 = tpu.memref_slice %arg1[%c0_i32_5, %c0_i32_6] : memref<8x2304xf32, #tpu.memory_space<any>> -> memref<8x768xf32, #tpu.memory_space<any>>
    %c0_i32_7 = arith.constant 0 : i32
    %c0_i32_8 = arith.constant 0 : i32
    %14 = tpu.memref_slice %arg7[%9, %c0_i32_7, %c0_i32_8] : memref<2x8x768xf32, #tpu.memory_space<vmem>> -> memref<1x8x768xf32, #tpu.memory_space<vmem>>
    %15 = tpu.memref_squeeze %14 : memref<1x8x768xf32, #tpu.memory_space<vmem>> -> memref<8x768xf32, #tpu.memory_space<vmem>>
    %16 = tpu.memref_slice %arg8[%9] : memref<2x!tpu.dma_semaphore, #tpu.memory_space<semaphore_mem>> -> memref<1x!tpu.dma_semaphore, #tpu.memory_space<semaphore_mem>>
    %17 = tpu.memref_squeeze %16 : memref<1x!tpu.dma_semaphore, #tpu.memory_space<semaphore_mem>> -> memref<!tpu.dma_semaphore, #tpu.memory_space<semaphore_mem>>
    tpu.wait_dma2 semaphore(%17 : memref<!tpu.dma_semaphore, #tpu.memory_space<semaphore_mem>>) src(%13 : memref<8x768xf32, #tpu.memory_space<any>>) dst(%15 : memref<8x768xf32, #tpu.memory_space<vmem>>)
    %c1_i32_9 = arith.constant 1 : i32
    %18 = arith.addi %arg0, %c1_i32_9 : i32
    %c4_i32 = arith.constant 4 : i32
    %19 = arith.cmpi slt, %18, %c4_i32 : i32
    %20 = arith.extui %19 : i1 to i32
    %c0_i32_10 = arith.constant 0 : i32
    %21 = arith.cmpi ne, %20, %c0_i32_10 : i32
    scf.if %21 {
      %c1_i32_52 = arith.constant 1 : i32
      %148 = arith.addi %arg0, %c1_i32_52 : i32
      %c1_i32_53 = arith.constant 1 : i32
      %149 = arith.subi %c1_i32_53, %9 : i32
      %c512_i32 = arith.constant 512 : i32
      %150 = arith.muli %148, %c512_i32 : i32
      %151 = tpu.assume_multiple %150, 128 : i32
      %c0_i32_54 = arith.constant 0 : i32
      %152 = tpu.memref_slice %arg1[%c0_i32_54, %151] : memref<8x2304xf32, #tpu.memory_space<any>> -> memref<8x768xf32, #tpu.memory_space<any>>
      %c0_i32_55 = arith.constant 0 : i32
      %c0_i32_56 = arith.constant 0 : i32
      %153 = tpu.memref_slice %arg7[%149, %c0_i32_55, %c0_i32_56] : memref<2x8x768xf32, #tpu.memory_space<vmem>> -> memref<1x8x768xf32, #tpu.memory_space<vmem>>
      %154 = tpu.memref_squeeze %153 : memref<1x8x768xf32, #tpu.memory_space<vmem>> -> memref<8x768xf32, #tpu.memory_space<vmem>>
      %155 = tpu.memref_slice %arg8[%149] : memref<2x!tpu.dma_semaphore, #tpu.memory_space<semaphore_mem>> -> memref<1x!tpu.dma_semaphore, #tpu.memory_space<semaphore_mem>>
      %156 = tpu.memref_squeeze %155 : memref<1x!tpu.dma_semaphore, #tpu.memory_space<semaphore_mem>> -> memref<!tpu.dma_semaphore, #tpu.memory_space<semaphore_mem>>
      tpu.enqueue_dma source(%152 : memref<8x768xf32, #tpu.memory_space<any>>) target(%154 : memref<8x768xf32, #tpu.memory_space<vmem>>) target_semaphore(%156 : memref<!tpu.dma_semaphore, #tpu.memory_space<semaphore_mem>>)
    } else {
    }
    %22 = arith.index_cast %9 : i32 to index
    %c0 = arith.constant 0 : index
    %c0_11 = arith.constant 0 : index
    %23 = vector.load %arg7[%22, %c0, %c0_11] : memref<2x8x768xf32, #tpu.memory_space<vmem>>, vector<1x8x768xf32>
    %24 = vector.shape_cast %23 : vector<1x8x768xf32> to vector<8x768xf32>
    %c0_12 = arith.constant 0 : index
    %c0_13 = arith.constant 0 : index
    %25 = vector.load %arg2[%c0_12, %c0_13] : memref<8x216xf32, #tpu.memory_space<vmem>>, vector<8x216xf32>
    %26 = vector.extract_strided_slice %25 {offsets = [0, 0], sizes = [8, 8], strides = [1, 1]} : vector<8x216xf32> to vector<8x8xf32>
    %27 = vector.extract_strided_slice %24 {offsets = [0, 0], sizes = [8, 512], strides = [1, 1]} : vector<8x768xf32> to vector<8x512xf32>
    %cst = arith.constant dense<0.000000e+00> : vector<8x512xf32>
    %28 = tpu.matmul %26, %27, %cst {dimension_numbers = #tpu.dot_dimension_numbers<[1], [0], [0], [1], [0, 0, 1, 1], [], []>} : vector<8x8xf32>, vector<8x512xf32>, vector<8x512xf32> -> vector<8x512xf32>
    %29 = vector.extract_strided_slice %25 {offsets = [0, 8], sizes = [8, 8], strides = [1, 1]} : vector<8x216xf32> to vector<8x8xf32>
    %30 = vector.extract_strided_slice %24 {offsets = [0, 1], sizes = [8, 512], strides = [1, 1]} : vector<8x768xf32> to vector<8x512xf32>
    %cst_14 = arith.constant dense<0.000000e+00> : vector<8x512xf32>
    %31 = tpu.matmul %29, %30, %cst_14 {dimension_numbers = #tpu.dot_dimension_numbers<[1], [0], [0], [1], [0, 0, 1, 1], [], []>} : vector<8x8xf32>, vector<8x512xf32>, vector<8x512xf32> -> vector<8x512xf32>
    %32 = arith.addf %28, %31 : vector<8x512xf32>
    %33 = vector.extract_strided_slice %25 {offsets = [0, 16], sizes = [8, 8], strides = [1, 1]} : vector<8x216xf32> to vector<8x8xf32>
    %34 = vector.extract_strided_slice %24 {offsets = [0, 2], sizes = [8, 512], strides = [1, 1]} : vector<8x768xf32> to vector<8x512xf32>
    %cst_15 = arith.constant dense<0.000000e+00> : vector<8x512xf32>
    %35 = tpu.matmul %33, %34, %cst_15 {dimension_numbers = #tpu.dot_dimension_numbers<[1], [0], [0], [1], [0, 0, 1, 1], [], []>} : vector<8x8xf32>, vector<8x512xf32>, vector<8x512xf32> -> vector<8x512xf32>
    %36 = arith.addf %32, %35 : vector<8x512xf32>
    %37 = vector.extract_strided_slice %25 {offsets = [0, 24], sizes = [8, 8], strides = [1, 1]} : vector<8x216xf32> to vector<8x8xf32>
    %38 = vector.extract_strided_slice %24 {offsets = [0, 10], sizes = [8, 512], strides = [1, 1]} : vector<8x768xf32> to vector<8x512xf32>
    %cst_16 = arith.constant dense<0.000000e+00> : vector<8x512xf32>
    %39 = tpu.matmul %37, %38, %cst_16 {dimension_numbers = #tpu.dot_dimension_numbers<[1], [0], [0], [1], [0, 0, 1, 1], [], []>} : vector<8x8xf32>, vector<8x512xf32>, vector<8x512xf32> -> vector<8x512xf32>
    %40 = arith.addf %36, %39 : vector<8x512xf32>
    %41 = vector.extract_strided_slice %25 {offsets = [0, 32], sizes = [8, 8], strides = [1, 1]} : vector<8x216xf32> to vector<8x8xf32>
    %42 = vector.extract_strided_slice %24 {offsets = [0, 11], sizes = [8, 512], strides = [1, 1]} : vector<8x768xf32> to vector<8x512xf32>
    %cst_17 = arith.constant dense<0.000000e+00> : vector<8x512xf32>
    %43 = tpu.matmul %41, %42, %cst_17 {dimension_numbers = #tpu.dot_dimension_numbers<[1], [0], [0], [1], [0, 0, 1, 1], [], []>} : vector<8x8xf32>, vector<8x512xf32>, vector<8x512xf32> -> vector<8x512xf32>
    %44 = arith.addf %40, %43 : vector<8x512xf32>
    %45 = vector.extract_strided_slice %25 {offsets = [0, 40], sizes = [8, 8], strides = [1, 1]} : vector<8x216xf32> to vector<8x8xf32>
    %46 = vector.extract_strided_slice %24 {offsets = [0, 12], sizes = [8, 512], strides = [1, 1]} : vector<8x768xf32> to vector<8x512xf32>
    %cst_18 = arith.constant dense<0.000000e+00> : vector<8x512xf32>
    %47 = tpu.matmul %45, %46, %cst_18 {dimension_numbers = #tpu.dot_dimension_numbers<[1], [0], [0], [1], [0, 0, 1, 1], [], []>} : vector<8x8xf32>, vector<8x512xf32>, vector<8x512xf32> -> vector<8x512xf32>
    %48 = arith.addf %44, %47 : vector<8x512xf32>
    %49 = vector.extract_strided_slice %25 {offsets = [0, 48], sizes = [8, 8], strides = [1, 1]} : vector<8x216xf32> to vector<8x8xf32>
    %50 = vector.extract_strided_slice %24 {offsets = [0, 20], sizes = [8, 512], strides = [1, 1]} : vector<8x768xf32> to vector<8x512xf32>
    %cst_19 = arith.constant dense<0.000000e+00> : vector<8x512xf32>
    %51 = tpu.matmul %49, %50, %cst_19 {dimension_numbers = #tpu.dot_dimension_numbers<[1], [0], [0], [1], [0, 0, 1, 1], [], []>} : vector<8x8xf32>, vector<8x512xf32>, vector<8x512xf32> -> vector<8x512xf32>
    %52 = arith.addf %48, %51 : vector<8x512xf32>
    %53 = vector.extract_strided_slice %25 {offsets = [0, 56], sizes = [8, 8], strides = [1, 1]} : vector<8x216xf32> to vector<8x8xf32>
    %54 = vector.extract_strided_slice %24 {offsets = [0, 21], sizes = [8, 512], strides = [1, 1]} : vector<8x768xf32> to vector<8x512xf32>
    %cst_20 = arith.constant dense<0.000000e+00> : vector<8x512xf32>
    %55 = tpu.matmul %53, %54, %cst_20 {dimension_numbers = #tpu.dot_dimension_numbers<[1], [0], [0], [1], [0, 0, 1, 1], [], []>} : vector<8x8xf32>, vector<8x512xf32>, vector<8x512xf32> -> vector<8x512xf32>
    %56 = arith.addf %52, %55 : vector<8x512xf32>
    %57 = vector.extract_strided_slice %25 {offsets = [0, 64], sizes = [8, 8], strides = [1, 1]} : vector<8x216xf32> to vector<8x8xf32>
    %58 = vector.extract_strided_slice %24 {offsets = [0, 22], sizes = [8, 512], strides = [1, 1]} : vector<8x768xf32> to vector<8x512xf32>
    %cst_21 = arith.constant dense<0.000000e+00> : vector<8x512xf32>
    %59 = tpu.matmul %57, %58, %cst_21 {dimension_numbers = #tpu.dot_dimension_numbers<[1], [0], [0], [1], [0, 0, 1, 1], [], []>} : vector<8x8xf32>, vector<8x512xf32>, vector<8x512xf32> -> vector<8x512xf32>
    %60 = arith.addf %56, %59 : vector<8x512xf32>
    %61 = vector.extract_strided_slice %25 {offsets = [0, 72], sizes = [8, 8], strides = [1, 1]} : vector<8x216xf32> to vector<8x8xf32>
    %62 = vector.extract_strided_slice %24 {offsets = [0, 100], sizes = [8, 512], strides = [1, 1]} : vector<8x768xf32> to vector<8x512xf32>
    %cst_22 = arith.constant dense<0.000000e+00> : vector<8x512xf32>
    %63 = tpu.matmul %61, %62, %cst_22 {dimension_numbers = #tpu.dot_dimension_numbers<[1], [0], [0], [1], [0, 0, 1, 1], [], []>} : vector<8x8xf32>, vector<8x512xf32>, vector<8x512xf32> -> vector<8x512xf32>
    %64 = arith.addf %60, %63 : vector<8x512xf32>
    %65 = vector.extract_strided_slice %25 {offsets = [0, 80], sizes = [8, 8], strides = [1, 1]} : vector<8x216xf32> to vector<8x8xf32>
    %66 = vector.extract_strided_slice %24 {offsets = [0, 101], sizes = [8, 512], strides = [1, 1]} : vector<8x768xf32> to vector<8x512xf32>
    %cst_23 = arith.constant dense<0.000000e+00> : vector<8x512xf32>
    %67 = tpu.matmul %65, %66, %cst_23 {dimension_numbers = #tpu.dot_dimension_numbers<[1], [0], [0], [1], [0, 0, 1, 1], [], []>} : vector<8x8xf32>, vector<8x512xf32>, vector<8x512xf32> -> vector<8x512xf32>
    %68 = arith.addf %64, %67 : vector<8x512xf32>
    %69 = vector.extract_strided_slice %25 {offsets = [0, 88], sizes = [8, 8], strides = [1, 1]} : vector<8x216xf32> to vector<8x8xf32>
    %70 = vector.extract_strided_slice %24 {offsets = [0, 102], sizes = [8, 512], strides = [1, 1]} : vector<8x768xf32> to vector<8x512xf32>
    %cst_24 = arith.constant dense<0.000000e+00> : vector<8x512xf32>
    %71 = tpu.matmul %69, %70, %cst_24 {dimension_numbers = #tpu.dot_dimension_numbers<[1], [0], [0], [1], [0, 0, 1, 1], [], []>} : vector<8x8xf32>, vector<8x512xf32>, vector<8x512xf32> -> vector<8x512xf32>
    %72 = arith.addf %68, %71 : vector<8x512xf32>
    %73 = vector.extract_strided_slice %25 {offsets = [0, 96], sizes = [8, 8], strides = [1, 1]} : vector<8x216xf32> to vector<8x8xf32>
    %74 = vector.extract_strided_slice %24 {offsets = [0, 110], sizes = [8, 512], strides = [1, 1]} : vector<8x768xf32> to vector<8x512xf32>
    %cst_25 = arith.constant dense<0.000000e+00> : vector<8x512xf32>
    %75 = tpu.matmul %73, %74, %cst_25 {dimension_numbers = #tpu.dot_dimension_numbers<[1], [0], [0], [1], [0, 0, 1, 1], [], []>} : vector<8x8xf32>, vector<8x512xf32>, vector<8x512xf32> -> vector<8x512xf32>
    %76 = arith.addf %72, %75 : vector<8x512xf32>
    %77 = vector.extract_strided_slice %25 {offsets = [0, 104], sizes = [8, 8], strides = [1, 1]} : vector<8x216xf32> to vector<8x8xf32>
    %78 = vector.extract_strided_slice %24 {offsets = [0, 111], sizes = [8, 512], strides = [1, 1]} : vector<8x768xf32> to vector<8x512xf32>
    %cst_26 = arith.constant dense<0.000000e+00> : vector<8x512xf32>
    %79 = tpu.matmul %77, %78, %cst_26 {dimension_numbers = #tpu.dot_dimension_numbers<[1], [0], [0], [1], [0, 0, 1, 1], [], []>} : vector<8x8xf32>, vector<8x512xf32>, vector<8x512xf32> -> vector<8x512xf32>
    %80 = arith.addf %76, %79 : vector<8x512xf32>
    %81 = vector.extract_strided_slice %25 {offsets = [0, 112], sizes = [8, 8], strides = [1, 1]} : vector<8x216xf32> to vector<8x8xf32>
    %82 = vector.extract_strided_slice %24 {offsets = [0, 112], sizes = [8, 512], strides = [1, 1]} : vector<8x768xf32> to vector<8x512xf32>
    %cst_27 = arith.constant dense<0.000000e+00> : vector<8x512xf32>
    %83 = tpu.matmul %81, %82, %cst_27 {dimension_numbers = #tpu.dot_dimension_numbers<[1], [0], [0], [1], [0, 0, 1, 1], [], []>} : vector<8x8xf32>, vector<8x512xf32>, vector<8x512xf32> -> vector<8x512xf32>
    %84 = arith.addf %80, %83 : vector<8x512xf32>
    %85 = vector.extract_strided_slice %25 {offsets = [0, 120], sizes = [8, 8], strides = [1, 1]} : vector<8x216xf32> to vector<8x8xf32>
    %86 = vector.extract_strided_slice %24 {offsets = [0, 120], sizes = [8, 512], strides = [1, 1]} : vector<8x768xf32> to vector<8x512xf32>
    %cst_28 = arith.constant dense<0.000000e+00> : vector<8x512xf32>
    %87 = tpu.matmul %85, %86, %cst_28 {dimension_numbers = #tpu.dot_dimension_numbers<[1], [0], [0], [1], [0, 0, 1, 1], [], []>} : vector<8x8xf32>, vector<8x512xf32>, vector<8x512xf32> -> vector<8x512xf32>
    %88 = arith.addf %84, %87 : vector<8x512xf32>
    %89 = vector.extract_strided_slice %25 {offsets = [0, 128], sizes = [8, 8], strides = [1, 1]} : vector<8x216xf32> to vector<8x8xf32>
    %90 = vector.extract_strided_slice %24 {offsets = [0, 121], sizes = [8, 512], strides = [1, 1]} : vector<8x768xf32> to vector<8x512xf32>
    %cst_29 = arith.constant dense<0.000000e+00> : vector<8x512xf32>
    %91 = tpu.matmul %89, %90, %cst_29 {dimension_numbers = #tpu.dot_dimension_numbers<[1], [0], [0], [1], [0, 0, 1, 1], [], []>} : vector<8x8xf32>, vector<8x512xf32>, vector<8x512xf32> -> vector<8x512xf32>
    %92 = arith.addf %88, %91 : vector<8x512xf32>
    %93 = vector.extract_strided_slice %25 {offsets = [0, 136], sizes = [8, 8], strides = [1, 1]} : vector<8x216xf32> to vector<8x8xf32>
    %94 = vector.extract_strided_slice %24 {offsets = [0, 122], sizes = [8, 512], strides = [1, 1]} : vector<8x768xf32> to vector<8x512xf32>
    %cst_30 = arith.constant dense<0.000000e+00> : vector<8x512xf32>
    %95 = tpu.matmul %93, %94, %cst_30 {dimension_numbers = #tpu.dot_dimension_numbers<[1], [0], [0], [1], [0, 0, 1, 1], [], []>} : vector<8x8xf32>, vector<8x512xf32>, vector<8x512xf32> -> vector<8x512xf32>
    %96 = arith.addf %92, %95 : vector<8x512xf32>
    %97 = vector.extract_strided_slice %25 {offsets = [0, 144], sizes = [8, 8], strides = [1, 1]} : vector<8x216xf32> to vector<8x8xf32>
    %98 = vector.extract_strided_slice %24 {offsets = [0, 200], sizes = [8, 512], strides = [1, 1]} : vector<8x768xf32> to vector<8x512xf32>
    %cst_31 = arith.constant dense<0.000000e+00> : vector<8x512xf32>
    %99 = tpu.matmul %97, %98, %cst_31 {dimension_numbers = #tpu.dot_dimension_numbers<[1], [0], [0], [1], [0, 0, 1, 1], [], []>} : vector<8x8xf32>, vector<8x512xf32>, vector<8x512xf32> -> vector<8x512xf32>
    %100 = arith.addf %96, %99 : vector<8x512xf32>
    %101 = vector.extract_strided_slice %25 {offsets = [0, 152], sizes = [8, 8], strides = [1, 1]} : vector<8x216xf32> to vector<8x8xf32>
    %102 = vector.extract_strided_slice %24 {offsets = [0, 201], sizes = [8, 512], strides = [1, 1]} : vector<8x768xf32> to vector<8x512xf32>
    %cst_32 = arith.constant dense<0.000000e+00> : vector<8x512xf32>
    %103 = tpu.matmul %101, %102, %cst_32 {dimension_numbers = #tpu.dot_dimension_numbers<[1], [0], [0], [1], [0, 0, 1, 1], [], []>} : vector<8x8xf32>, vector<8x512xf32>, vector<8x512xf32> -> vector<8x512xf32>
    %104 = arith.addf %100, %103 : vector<8x512xf32>
    %105 = vector.extract_strided_slice %25 {offsets = [0, 160], sizes = [8, 8], strides = [1, 1]} : vector<8x216xf32> to vector<8x8xf32>
    %106 = vector.extract_strided_slice %24 {offsets = [0, 202], sizes = [8, 512], strides = [1, 1]} : vector<8x768xf32> to vector<8x512xf32>
    %cst_33 = arith.constant dense<0.000000e+00> : vector<8x512xf32>
    %107 = tpu.matmul %105, %106, %cst_33 {dimension_numbers = #tpu.dot_dimension_numbers<[1], [0], [0], [1], [0, 0, 1, 1], [], []>} : vector<8x8xf32>, vector<8x512xf32>, vector<8x512xf32> -> vector<8x512xf32>
    %108 = arith.addf %104, %107 : vector<8x512xf32>
    %109 = vector.extract_strided_slice %25 {offsets = [0, 168], sizes = [8, 8], strides = [1, 1]} : vector<8x216xf32> to vector<8x8xf32>
    %110 = vector.extract_strided_slice %24 {offsets = [0, 210], sizes = [8, 512], strides = [1, 1]} : vector<8x768xf32> to vector<8x512xf32>
    %cst_34 = arith.constant dense<0.000000e+00> : vector<8x512xf32>
    %111 = tpu.matmul %109, %110, %cst_34 {dimension_numbers = #tpu.dot_dimension_numbers<[1], [0], [0], [1], [0, 0, 1, 1], [], []>} : vector<8x8xf32>, vector<8x512xf32>, vector<8x512xf32> -> vector<8x512xf32>
    %112 = arith.addf %108, %111 : vector<8x512xf32>
    %113 = vector.extract_strided_slice %25 {offsets = [0, 176], sizes = [8, 8], strides = [1, 1]} : vector<8x216xf32> to vector<8x8xf32>
    %114 = vector.extract_strided_slice %24 {offsets = [0, 211], sizes = [8, 512], strides = [1, 1]} : vector<8x768xf32> to vector<8x512xf32>
    %cst_35 = arith.constant dense<0.000000e+00> : vector<8x512xf32>
    %115 = tpu.matmul %113, %114, %cst_35 {dimension_numbers = #tpu.dot_dimension_numbers<[1], [0], [0], [1], [0, 0, 1, 1], [], []>} : vector<8x8xf32>, vector<8x512xf32>, vector<8x512xf32> -> vector<8x512xf32>
    %116 = arith.addf %112, %115 : vector<8x512xf32>
    %117 = vector.extract_strided_slice %25 {offsets = [0, 184], sizes = [8, 8], strides = [1, 1]} : vector<8x216xf32> to vector<8x8xf32>
    %118 = vector.extract_strided_slice %24 {offsets = [0, 212], sizes = [8, 512], strides = [1, 1]} : vector<8x768xf32> to vector<8x512xf32>
    %cst_36 = arith.constant dense<0.000000e+00> : vector<8x512xf32>
    %119 = tpu.matmul %117, %118, %cst_36 {dimension_numbers = #tpu.dot_dimension_numbers<[1], [0], [0], [1], [0, 0, 1, 1], [], []>} : vector<8x8xf32>, vector<8x512xf32>, vector<8x512xf32> -> vector<8x512xf32>
    %120 = arith.addf %116, %119 : vector<8x512xf32>
    %121 = vector.extract_strided_slice %25 {offsets = [0, 192], sizes = [8, 8], strides = [1, 1]} : vector<8x216xf32> to vector<8x8xf32>
    %122 = vector.extract_strided_slice %24 {offsets = [0, 220], sizes = [8, 512], strides = [1, 1]} : vector<8x768xf32> to vector<8x512xf32>
    %cst_37 = arith.constant dense<0.000000e+00> : vector<8x512xf32>
    %123 = tpu.matmul %121, %122, %cst_37 {dimension_numbers = #tpu.dot_dimension_numbers<[1], [0], [0], [1], [0, 0, 1, 1], [], []>} : vector<8x8xf32>, vector<8x512xf32>, vector<8x512xf32> -> vector<8x512xf32>
    %124 = arith.addf %120, %123 : vector<8x512xf32>
    %125 = vector.extract_strided_slice %25 {offsets = [0, 200], sizes = [8, 8], strides = [1, 1]} : vector<8x216xf32> to vector<8x8xf32>
    %126 = vector.extract_strided_slice %24 {offsets = [0, 221], sizes = [8, 512], strides = [1, 1]} : vector<8x768xf32> to vector<8x512xf32>
    %cst_38 = arith.constant dense<0.000000e+00> : vector<8x512xf32>
    %127 = tpu.matmul %125, %126, %cst_38 {dimension_numbers = #tpu.dot_dimension_numbers<[1], [0], [0], [1], [0, 0, 1, 1], [], []>} : vector<8x8xf32>, vector<8x512xf32>, vector<8x512xf32> -> vector<8x512xf32>
    %128 = arith.addf %124, %127 : vector<8x512xf32>
    %129 = vector.extract_strided_slice %25 {offsets = [0, 208], sizes = [8, 8], strides = [1, 1]} : vector<8x216xf32> to vector<8x8xf32>
    %130 = vector.extract_strided_slice %24 {offsets = [0, 222], sizes = [8, 512], strides = [1, 1]} : vector<8x768xf32> to vector<8x512xf32>
    %cst_39 = arith.constant dense<0.000000e+00> : vector<8x512xf32>
    %131 = tpu.matmul %129, %130, %cst_39 {dimension_numbers = #tpu.dot_dimension_numbers<[1], [0], [0], [1], [0, 0, 1, 1], [], []>} : vector<8x8xf32>, vector<8x512xf32>, vector<8x512xf32> -> vector<8x512xf32>
    %132 = arith.addf %128, %131 : vector<8x512xf32>
    %c0_40 = arith.constant 0 : index
    %c0_41 = arith.constant 0 : index
    %133 = vector.load %arg3[%c0_40, %c0_41] : memref<1x512xf32, #tpu.memory_space<vmem>>, vector<1x512xf32>
    %134 = vector.broadcast %133 : vector<1x512xf32> to vector<8x512xf32>
    %135 = arith.mulf %132, %134 : vector<8x512xf32>
    %cst_42 = arith.constant dense<0.000000e+00> : vector<8xf32>
    %136 = vector.multi_reduction <add>, %135, %cst_42 [1] : vector<8x512xf32> to vector<8xf32>
    %137 = vector.shape_cast %136 : vector<8xf32> to vector<8x1xf32>
    %c0_43 = arith.constant 0 : index
    %c0_44 = arith.constant 0 : index
    %c0_45 = arith.constant 0 : index
    %138 = vector.load %arg5[%c0_43, %c0_44, %c0_45] : memref<1x8x1xf32, #tpu.memory_space<vmem>>, vector<1x8x1xf32>
    %139 = vector.shape_cast %138 : vector<1x8x1xf32> to vector<8x1xf32>
    %140 = vector.shape_cast %137 : vector<8x1xf32> to vector<1x8x1xf32>
    tpu.vector_store %arg5[%c0_43, %c0_44, %c0_45], %140 {strides = array<i32>} : memref<1x8x1xf32, #tpu.memory_space<vmem>>, vector<1x8x1xf32>,
    %141 = arith.mulf %135, %132 : vector<8x512xf32>
    %cst_46 = arith.constant dense<0.000000e+00> : vector<8xf32>
    %142 = vector.multi_reduction <add>, %141, %cst_46 [1] : vector<8x512xf32> to vector<8xf32>
    %143 = vector.shape_cast %142 : vector<8xf32> to vector<8x1xf32>
    %c0_47 = arith.constant 0 : index
    %c0_48 = arith.constant 0 : index
    %c0_49 = arith.constant 0 : index
    %144 = vector.load %arg6[%c0_47, %c0_48, %c0_49] : memref<1x8x1xf32, #tpu.memory_space<vmem>>, vector<1x8x1xf32>
    %145 = vector.shape_cast %144 : vector<1x8x1xf32> to vector<8x1xf32>
    %146 = vector.shape_cast %143 : vector<8x1xf32> to vector<1x8x1xf32>
    tpu.vector_store %arg6[%c0_47, %c0_48, %c0_49], %146 {strides = array<i32>} : memref<1x8x1xf32, #tpu.memory_space<vmem>>, vector<1x8x1xf32>,
    %c0_50 = arith.constant 0 : index
    %c0_51 = arith.constant 0 : index
    %147 = vector.load %arg4[%c0_50, %c0_51] : memref<8x512xf32, #tpu.memory_space<vmem>>, vector<8x512xf32>
    tpu.vector_store %arg4[%c0_50, %c0_51], %132 {strides = array<i32>} : memref<8x512xf32, #tpu.memory_space<vmem>>, vector<8x512xf32>,
    return
  }
  func.func @transform_1(%arg0: i32) -> (i32, i32) {
    %c0_i32 = arith.constant 0 : i32
    %c0_i32_0 = arith.constant 0 : i32
    %c0_i32_1 = arith.constant 0 : i32
    return %c0_i32, %c0_i32_0 : i32, i32
  }
  func.func @transform_2(%arg0: i32) -> (i32, i32) {
    %c0_i32 = arith.constant 0 : i32
    %c0_i32_0 = arith.constant 0 : i32
    return %c0_i32, %arg0 : i32, i32
  }
  func.func @transform_3(%arg0: i32) -> (i32, i32) {
    %c0_i32 = arith.constant 0 : i32
    %c0_i32_0 = arith.constant 0 : i32
    return %c0_i32, %arg0 : i32, i32
  }
  func.func @transform_4(%arg0: i32) -> (i32, i32, i32) {
    %c0_i32 = arith.constant 0 : i32
    %c0_i32_0 = arith.constant 0 : i32
    %c0_i32_1 = arith.constant 0 : i32
    return %arg0, %c0_i32, %c0_i32_0 : i32, i32, i32
  }
  func.func @transform_5(%arg0: i32) -> (i32, i32, i32) {
    %c0_i32 = arith.constant 0 : i32
    %c0_i32_0 = arith.constant 0 : i32
    %c0_i32_1 = arith.constant 0 : i32
    return %arg0, %c0_i32, %c0_i32_0 : i32, i32, i32
  }
}

module attributes {stable_mosaic.version = 11 : i64} {
  func.func @_bn_relu_apply_kernel(%arg0: i32, %arg1: memref<8x512xf32, #tpu.memory_space<vmem>>, %arg2: memref<8x1xf32, #tpu.memory_space<vmem>>, %arg3: memref<8x1xf32, #tpu.memory_space<vmem>>, %arg4: memref<1x512xf32, #tpu.memory_space<vmem>>, %arg5: memref<8x512xf32, #tpu.memory_space<vmem>>) attributes {dimension_semantics = [#tpu.dimension_semantics<parallel>], iteration_bounds = array<i64: 4>, scalar_prefetch = 0 : i64, scratch_operands = 0 : i64, tpu.core_type = #tpu.core_type<tc>, window_params = [{transform_indices = @transform_0, window_bounds = array<i64: 8, 512>}, {pipeline_mode = #tpu.pipeline_mode<synchronous>, transform_indices = @transform_1, window_bounds = array<i64: 8, 1>}, {pipeline_mode = #tpu.pipeline_mode<synchronous>, transform_indices = @transform_2, window_bounds = array<i64: 8, 1>}, {transform_indices = @transform_3, window_bounds = array<i64: 1, 512>}, {transform_indices = @transform_4, window_bounds = array<i64: 8, 512>}]} {
    %c0 = arith.constant 0 : index
    %c0_0 = arith.constant 0 : index
    %0 = vector.load %arg1[%c0, %c0_0] : memref<8x512xf32, #tpu.memory_space<vmem>>, vector<8x512xf32>
    %c0_1 = arith.constant 0 : index
    %c0_2 = arith.constant 0 : index
    %1 = vector.load %arg2[%c0_1, %c0_2] : memref<8x1xf32, #tpu.memory_space<vmem>>, vector<8x1xf32>
    %2 = vector.broadcast %1 : vector<8x1xf32> to vector<8x512xf32>
    %3 = arith.mulf %0, %2 : vector<8x512xf32>
    %c0_3 = arith.constant 0 : index
    %c0_4 = arith.constant 0 : index
    %4 = vector.load %arg3[%c0_3, %c0_4] : memref<8x1xf32, #tpu.memory_space<vmem>>, vector<8x1xf32>
    %5 = vector.broadcast %4 : vector<8x1xf32> to vector<8x512xf32>
    %6 = arith.addf %3, %5 : vector<8x512xf32>
    %cst = arith.constant 0.000000e+00 : f32
    %7 = vector.broadcast %cst : f32 to vector<8x512xf32>
    %8 = arith.maximumf %6, %7 : vector<8x512xf32>
    %c0_5 = arith.constant 0 : index
    %c0_6 = arith.constant 0 : index
    %9 = vector.load %arg4[%c0_5, %c0_6] : memref<1x512xf32, #tpu.memory_space<vmem>>, vector<1x512xf32>
    %10 = vector.broadcast %9 : vector<1x512xf32> to vector<8x512xf32>
    %11 = arith.mulf %8, %10 : vector<8x512xf32>
    %c0_7 = arith.constant 0 : index
    %c0_8 = arith.constant 0 : index
    %12 = vector.load %arg5[%c0_7, %c0_8] : memref<8x512xf32, #tpu.memory_space<vmem>>, vector<8x512xf32>
    tpu.vector_store %arg5[%c0_7, %c0_8], %11 {strides = array<i32>} : memref<8x512xf32, #tpu.memory_space<vmem>>, vector<8x512xf32>,
    return
  }
  func.func @transform_0(%arg0: i32) -> (i32, i32) {
    %c0_i32 = arith.constant 0 : i32
    %c0_i32_0 = arith.constant 0 : i32
    return %c0_i32, %arg0 : i32, i32
  }
  func.func @transform_1(%arg0: i32) -> (i32, i32) {
    %c0_i32 = arith.constant 0 : i32
    %c0_i32_0 = arith.constant 0 : i32
    %c0_i32_1 = arith.constant 0 : i32
    return %c0_i32, %c0_i32_0 : i32, i32
  }
  func.func @transform_2(%arg0: i32) -> (i32, i32) {
    %c0_i32 = arith.constant 0 : i32
    %c0_i32_0 = arith.constant 0 : i32
    %c0_i32_1 = arith.constant 0 : i32
    return %c0_i32, %c0_i32_0 : i32, i32
  }
  func.func @transform_3(%arg0: i32) -> (i32, i32) {
    %c0_i32 = arith.constant 0 : i32
    %c0_i32_0 = arith.constant 0 : i32
    return %c0_i32, %arg0 : i32, i32
  }
  func.func @transform_4(%arg0: i32) -> (i32, i32) {
    %c0_i32 = arith.constant 0 : i32
    %c0_i32_0 = arith.constant 0 : i32
    return %c0_i32, %arg0 : i32, i32
  }
}

</mosaic_0001>

<llo_original>
// kernel: encoder1_forward.5
$region0: #{encoder1_forward.5}
  #allocation0 [shape = 'u32[]', space=smem, size = 0x4, offset = 0x4, fixed_abs, tag = 'smem constant byte address 0x4 - core index']
  #allocation1 [shape = 'u32[72,128]{1,0:T(1,128)}', space=vmem, size = 0x9000, scoped, tag = 'internal scratch']
  %s0 = inlined_call_operand.vmem [shape: f32[8,2048], index: 0, kind: input, shape index: {}]
  %s1 = inlined_call_operand.vmem [shape: f32[8,1], index: 1, kind: input, shape index: {}]
  %s2 = inlined_call_operand.vmem [shape: f32[8,1], index: 2, kind: input, shape index: {}]
  %s3 = inlined_call_operand.vmem [shape: f32[1,2048], index: 3, kind: input, shape index: {}]
  %s4 = inlined_call_operand.vmem [shape: f32[8,2048], index: 4, kind: output, shape index: {}]
  %s5 = sld [smem:[#allocation0]]
  $region49: #{encoder1_forward.5} parent=0
    _
  %s7 = ssub.s32 1, %s5
  %s8 = scalar_select 0, %s7, %s5
  loop: start=0, step=1, limit=6
  $region2: #{encoder1_forward.5} parent=0 // loop_pre_header
    _
  $region3: #{encoder1_forward.5} parent=0 // loop_header
    %s10 = sphi 0, %s14
    %p11 = scmp.ge.s32.totalorder %s10, 6
    %s20 = sphi 0, %s22
    %s23 = sphi 0, %s20
    %s24 = sphi 0, %s23
    %s40 = sphi 0, %s24
    %s44 = sphi 0, %s44
    %s46 = sphi 0, %s44
    %s47 = sphi 0, %s46
    %s61 = sphi 0, %s47
    %s65 = sphi 0, %s65
    %s67 = sphi 0, %s65
    %s68 = sphi 0, %s67
    %s82 = sphi 0, %s68
    %s88 = sphi 0, %s90
    %s91 = sphi 0, %s88
    %s92 = sphi 0, %s91
    %s108 = sphi 0, %s92
    %s114 = sphi 0, %s116
    %s117 = sphi 0, %s114
    %s118 = sphi 0, %s117
    %s134 = sphi 0, %s118
  $region4: #{encoder1_forward.5} parent=0 // loop_header_branch
    %13 = sbr.rel (%p11) target = $region8
  $region5: #{encoder1_forward.5} parent=0 // loop_body
    %s15 = ssub.s32 %s10, 1
    %s16 = ssub.s32 %s10, 2
    %s17 = sadd.s32 %s10, 1
    %s18 = ssub.s32 %s10, %s17
    %p19 = scmp.eq.s32.totalorder %s18, 0
    %s21 = sadd.s32 %s20, 1
    %s22 = scalar_select %p19, %s20, %s21
    %p25 = pneg %p19
    %p26 = scmp.eq.s32.totalorder %s10, 3
    %p27 = por %p25, %p26
    %p28 = scmp.ne.s32.totalorder %s20, %s23
    %p29 = scmp.eq.s32.totalorder %s10, 0
    %p30 = por %p28, %p29
    %p31 = scmp.ne.s32.totalorder %s20, %s23
    %p32 = scmp.eq.s32.totalorder %s15, 3
    %p33 = por %p31, %p32
    %p34 = scmp.ne.s32.totalorder %s23, %s24
    %p35 = scmp.eq.s32.totalorder %s15, 0
    %p36 = por %p34, %p35
    %p37 = scmp.ne.s32.totalorder %s23, %s24
    %p38 = scmp.eq.s32.totalorder %s16, 3
    %p39 = por %p37, %p38
    %p41 = scmp.ne.s32.totalorder %s24, %s40
    %p42 = scmp.eq.s32.totalorder %s16, 0
    %p43 = por %p41, %p42
    %s45 = sadd.s32 %s44, 1
    %p48 = scmp.eq.s32.totalorder %s10, 3
    %p49 = scmp.ne.s32.totalorder %s44, %s46
    %p50 = scmp.eq.s32.totalorder %s10, 0
    %p51 = por %p49, %p50
    %p52 = scmp.ne.s32.totalorder %s44, %s46
    %p53 = scmp.eq.s32.totalorder %s15, 3
    %p54 = por %p52, %p53
    %p55 = scmp.ne.s32.totalorder %s46, %s47
    %p56 = scmp.eq.s32.totalorder %s15, 0
    %p57 = por %p55, %p56
    %p58 = scmp.ne.s32.totalorder %s46, %s47
    %p59 = scmp.eq.s32.totalorder %s16, 3
    %p60 = por %p58, %p59
    %p62 = scmp.ne.s32.totalorder %s47, %s61
    %p63 = scmp.eq.s32.totalorder %s16, 0
    %p64 = por %p62, %p63
    %s66 = sadd.s32 %s65, 1
    %p69 = scmp.eq.s32.totalorder %s10, 3
    %p70 = scmp.ne.s32.totalorder %s65, %s67
    %p71 = scmp.eq.s32.totalorder %s10, 0
    %p72 = por %p70, %p71
    %p73 = scmp.ne.s32.totalorder %s65, %s67
    %p74 = scmp.eq.s32.totalorder %s15, 3
    %p75 = por %p73, %p74
    %p76 = scmp.ne.s32.totalorder %s67, %s68
    %p77 = scmp.eq.s32.totalorder %s15, 0
    %p78 = por %p76, %p77
    %p79 = scmp.ne.s32.totalorder %s67, %s68
    %p80 = scmp.eq.s32.totalorder %s16, 3
    %p81 = por %p79, %p80
    %p83 = scmp.ne.s32.totalorder %s68, %s82
    %p84 = scmp.eq.s32.totalorder %s16, 0
    %p85 = por %p83, %p84
    %s86 = ssub.s32 %s10, %s17
    %p87 = scmp.eq.s32.totalorder %s86, 0
    %s89 = sadd.s32 %s88, 1
    %s90 = scalar_select %p87, %s88, %s89
    %p93 = pneg %p87
    %p94 = scmp.eq.s32.totalorder %s10, 3
    %p95 = por %p93, %p94
    %p96 = scmp.ne.s32.totalorder %s88, %s91
    %p97 = scmp.eq.s32.totalorder %s10, 0
    %p98 = por %p96, %p97
    %p99 = scmp.ne.s32.totalorder %s88, %s91
    %p100 = scmp.eq.s32.totalorder %s15, 3
    %p101 = por %p99, %p100
    %p102 = scmp.ne.s32.totalorder %s91, %s92
    %p103 = scmp.eq.s32.totalorder %s15, 0
    %p104 = por %p102, %p103
    %p105 = scmp.ne.s32.totalorder %s91, %s92
    %p106 = scmp.eq.s32.totalorder %s16, 3
    %p107 = por %p105, %p106
    %p109 = scmp.ne.s32.totalorder %s92, %s108
    %p110 = scmp.eq.s32.totalorder %s16, 0
    %p111 = por %p109, %p110
    %s112 = ssub.s32 %s10, %s17
    %p113 = scmp.eq.s32.totalorder %s112, 0
    %s115 = sadd.s32 %s114, 1
    %s116 = scalar_select %p113, %s114, %s115
    %p119 = pneg %p113
    %p120 = scmp.eq.s32.totalorder %s10, 3
    %p121 = por %p119, %p120
    %p122 = scmp.ne.s32.totalorder %s114, %s117
    %p123 = scmp.eq.s32.totalorder %s10, 0
    %p124 = por %p122, %p123
    %p125 = scmp.ne.s32.totalorder %s114, %s117
    %p126 = scmp.eq.s32.totalorder %s15, 3
    %p127 = por %p125, %p126
    %p128 = scmp.ne.s32.totalorder %s117, %s118
    %p129 = scmp.eq.s32.totalorder %s15, 0
    %p130 = por %p128, %p129
    %p131 = scmp.ne.s32.totalorder %s117, %s118
    %p132 = scmp.eq.s32.totalorder %s16, 3
    %p133 = por %p131, %p132
    %p135 = scmp.ne.s32.totalorder %s118, %s134
    %p136 = scmp.eq.s32.totalorder %s16, 0
    %p137 = por %p135, %p136
    %p138 = scmp.le.s32.totalorder 1, %s10
    %p139 = scmp.lt.s32.totalorder %s10, 5
    %p140 = pnand %p138, %p139
    %p141 = pneg %p140
    // Predicated region
    $region9: #{encoder1_forward.5} parent=5 // pred_check
      _
    $region10: #{encoder1_forward.5} parent=5 // pred_check_branch
      %143 = sbr.rel (%p140) target = $region12
    $region11: #{encoder1_forward.5} parent=5 // pred_region
      %s144 = ssub.s32 %s10, 1
      // Predicated region
      $region13: #{encoder1_forward.5} parent=11 // pred_check
        %p145 = pneg %p57
      $region14: #{encoder1_forward.5} parent=11 // pred_check_branch
        %147 = sbr.rel (%p145) target = $region16
      $region15: #{encoder1_forward.5} parent=11 // pred_region
        _
      $region16: #{encoder1_forward.5} parent=11 // pred_fallthru
        _
      // Predicated region
      $region17: #{encoder1_forward.5} parent=11 // pred_check
        %p148 = pneg %p78
      $region18: #{encoder1_forward.5} parent=11 // pred_check_branch
        %150 = sbr.rel (%p148) target = $region20
      $region19: #{encoder1_forward.5} parent=11 // pred_region
        _
      $region20: #{encoder1_forward.5} parent=11 // pred_fallthru
        _
    $region12: #{encoder1_forward.5} parent=5 // pred_fallthru
      _
    %p151 = scmp.lt.s32.totalorder %s10, 4
    // Predicated region
    $region21: #{encoder1_forward.5} parent=5 // pred_check
      %p152 = pneg %p151
    $region22: #{encoder1_forward.5} parent=5 // pred_check_branch
      %154 = sbr.rel (%p152) target = $region24
    $region23: #{encoder1_forward.5} parent=5 // pred_region
      // Predicated region
      $region25: #{encoder1_forward.5} parent=23 // pred_check
        %p155 = pneg %p30
      $region26: #{encoder1_forward.5} parent=23 // pred_check_branch
        %157 = sbr.rel (%p155) target = $region28
      $region27: #{encoder1_forward.5} parent=23 // pred_region
        %s158 = smul.u32 4, %s10
        %p159 = scmp.lt.s32.totalorder %s158, 15
        %s160 = scalar_select %p159, %s158, 15
        %s161 = smul.addr %s160, 8
        %s162 = scalar_lea.vmem %s0, %s161
        %s163 = smul.u32 4, %s10
      $region28: #{encoder1_forward.5} parent=23 // pred_fallthru
        _
      // Predicated region
      $region29: #{encoder1_forward.5} parent=23 // pred_check
        %p164 = pneg %p98
      $region30: #{encoder1_forward.5} parent=23 // pred_check_branch
        %166 = sbr.rel (%p164) target = $region32
      $region31: #{encoder1_forward.5} parent=23 // pred_region
        %s167 = smul.u32 4, %s10
        %p168 = scmp.lt.s32.totalorder %s167, 15
        %s169 = scalar_select %p168, %s167, 15
        %s170 = scalar_lea.vmem %s3, %s169
        %s171 = smul.u32 4, %s10
      $region32: #{encoder1_forward.5} parent=23 // pred_fallthru
        _
    $region24: #{encoder1_forward.5} parent=5 // pred_fallthru
      _
    %p172 = scmp.le.s32.totalorder 1, %s10
    %p173 = scmp.lt.s32.totalorder %s10, 5
    %p174 = pnand %p172, %p173
    %p175 = pneg %p174
    // Predicated region
    $region33: #{encoder1_forward.5} parent=5 // pred_check
      _
    $region34: #{encoder1_forward.5} parent=5 // pred_check_branch
      %177 = sbr.rel (%p174) target = $region36
    $region35: #{encoder1_forward.5} parent=5 // pred_region
      %s178 = ssub.s32 %s10, 1
      %s179 = smul.u32 4, %s15
      %p180 = scmp.lt.s32.totalorder %s179, 15
      %s181 = scalar_select %p180, %s179, 15
      %s182 = smul.addr %s181, 8
      %s183 = scalar_lea.vmem %s0, %s182
      %p184 = pneg %p36
      %p185 = pneg %p33
      %p186 = pneg %p57
      %p187 = pneg %p54
      %p188 = pneg %p78
      %p189 = pneg %p75
      %s190 = smul.u32 4, %s15
      %p191 = scmp.lt.s32.totalorder %s190, 15
      %s192 = scalar_select %p191, %s190, 15
      %s193 = scalar_lea.vmem %s3, %s192
      %p194 = pneg %p104
      %p195 = pneg %p101
      %p196 = pneg %p130
      %p197 = pneg %p127
      %s198 = smul.u32 4, %s15
      %p199 = scmp.lt.s32.totalorder %s198, 15
      %s200 = scalar_select %p199, %s198, 15
      %s201 = smul.addr %s200, 8
      %s202 = scalar_lea.vmem %s4, %s201
      %s203 = smul.u32 4, %s15
      %p204 = scmp.lt.s32.totalorder %s203, 15
      %s205 = scalar_select %p204, %s203, 15
      %s206 = smul.addr %s205, 8
      %s207 = scalar_lea.vmem %s0, %s206
      %s208 = smul.u32 4, %s15
      %s209 = smul.u32 4, %s15
      %p210 = scmp.lt.s32.totalorder %s209, 15
      %s211 = scalar_select %p210, %s209, 15
      %s212 = scalar_lea.vmem %s3, %s211
      %s213 = smul.u32 4, %s15
      %s214 = smul.u32 4, %s15
      %p215 = scmp.lt.s32.totalorder %s214, 15
      %s216 = scalar_select %p215, %s214, 15
      %s217 = smul.addr %s216, 8
      %s218 = scalar_lea.vmem %s4, %s217
      %s219 = smul.u32 4, %s15
      %v220 = vld [vmem:[%s207] sm:$0xff]
      %v221 = vld [vmem:[%s207 + $0x8] sm:$0xff]
      %v222 = vld [vmem:[%s207 + $0x10] sm:$0xff]
      %v223 = vld [vmem:[%s207 + $0x18] sm:$0xff]
      %v224 = vld [vmem:[%s1] sm:$0xff]
      %226 = vset.pattern.permute.xlu0 0
      %227 = vperm.xlu0 %226, %v224
      %v228 = vpop.permute.xlu0 %227
      %v230 = vmul.f32 %v220, %v228
      %v231 = vmul.f32 %v221, %v228
      %v232 = vmul.f32 %v222, %v228
      %v233 = vmul.f32 %v223, %v228
      %v234 = vld [vmem:[%s2] sm:$0xff]
      %236 = vset.pattern.permute.xlu0 0
      %237 = vperm.xlu0 %236, %v234
      %v238 = vpop.permute.xlu0 %237
      %v240 = vadd.f32 %v230, %v238
      %v241 = vadd.f32 %v231, %v238
      %v242 = vadd.f32 %v232, %v238
      %v243 = vadd.f32 %v233, %v238
      %v244 = vmax.f32 %v240, 0.0
      %v245 = vmax.f32 %v241, 0.0
      %v246 = vmax.f32 %v242, 0.0
      %v247 = vmax.f32 %v243, 0.0
      %v248 = vld [vmem:[%s212] sm:$0xf]
      %v250 = vperm.slane %v248, 0
      %v251 = vperm.slane %v248, 1
      %v252 = vperm.slane %v248, 2
      %v253 = vperm.slane %v248, 3
      %v258 = vmul.f32 %v244, %v250
      %v259 = vmul.f32 %v245, %v251
      %v260 = vmul.f32 %v246, %v252
      %v261 = vmul.f32 %v247, %v253
      %262 = vst [vmem:[%s218] sm:$0xff] %v258
      %263 = vst [vmem:[%s218 + $0x8] sm:$0xff] %v259
      %264 = vst [vmem:[%s218 + $0x10] sm:$0xff] %v260
      %265 = vst [vmem:[%s218 + $0x18] sm:$0xff] %v261
      %s266 = smul.u32 4, %s15
      %p267 = scmp.lt.s32.totalorder %s266, 15
      %s268 = scalar_select %p267, %s266, 15
      %s269 = smul.addr %s268, 8
      %s270 = scalar_lea.vmem %s4, %s269
      // Predicated region
      $region37: #{encoder1_forward.5} parent=35 // pred_check
        %p271 = pneg %p127
      $region38: #{encoder1_forward.5} parent=35 // pred_check_branch
        %273 = sbr.rel (%p271) target = $region40
      $region39: #{encoder1_forward.5} parent=35 // pred_region
        %s274 = smul.u32 4, %s15
      $region40: #{encoder1_forward.5} parent=35 // pred_fallthru
        _
    $region36: #{encoder1_forward.5} parent=5 // pred_fallthru
      _
    %p275 = scmp.le.s32.totalorder 2, %s10
    // Predicated region
    $region41: #{encoder1_forward.5} parent=5 // pred_check
      %p276 = pneg %p275
    $region42: #{encoder1_forward.5} parent=5 // pred_check_branch
      %278 = sbr.rel (%p276) target = $region44
    $region43: #{encoder1_forward.5} parent=5 // pred_region
      %s279 = ssub.s32 %s10, 2
      // Predicated region
      $region45: #{encoder1_forward.5} parent=43 // pred_check
        %p280 = pneg %p133
      $region46: #{encoder1_forward.5} parent=43 // pred_check_branch
        %282 = sbr.rel (%p280) target = $region48
      $region47: #{encoder1_forward.5} parent=43 // pred_region
        %s283 = smul.u32 4, %s16
        %p284 = scmp.lt.s32.totalorder %s283, 15
        %s285 = scalar_select %p284, %s283, 15
        %s286 = smul.addr %s285, 8
        %s287 = scalar_lea.vmem %s4, %s286
      $region48: #{encoder1_forward.5} parent=43 // pred_fallthru
        _
    $region44: #{encoder1_forward.5} parent=5 // pred_fallthru
      _
  $region6: #{encoder1_forward.5} parent=0 // loop_footer
    %s14 = sadd.s32 1, %s10
  $region7: #{encoder1_forward.5} parent=0 // loop_footer_branch
    %9 = sbr.rel target = $region3
  $region8: #{encoder1_forward.5} parent=0 // loop_exit
    _

// kernel: encoder1_forward.4
$region0: #{encoder1_forward.4}
  #allocation0 [shape = 'u32[]', space=smem, size = 0x4, offset = 0x4, fixed_abs, tag = 'smem constant byte address 0x4 - core index']
  #allocation1 [shape = 'u32[72,128]{1,0:T(1,128)}', space=vmem, size = 0x9000, scoped, tag = 'internal scratch']
  #allocation2 [shape = 'f32[2,8,768]{2,1,0:T(8,128)}', space=vmem, size = 0xc000, scoped, tag = 'scratch operand']
  #allocation3 [shape = 's32[2]{0}', space=sflag, size = 0x8, scoped, tag = 'scratch operand']
  #allocation4 [shape = 's32[]', space=sflag, size = 0x4, offset = 0, fixed_abs, tag = 'sflag constant byte address 0x0 - dummy sync flag']
  #allocation5 [shape = 's32[]', space=sflag, size = 0x4, offset = 0, fixed_abs, tag = 'sflag constant byte address 0x0 - dummy sync flag']
  %s0 = inlined_call_operand.vmem [shape: f32[8,2304], index: 0, kind: input, shape index: {}]
  %s1 = inlined_call_operand.vmem [shape: f32[8,216], index: 1, kind: input, shape index: {}]
  %s2 = inlined_call_operand.vmem [shape: f32[1,2048], index: 2, kind: input, shape index: {}]
  %s3 = inlined_call_operand.vmem [shape: f32[8,2048], index: 3, kind: output, shape index: {0}]
  %s4 = inlined_call_operand.vmem [shape: f32[4,8,1], index: 4, kind: output, shape index: {1}]
  %s5 = inlined_call_operand.vmem [shape: f32[4,8,1], index: 5, kind: output, shape index: {2}]
  %6 = xla_tuple %s3, %s4, %s5
  %s7 = sld [smem:[#allocation0]]
  $region103: #{encoder1_forward.4} parent=0
    _
  %s9 = ssub.s32 1, %s7
  %s10 = scalar_select 0, %s9, %s7
  loop: start=0, step=1, limit=6
  $region2: #{encoder1_forward.4} parent=0 // loop_pre_header
    _
  $region3: #{encoder1_forward.4} parent=0 // loop_header
    %s12 = sphi 0, %s16
    %p13 = scmp.ge.s32.totalorder %s12, 6
    %s20 = sphi 0, %s20
    %s22 = sphi 0, %s20
    %s23 = sphi 0, %s22
    %s37 = sphi 0, %s23
    %s43 = sphi 0, %s45
    %s46 = sphi 0, %s43
    %s47 = sphi 0, %s46
    %s63 = sphi 0, %s47
    %s69 = sphi 0, %s71
    %s72 = sphi 0, %s69
    %s73 = sphi 0, %s72
    %s89 = sphi 0, %s73
    %s95 = sphi 0, %s97
    %s98 = sphi 0, %s95
    %s99 = sphi 0, %s98
    %s115 = sphi 0, %s99
    %s121 = sphi 0, %s123
    %s124 = sphi 0, %s121
    %s125 = sphi 0, %s124
    %s141 = sphi 0, %s125
  $region4: #{encoder1_forward.4} parent=0 // loop_header_branch
    %15 = sbr.rel (%p13) target = $region8
  $region5: #{encoder1_forward.4} parent=0 // loop_body
    %s17 = ssub.s32 %s12, 1
    %s18 = ssub.s32 %s12, 2
    %s19 = sadd.s32 %s12, 1
    %s21 = sadd.s32 %s20, 1
    %p24 = scmp.eq.s32.totalorder %s12, 3
    %p25 = scmp.ne.s32.totalorder %s20, %s22
    %p26 = scmp.eq.s32.totalorder %s12, 0
    %p27 = por %p25, %p26
    %p28 = scmp.ne.s32.totalorder %s20, %s22
    %p29 = scmp.eq.s32.totalorder %s17, 3
    %p30 = por %p28, %p29
    %p31 = scmp.ne.s32.totalorder %s22, %s23
    %p32 = scmp.eq.s32.totalorder %s17, 0
    %p33 = por %p31, %p32
    %p34 = scmp.ne.s32.totalorder %s22, %s23
    %p35 = scmp.eq.s32.totalorder %s18, 3
    %p36 = por %p34, %p35
    %p38 = scmp.ne.s32.totalorder %s23, %s37
    %p39 = scmp.eq.s32.totalorder %s18, 0
    %p40 = por %p38, %p39
    %s41 = ssub.s32 %s12, %s19
    %p42 = scmp.eq.s32.totalorder %s41, 0
    %s44 = sadd.s32 %s43, 1
    %s45 = scalar_select %p42, %s43, %s44
    %p48 = pneg %p42
    %p49 = scmp.eq.s32.totalorder %s12, 3
    %p50 = por %p48, %p49
    %p51 = scmp.ne.s32.totalorder %s43, %s46
    %p52 = scmp.eq.s32.totalorder %s12, 0
    %p53 = por %p51, %p52
    %p54 = scmp.ne.s32.totalorder %s43, %s46
    %p55 = scmp.eq.s32.totalorder %s17, 3
    %p56 = por %p54, %p55
    %p57 = scmp.ne.s32.totalorder %s46, %s47
    %p58 = scmp.eq.s32.totalorder %s17, 0
    %p59 = por %p57, %p58
    %p60 = scmp.ne.s32.totalorder %s46, %s47
    %p61 = scmp.eq.s32.totalorder %s18, 3
    %p62 = por %p60, %p61
    %p64 = scmp.ne.s32.totalorder %s47, %s63
    %p65 = scmp.eq.s32.totalorder %s18, 0
    %p66 = por %p64, %p65
    %s67 = ssub.s32 %s12, %s19
    %p68 = scmp.eq.s32.totalorder %s67, 0
    %s70 = sadd.s32 %s69, 1
    %s71 = scalar_select %p68, %s69, %s70
    %p74 = pneg %p68
    %p75 = scmp.eq.s32.totalorder %s12, 3
    %p76 = por %p74, %p75
    %p77 = scmp.ne.s32.totalorder %s69, %s72
    %p78 = scmp.eq.s32.totalorder %s12, 0
    %p79 = por %p77, %p78
    %p80 = scmp.ne.s32.totalorder %s69, %s72
    %p81 = scmp.eq.s32.totalorder %s17, 3
    %p82 = por %p80, %p81
    %p83 = scmp.ne.s32.totalorder %s72, %s73
    %p84 = scmp.eq.s32.totalorder %s17, 0
    %p85 = por %p83, %p84
    %p86 = scmp.ne.s32.totalorder %s72, %s73
    %p87 = scmp.eq.s32.totalorder %s18, 3
    %p88 = por %p86, %p87
    %p90 = scmp.ne.s32.totalorder %s73, %s89
    %p91 = scmp.eq.s32.totalorder %s18, 0
    %p92 = por %p90, %p91
    %s93 = ssub.s32 %s12, %s19
    %p94 = scmp.eq.s32.totalorder %s93, 0
    %s96 = sadd.s32 %s95, 1
    %s97 = scalar_select %p94, %s95, %s96
    %p100 = pneg %p94
    %p101 = scmp.eq.s32.totalorder %s12, 3
    %p102 = por %p100, %p101
    %p103 = scmp.ne.s32.totalorder %s95, %s98
    %p104 = scmp.eq.s32.totalorder %s12, 0
    %p105 = por %p103, %p104
    %p106 = scmp.ne.s32.totalorder %s95, %s98
    %p107 = scmp.eq.s32.totalorder %s17, 3
    %p108 = por %p106, %p107
    %p109 = scmp.ne.s32.totalorder %s98, %s99
    %p110 = scmp.eq.s32.totalorder %s17, 0
    %p111 = por %p109, %p110
    %p112 = scmp.ne.s32.totalorder %s98, %s99
    %p113 = scmp.eq.s32.totalorder %s18, 3
    %p114 = por %p112, %p113
    %p116 = scmp.ne.s32.totalorder %s99, %s115
    %p117 = scmp.eq.s32.totalorder %s18, 0
    %p118 = por %p116, %p117
    %s119 = ssub.s32 %s12, %s19
    %p120 = scmp.eq.s32.totalorder %s119, 0
    %s122 = sadd.s32 %s121, 1
    %s123 = scalar_select %p120, %s121, %s122
    %p126 = pneg %p120
    %p127 = scmp.eq.s32.totalorder %s12, 3
    %p128 = por %p126, %p127
    %p129 = scmp.ne.s32.totalorder %s121, %s124
    %p130 = scmp.eq.s32.totalorder %s12, 0
    %p131 = por %p129, %p130
    %p132 = scmp.ne.s32.totalorder %s121, %s124
    %p133 = scmp.eq.s32.totalorder %s17, 3
    %p134 = por %p132, %p133
    %p135 = scmp.ne.s32.totalorder %s124, %s125
    %p136 = scmp.eq.s32.totalorder %s17, 0
    %p137 = por %p135, %p136
    %p138 = scmp.ne.s32.totalorder %s124, %s125
    %p139 = scmp.eq.s32.totalorder %s18, 3
    %p140 = por %p138, %p139
    %p142 = scmp.ne.s32.totalorder %s125, %s141
    %p143 = scmp.eq.s32.totalorder %s18, 0
    %p144 = por %p142, %p143
    %p145 = scmp.le.s32.totalorder 1, %s12
    %p146 = scmp.lt.s32.totalorder %s12, 5
    %p147 = pnand %p145, %p146
    %p148 = pneg %p147
    // Predicated region
    $region9: #{encoder1_forward.4} parent=5 // pred_check
      _
    $region10: #{encoder1_forward.4} parent=5 // pred_check_branch
      %150 = sbr.rel (%p147) target = $region12
    $region11: #{encoder1_forward.4} parent=5 // pred_region
      %s151 = ssub.s32 %s12, 1
      // Predicated region
      $region13: #{encoder1_forward.4} parent=11 // pred_check
        %p152 = pneg %p33
      $region14: #{encoder1_forward.4} parent=11 // pred_check_branch
        %154 = sbr.rel (%p152) target = $region16
      $region15: #{encoder1_forward.4} parent=11 // pred_region
        _
      $region16: #{encoder1_forward.4} parent=11 // pred_fallthru
        _
    $region12: #{encoder1_forward.4} parent=5 // pred_fallthru
      _
    %p155 = scmp.lt.s32.totalorder %s12, 4
    // Predicated region
    $region17: #{encoder1_forward.4} parent=5 // pred_check
      %p156 = pneg %p155
    $region18: #{encoder1_forward.4} parent=5 // pred_check_branch
      %158 = sbr.rel (%p156) target = $region20
    $region19: #{encoder1_forward.4} parent=5 // pred_region
      // Predicated region
      $region21: #{encoder1_forward.4} parent=19 // pred_check
        %p159 = pneg %p53
      $region22: #{encoder1_forward.4} parent=19 // pred_check_branch
        %161 = sbr.rel (%p159) target = $region24
      $region23: #{encoder1_forward.4} parent=19 // pred_region
        %s162 = smul.u32 4, %s12
        %p163 = scmp.lt.s32.totalorder %s162, 15
        %s164 = scalar_select %p163, %s162, 15
        %s165 = scalar_lea.vmem %s2, %s164
        %s166 = smul.u32 4, %s12
      $region24: #{encoder1_forward.4} parent=19 // pred_fallthru
        _
    $region20: #{encoder1_forward.4} parent=5 // pred_fallthru
      _
    %p167 = scmp.le.s32.totalorder 1, %s12
    %p168 = scmp.lt.s32.totalorder %s12, 5
    %p169 = pnand %p167, %p168
    %p170 = pneg %p169
    // Predicated region
    $region25: #{encoder1_forward.4} parent=5 // pred_check
      _
    $region26: #{encoder1_forward.4} parent=5 // pred_check_branch
      %172 = sbr.rel (%p169) target = $region28
    $region27: #{encoder1_forward.4} parent=5 // pred_region
      %s173 = ssub.s32 %s12, 1
      %p174 = pneg %p33
      %p175 = pneg %p30
      %s176 = smul.u32 4, %s17
      %p177 = scmp.lt.s32.totalorder %s176, 15
      %s178 = scalar_select %p177, %s176, 15
      %s179 = scalar_lea.vmem %s2, %s178
      %p180 = pneg %p59
      %p181 = pneg %p56
      %p182 = pneg %p85
      %p183 = pneg %p82
      %s184 = smul.u32 4, %s17
      %p185 = scmp.lt.s32.totalorder %s184, 15
      %s186 = scalar_select %p185, %s184, 15
      %s187 = smul.addr %s186, 8
      %s188 = scalar_lea.vmem %s3, %s187
      %p189 = pneg %p111
      %p190 = pneg %p108
      %p191 = scmp.lt.s32.totalorder %s17, 3
      %s192 = scalar_select %p191, %s17, 3
      %s193 = smul.addr %s192, 8
      %s194 = scalar_lea.vmem %s4, %s193
      %p195 = pneg %p137
      %p196 = pneg %p134
      %p197 = scmp.lt.s32.totalorder %s17, 3
      %s198 = scalar_select %p197, %s17, 3
      %s199 = smul.addr %s198, 8
      %s200 = scalar_lea.vmem %s5, %s199
      %s201 = smul.u32 4, %s17
      %p202 = scmp.lt.s32.totalorder %s201, 15
      %s203 = scalar_select %p202, %s201, 15
      %s204 = scalar_lea.vmem %s2, %s203
      %s205 = smul.u32 4, %s17
      %s206 = smul.u32 4, %s17
      %p207 = scmp.lt.s32.totalorder %s206, 15
      %s208 = scalar_select %p207, %s206, 15
      %s209 = smul.addr %s208, 8
      %s210 = scalar_lea.vmem %s3, %s209
      %s211 = smul.u32 4, %s17
      %p212 = scmp.lt.s32.totalorder %s17, 3
      %s213 = scalar_select %p212, %s17, 3
      %s214 = smul.addr %s213, 8
      %s215 = scalar_lea.vmem %s4, %s214
      %p216 = scmp.lt.s32.totalorder %s17, 3
      %s217 = scalar_select %p216, %s17, 3
      %s218 = smul.addr %s217, 8
      %s219 = scalar_lea.vmem %s5, %s218
      %p220 = scmp.lt.s32.totalorder %s17, 0
      %s221 = ssub.s32 0, %s17
      %s222 = scalar_select %p220, %s221, %s17
      %s223 = sand.u32 %s222, 1
      %s224 = ssub.s32 0, %s223
      %s225 = scalar_select %p220, %s224, %s223
      %p226 = scmp.ne.s32.totalorder %s225, 0
      %p227 = scmp.lt.s32.totalorder %s225, 0
      %p228 = pnand %p227, %p226
      %p229 = pneg %p228
      %s230 = sadd.s32 %s225, 2
      %s231 = scalar_select %p229, %s230, %s225
      %p232 = scmp.eq.s32.totalorder %s17, 0
      // Predicated region
      $region29: #{encoder1_forward.4} parent=27 // pred_check
        %p233 = pneg %p232
      $region30: #{encoder1_forward.4} parent=27 // pred_check_branch
        %235 = sbr.rel (%p233) target = $region32
      $region31: #{encoder1_forward.4} parent=27 // pred_region
        // Predicated region
        $region33: #{encoder1_forward.4} parent=31 // pred_check
          _
        $region34: #{encoder1_forward.4} parent=31 // pred_check_branch
          %237 = sbr.rel (0) target = $region36
        $region35: #{encoder1_forward.4} parent=31 // pred_region
          loop: start=0, step=1, limit=1
          $region37: #{encoder1_forward.4} parent=35 // loop_pre_header
            _
          $region38: #{encoder1_forward.4} parent=35 // loop_header
            %s239 = sphi 0, %s243
            %p240 = scmp.ge.s32.totalorder %s239, 1
            %s244 = sphi %s0, %s0
            %s245 = sphi [#allocation2], [#allocation2]
          $region39: #{encoder1_forward.4} parent=35 // loop_header_branch
            %242 = sbr.rel (%p240) target = $region43
          $region40: #{encoder1_forward.4} parent=35 // loop_body
            %v246 = vld [vmem:[%s244] sm:$0xff]
            %247 = vst [vmem:[%s245] sm:$0xff] %v246
            %v248 = vld [vmem:[%s244 + $0x8] sm:$0xff]
            %249 = vst [vmem:[%s245 + $0x8] sm:$0xff] %v248
            %v250 = vld [vmem:[%s244 + $0x10] sm:$0xff]
            %251 = vst [vmem:[%s245 + $0x10] sm:$0xff] %v250
            %v252 = vld [vmem:[%s244 + $0x18] sm:$0xff]
            %253 = vst [vmem:[%s245 + $0x18] sm:$0xff] %v252
            %v254 = vld [vmem:[%s244 + $0x20] sm:$0xff]
            %255 = vst [vmem:[%s245 + $0x20] sm:$0xff] %v254
            %v256 = vld [vmem:[%s244 + $0x28] sm:$0xff]
            %257 = vst [vmem:[%s245 + $0x28] sm:$0xff] %v256
          $region41: #{encoder1_forward.4} parent=35 // loop_footer
            %s243 = sadd.s32 1, %s239
          $region42: #{encoder1_forward.4} parent=35 // loop_footer_branch
            %238 = sbr.rel target = $region38
          $region43: #{encoder1_forward.4} parent=35 // loop_exit
            _
        $region36: #{encoder1_forward.4} parent=31 // pred_fallthru
          _
        // Predicated region
        $region44: #{encoder1_forward.4} parent=31 // pred_check
          _
        $region45: #{encoder1_forward.4} parent=31 // pred_check_branch
          %259 = sbr.rel target = $region47
        $region46: #{encoder1_forward.4} parent=31 // pred_region
          _
        $region47: #{encoder1_forward.4} parent=31 // pred_fallthru
          _
        // Predicated region
        $region48: #{encoder1_forward.4} parent=31 // pred_check
          _
        $region49: #{encoder1_forward.4} parent=31 // pred_check_branch
          %262 = sbr.rel (0) target = $region51
        $region50: #{encoder1_forward.4} parent=31 // pred_region
          %263 = vsyncadd [#allocation3], 768
        $region51: #{encoder1_forward.4} parent=31 // pred_fallthru
          _
      $region32: #{encoder1_forward.4} parent=27 // pred_fallthru
        _
      %s264 = smul.u32 %s231, 6
      %s265 = smul.addr %s264, 8
      %s266 = scalar_lea.vmem [#allocation2], %s265
      %s267 = scalar_lea.sflag [#allocation3], %s231
      %s268 = smul.u32 8, 1
      %s269 = smul.u32 %s268, 6
      %s270 = sshll.u32 %s269, 4
      %271 = dma.done %s267, %s270
      %s272 = sadd.s32 %s17, 1
      %p273 = scmp.lt.s32.totalorder %s272, 4
      // Predicated region
      $region52: #{encoder1_forward.4} parent=27 // pred_check
        %p274 = pneg %p273
      $region53: #{encoder1_forward.4} parent=27 // pred_check_branch
        %276 = sbr.rel (%p274) target = $region55
      $region54: #{encoder1_forward.4} parent=27 // pred_region
        %s277 = ssub.s32 1, %s231
        %s278 = smul.u32 %s272, 512
        %s279 = sshra.s32 %s278, 7
        %s280 = sand.u32 %s278, 127
        %s281 = smul.addr %s279, 8
        %s282 = scalar_lea.vmem %s0, %s281
        %s283 = smul.u32 %s277, 6
        %s284 = smul.addr %s283, 8
        %s285 = scalar_lea.vmem [#allocation2], %s284
        %s286 = scalar_lea.sflag [#allocation3], %s277
        // Predicated region
        $region56: #{encoder1_forward.4} parent=54 // pred_check
          _
        $region57: #{encoder1_forward.4} parent=54 // pred_check_branch
          %288 = sbr.rel (0) target = $region59
        $region58: #{encoder1_forward.4} parent=54 // pred_region
          loop: start=0, step=1, limit=1
          $region60: #{encoder1_forward.4} parent=58 // loop_pre_header
            _
          $region61: #{encoder1_forward.4} parent=58 // loop_header
            %s290 = sphi 0, %s294
            %p291 = scmp.ge.s32.totalorder %s290, 1
            %s295 = sphi %s282, %s282
            %s296 = sphi %s285, %s285
          $region62: #{encoder1_forward.4} parent=58 // loop_header_branch
            %293 = sbr.rel (%p291) target = $region66
          $region63: #{encoder1_forward.4} parent=58 // loop_body
            %v297 = vld [vmem:[%s295] sm:$0xff]
            %298 = vst [vmem:[%s296] sm:$0xff] %v297
            %v299 = vld [vmem:[%s295 + $0x8] sm:$0xff]
            %300 = vst [vmem:[%s296 + $0x8] sm:$0xff] %v299
            %v301 = vld [vmem:[%s295 + $0x10] sm:$0xff]
            %302 = vst [vmem:[%s296 + $0x10] sm:$0xff] %v301
            %v303 = vld [vmem:[%s295 + $0x18] sm:$0xff]
            %304 = vst [vmem:[%s296 + $0x18] sm:$0xff] %v303
            %v305 = vld [vmem:[%s295 + $0x20] sm:$0xff]
            %306 = vst [vmem:[%s296 + $0x20] sm:$0xff] %v305
            %v307 = vld [vmem:[%s295 + $0x28] sm:$0xff]
            %308 = vst [vmem:[%s296 + $0x28] sm:$0xff] %v307
          $region64: #{encoder1_forward.4} parent=58 // loop_footer
            %s294 = sadd.s32 1, %s290
          $region65: #{encoder1_forward.4} parent=58 // loop_footer_branch
            %289 = sbr.rel target = $region61
          $region66: #{encoder1_forward.4} parent=58 // loop_exit
            _
        $region59: #{encoder1_forward.4} parent=54 // pred_fallthru
          _
        // Predicated region
        $region67: #{encoder1_forward.4} parent=54 // pred_check
          _
        $region68: #{encoder1_forward.4} parent=54 // pred_check_branch
          %310 = sbr.rel target = $region70
        $region69: #{encoder1_forward.4} parent=54 // pred_region
          _
        $region70: #{encoder1_forward.4} parent=54 // pred_fallthru
          _
        // Predicated region
        $region71: #{encoder1_forward.4} parent=54 // pred_check
          _
        $region72: #{encoder1_forward.4} parent=54 // pred_check_branch
          %313 = sbr.rel (0) target = $region74
        $region73: #{encoder1_forward.4} parent=54 // pred_region
          %314 = vsyncadd %s286, 768
        $region74: #{encoder1_forward.4} parent=54 // pred_fallthru
          _
      $region55: #{encoder1_forward.4} parent=27 // pred_fallthru
        _
      %v315 = vld [vmem:[%s266] sm:$0xff]
      %v316 = vld [vmem:[%s266 + $0x8] sm:$0xff]
      %v317 = vld [vmem:[%s266 + $0x10] sm:$0xff]
      %v318 = vld [vmem:[%s266 + $0x18] sm:$0xff]
      %v319 = vld [vmem:[%s266 + $0x20] sm:$0xff]
      %v320 = vld [vmem:[%s266 + $0x28] sm:$0xff]
      %v321 = vld [vmem:[%s1] sm:$0xff]
      %v322 = vld [vmem:[%s1 + $0x8] sm:$0xff]
      %324 = vrot.lane.b32.xlu0 %v321, 120
      %v325 = vpop.permute.xlu0 %324
      %331 = vrot.lane.b32.xlu0 %v315, 127
      %v332 = vpop.permute.xlu0 %331
      %333 = vrot.lane.b32.xlu0 %v316, 127
      %v334 = vpop.permute.xlu0 %333
      %335 = vrot.lane.b32.xlu0 %v317, 127
      %v336 = vpop.permute.xlu0 %335
      %337 = vrot.lane.b32.xlu0 %v318, 127
      %v338 = vpop.permute.xlu0 %337
      %339 = vrot.lane.b32.xlu0 %v319, 127
      %v340 = vpop.permute.xlu0 %339
      %vm341 = vcmask 1039360
      %v342 = vsel %vm341, %v332, %v334
      %v343 = vsel %vm341, %v334, %v336
      %v344 = vsel %vm341, %v336, %v338
      %v345 = vsel %vm341, %v338, %v340
      %vm350 = vcmask 64512
      %v351 = vsel %vm350, %v325, 0
      %353 = vmatpush.msra.mxu0 0.0
      %354 = vmatpush.msra.mxu0 0.0
      %355 = vmatpush.msra.mxu0 0.0
      %356 = vmatpush.msra.mxu0 0.0
      %357 = vmatpush.msra.mxu0 0.0
      %358 = vmatpush.msra.mxu0 0.0
      %359 = vmatpush.msra.mxu0 0.0
      %360 = vmatpush.msra.mxu0 0.0
      %361 = vmatpush.msra.mxu0 0.0
      %362 = vmatpush.msra.mxu0 0.0
      %363 = vmatpush.msra.mxu0 0.0
      %364 = vmatpush.msra.mxu0 0.0
      %365 = vmatpush.msra.mxu0 0.0
      %366 = vmatpush.msra.mxu0 0.0
      %367 = vmatpush.msra.mxu0 0.0
      %368 = vmatpush.msra.mxu0 %v342
      %369 = vmatmul.f32.gmra.mxu0 %v351
      %v370 = vpop.f32.mrf.mxu0
      %v371 = vadd.f32 0.0, %v370
      %372 = vdwg.mxu0
      %373 = vmatpush.msra.mxu0 0.0
      %374 = vmatpush.msra.mxu0 0.0
      %375 = vmatpush.msra.mxu0 0.0
      %376 = vmatpush.msra.mxu0 0.0
      %377 = vmatpush.msra.mxu0 0.0
      %378 = vmatpush.msra.mxu0 0.0
      %379 = vmatpush.msra.mxu0 0.0
      %380 = vmatpush.msra.mxu0 0.0
      %381 = vmatpush.msra.mxu0 0.0
      %382 = vmatpush.msra.mxu0 0.0
      %383 = vmatpush.msra.mxu0 0.0
      %384 = vmatpush.msra.mxu0 0.0
      %385 = vmatpush.msra.mxu0 0.0
      %386 = vmatpush.msra.mxu0 0.0
      %387 = vmatpush.msra.mxu0 0.0
      %388 = vmatpush.msra.mxu0 %v343
      %389 = vmatmul.f32.gmra.mxu0 %v351
      %v390 = vpop.f32.mrf.mxu0
      %v391 = vadd.f32 0.0, %v390
      %392 = vdwg.mxu0
      %393 = vmatpush.msra.mxu0 0.0
      %394 = vmatpush.msra.mxu0 0.0
      %395 = vmatpush.msra.mxu0 0.0
      %396 = vmatpush.msra.mxu0 0.0
      %397 = vmatpush.msra.mxu0 0.0
      %398 = vmatpush.msra.mxu0 0.0
      %399 = vmatpush.msra.mxu0 0.0
      %400 = vmatpush.msra.mxu0 0.0
      %401 = vmatpush.msra.mxu0 0.0
      %402 = vmatpush.msra.mxu0 0.0
      %403 = vmatpush.msra.mxu0 0.0
      %404 = vmatpush.msra.mxu0 0.0
      %405 = vmatpush.msra.mxu0 0.0
      %406 = vmatpush.msra.mxu0 0.0
      %407 = vmatpush.msra.mxu0 0.0
      %408 = vmatpush.msra.mxu0 %v344
      %409 = vmatmul.f32.gmra.mxu0 %v351
      %v410 = vpop.f32.mrf.mxu0
      %v411 = vadd.f32 0.0, %v410
      %412 = vdwg.mxu0
      %413 = vmatpush.msra.mxu0 0.0
      %414 = vmatpush.msra.mxu0 0.0
      %415 = vmatpush.msra.mxu0 0.0
      %416 = vmatpush.msra.mxu0 0.0
      %417 = vmatpush.msra.mxu0 0.0
      %418 = vmatpush.msra.mxu0 0.0
      %419 = vmatpush.msra.mxu0 0.0
      %420 = vmatpush.msra.mxu0 0.0
      %421 = vmatpush.msra.mxu0 0.0
      %422 = vmatpush.msra.mxu0 0.0
      %423 = vmatpush.msra.mxu0 0.0
      %424 = vmatpush.msra.mxu0 0.0
      %425 = vmatpush.msra.mxu0 0.0
      %426 = vmatpush.msra.mxu0 0.0
      %427 = vmatpush.msra.mxu0 0.0
      %428 = vmatpush.msra.mxu0 %v345
      %429 = vmatmul.f32.gmra.mxu0 %v351
      %v430 = vpop.f32.mrf.mxu0
      %v431 = vadd.f32 0.0, %v430
      %432 = vdwg.mxu0
      %v433 = vsel %vm350, %v321, 0
      %435 = vmatpush.msra.mxu0 0.0
      %436 = vmatpush.msra.mxu0 0.0
      %437 = vmatpush.msra.mxu0 0.0
      %438 = vmatpush.msra.mxu0 0.0
      %439 = vmatpush.msra.mxu0 0.0
      %440 = vmatpush.msra.mxu0 0.0
      %441 = vmatpush.msra.mxu0 0.0
      %442 = vmatpush.msra.mxu0 0.0
      %443 = vmatpush.msra.mxu0 0.0
      %444 = vmatpush.msra.mxu0 0.0
      %445 = vmatpush.msra.mxu0 0.0
      %446 = vmatpush.msra.mxu0 0.0
      %447 = vmatpush.msra.mxu0 0.0
      %448 = vmatpush.msra.mxu0 0.0
      %449 = vmatpush.msra.mxu0 0.0
      %450 = vmatpush.msra.mxu0 %v315
      %451 = vmatmul.f32.gmra.mxu0 %v433
      %v452 = vpop.f32.mrf.mxu0
      %v453 = vadd.f32 %v371, %v452
      %454 = vdwg.mxu0
      %455 = vmatpush.msra.mxu0 0.0
      %456 = vmatpush.msra.mxu0 0.0
      %457 = vmatpush.msra.mxu0 0.0
      %458 = vmatpush.msra.mxu0 0.0
      %459 = vmatpush.msra.mxu0 0.0
      %460 = vmatpush.msra.mxu0 0.0
      %461 = vmatpush.msra.mxu0 0.0
      %462 = vmatpush.msra.mxu0 0.0
      %463 = vmatpush.msra.mxu0 0.0
      %464 = vmatpush.msra.mxu0 0.0
      %465 = vmatpush.msra.mxu0 0.0
      %466 = vmatpush.msra.mxu0 0.0
      %467 = vmatpush.msra.mxu0 0.0
      %468 = vmatpush.msra.mxu0 0.0
      %469 = vmatpush.msra.mxu0 0.0
      %470 = vmatpush.msra.mxu0 %v316
      %471 = vmatmul.f32.gmra.mxu0 %v433
      %v472 = vpop.f32.mrf.mxu0
      %v473 = vadd.f32 %v391, %v472
      %474 = vdwg.mxu0
      %475 = vmatpush.msra.mxu0 0.0
      %476 = vmatpush.msra.mxu0 0.0
      %477 = vmatpush.msra.mxu0 0.0
      %478 = vmatpush.msra.mxu0 0.0
      %479 = vmatpush.msra.mxu0 0.0
      %480 = vmatpush.msra.mxu0 0.0
      %481 = vmatpush.msra.mxu0 0.0
      %482 = vmatpush.msra.mxu0 0.0
      %483 = vmatpush.msra.mxu0 0.0
      %484 = vmatpush.msra.mxu0 0.0
      %485 = vmatpush.msra.mxu0 0.0
      %486 = vmatpush.msra.mxu0 0.0
      %487 = vmatpush.msra.mxu0 0.0
      %488 = vmatpush.msra.mxu0 0.0
      %489 = vmatpush.msra.mxu0 0.0
      %490 = vmatpush.msra.mxu0 %v317
      %491 = vmatmul.f32.gmra.mxu0 %v433
      %v492 = vpop.f32.mrf.mxu0
      %v493 = vadd.f32 %v411, %v492
      %494 = vdwg.mxu0
      %495 = vmatpush.msra.mxu0 0.0
      %496 = vmatpush.msra.mxu0 0.0
      %497 = vmatpush.msra.mxu0 0.0
      %498 = vmatpush.msra.mxu0 0.0
      %499 = vmatpush.msra.mxu0 0.0
      %500 = vmatpush.msra.mxu0 0.0
      %501 = vmatpush.msra.mxu0 0.0
      %502 = vmatpush.msra.mxu0 0.0
      %503 = vmatpush.msra.mxu0 0.0
      %504 = vmatpush.msra.mxu0 0.0
      %505 = vmatpush.msra.mxu0 0.0
      %506 = vmatpush.msra.mxu0 0.0
      %507 = vmatpush.msra.mxu0 0.0
      %508 = vmatpush.msra.mxu0 0.0
      %509 = vmatpush.msra.mxu0 0.0
      %510 = vmatpush.msra.mxu0 %v318
      %511 = vmatmul.f32.gmra.mxu0 %v433
      %v512 = vpop.f32.mrf.mxu0
      %v513 = vadd.f32 %v431, %v512
      %514 = vdwg.mxu0
      %515 = vrot.lane.b32.xlu0 %v321, 112
      %v516 = vpop.permute.xlu0 %515
      %517 = vrot.lane.b32.xlu0 %v315, 126
      %v518 = vpop.permute.xlu0 %517
      %519 = vrot.lane.b32.xlu0 %v316, 126
      %v520 = vpop.permute.xlu0 %519
      %521 = vrot.lane.b32.xlu0 %v317, 126
      %v522 = vpop.permute.xlu0 %521
      %523 = vrot.lane.b32.xlu0 %v318, 126
      %v524 = vpop.permute.xlu0 %523
      %525 = vrot.lane.b32.xlu0 %v319, 126
      %v526 = vpop.permute.xlu0 %525
      %vm527 = vcmask 1031168
      %v528 = vsel %vm527, %v518, %v520
      %v529 = vsel %vm527, %v520, %v522
      %v530 = vsel %vm527, %v522, %v524
      %v531 = vsel %vm527, %v524, %v526
      %v536 = vsel %vm350, %v516, 0
      %538 = vmatpush.msra.mxu0 0.0
      %539 = vmatpush.msra.mxu0 0.0
      %540 = vmatpush.msra.mxu0 0.0
      %541 = vmatpush.msra.mxu0 0.0
      %542 = vmatpush.msra.mxu0 0.0
      %543 = vmatpush.msra.mxu0 0.0
      %544 = vmatpush.msra.mxu0 0.0
      %545 = vmatpush.msra.mxu0 0.0
      %546 = vmatpush.msra.mxu0 0.0
      %547 = vmatpush.msra.mxu0 0.0
      %548 = vmatpush.msra.mxu0 0.0
      %549 = vmatpush.msra.mxu0 0.0
      %550 = vmatpush.msra.mxu0 0.0
      %551 = vmatpush.msra.mxu0 0.0
      %552 = vmatpush.msra.mxu0 0.0
      %553 = vmatpush.msra.mxu0 %v528
      %554 = vmatmul.f32.gmra.mxu0 %v536
      %v555 = vpop.f32.mrf.mxu0
      %v556 = vadd.f32 0.0, %v555
      %557 = vdwg.mxu0
      %558 = vmatpush.msra.mxu0 0.0
      %559 = vmatpush.msra.mxu0 0.0
      %560 = vmatpush.msra.mxu0 0.0
      %561 = vmatpush.msra.mxu0 0.0
      %562 = vmatpush.msra.mxu0 0.0
      %563 = vmatpush.msra.mxu0 0.0
      %564 = vmatpush.msra.mxu0 0.0
      %565 = vmatpush.msra.mxu0 0.0
      %566 = vmatpush.msra.mxu0 0.0
      %567 = vmatpush.msra.mxu0 0.0
      %568 = vmatpush.msra.mxu0 0.0
      %569 = vmatpush.msra.mxu0 0.0
      %570 = vmatpush.msra.mxu0 0.0
      %571 = vmatpush.msra.mxu0 0.0
      %572 = vmatpush.msra.mxu0 0.0
      %573 = vmatpush.msra.mxu0 %v529
      %574 = vmatmul.f32.gmra.mxu0 %v536
      %v575 = vpop.f32.mrf.mxu0
      %v576 = vadd.f32 0.0, %v575
      %577 = vdwg.mxu0
      %578 = vmatpush.msra.mxu0 0.0
      %579 = vmatpush.msra.mxu0 0.0
      %580 = vmatpush.msra.mxu0 0.0
      %581 = vmatpush.msra.mxu0 0.0
      %582 = vmatpush.msra.mxu0 0.0
      %583 = vmatpush.msra.mxu0 0.0
      %584 = vmatpush.msra.mxu0 0.0
      %585 = vmatpush.msra.mxu0 0.0
      %586 = vmatpush.msra.mxu0 0.0
      %587 = vmatpush.msra.mxu0 0.0
      %588 = vmatpush.msra.mxu0 0.0
      %589 = vmatpush.msra.mxu0 0.0
      %590 = vmatpush.msra.mxu0 0.0
      %591 = vmatpush.msra.mxu0 0.0
      %592 = vmatpush.msra.mxu0 0.0
      %593 = vmatpush.msra.mxu0 %v530
      %594 = vmatmul.f32.gmra.mxu0 %v536
      %v595 = vpop.f32.mrf.mxu0
      %v596 = vadd.f32 0.0, %v595
      %597 = vdwg.mxu0
      %598 = vmatpush.msra.mxu0 0.0
      %599 = vmatpush.msra.mxu0 0.0
      %600 = vmatpush.msra.mxu0 0.0
      %601 = vmatpush.msra.mxu0 0.0
      %602 = vmatpush.msra.mxu0 0.0
      %603 = vmatpush.msra.mxu0 0.0
      %604 = vmatpush.msra.mxu0 0.0
      %605 = vmatpush.msra.mxu0 0.0
      %606 = vmatpush.msra.mxu0 0.0
      %607 = vmatpush.msra.mxu0 0.0
      %608 = vmatpush.msra.mxu0 0.0
      %609 = vmatpush.msra.mxu0 0.0
      %610 = vmatpush.msra.mxu0 0.0
      %611 = vmatpush.msra.mxu0 0.0
      %612 = vmatpush.msra.mxu0 0.0
      %613 = vmatpush.msra.mxu0 %v531
      %614 = vmatmul.f32.gmra.mxu0 %v536
      %v615 = vpop.f32.mrf.mxu0
      %v616 = vadd.f32 0.0, %v615
      %617 = vdwg.mxu0
      %v618 = vadd.f32 %v453, %v556
      %v619 = vadd.f32 %v473, %v576
      %v620 = vadd.f32 %v493, %v596
      %v621 = vadd.f32 %v513, %v616
      %622 = vrot.lane.b32.xlu0 %v321, 104
      %v623 = vpop.permute.xlu0 %622
      %624 = vrot.lane.b32.xlu0 %v315, 118
      %v625 = vpop.permute.xlu0 %624
      %626 = vrot.lane.b32.xlu0 %v316, 118
      %v627 = vpop.permute.xlu0 %626
      %628 = vrot.lane.b32.xlu0 %v317, 118
      %v629 = vpop.permute.xlu0 %628
      %630 = vrot.lane.b32.xlu0 %v318, 118
      %v631 = vpop.permute.xlu0 %630
      %632 = vrot.lane.b32.xlu0 %v319, 118
      %v633 = vpop.permute.xlu0 %632
      %vm634 = vcmask 965632
      %v635 = vsel %vm634, %v625, %v627
      %v636 = vsel %vm634, %v627, %v629
      %v637 = vsel %vm634, %v629, %v631
      %v638 = vsel %vm634, %v631, %v633
      %v643 = vsel %vm350, %v623, 0
      %645 = vmatpush.msra.mxu0 0.0
      %646 = vmatpush.msra.mxu0 0.0
      %647 = vmatpush.msra.mxu0 0.0
      %648 = vmatpush.msra.mxu0 0.0
      %649 = vmatpush.msra.mxu0 0.0
      %650 = vmatpush.msra.mxu0 0.0
      %651 = vmatpush.msra.mxu0 0.0
      %652 = vmatpush.msra.mxu0 0.0
      %653 = vmatpush.msra.mxu0 0.0
      %654 = vmatpush.msra.mxu0 0.0
      %655 = vmatpush.msra.mxu0 0.0
      %656 = vmatpush.msra.mxu0 0.0
      %657 = vmatpush.msra.mxu0 0.0
      %658 = vmatpush.msra.mxu0 0.0
      %659 = vmatpush.msra.mxu0 0.0
      %660 = vmatpush.msra.mxu0 %v635
      %661 = vmatmul.f32.gmra.mxu0 %v643
      %v662 = vpop.f32.mrf.mxu0
      %v663 = vadd.f32 0.0, %v662
      %664 = vdwg.mxu0
      %665 = vmatpush.msra.mxu0 0.0
      %666 = vmatpush.msra.mxu0 0.0
      %667 = vmatpush.msra.mxu0 0.0
      %668 = vmatpush.msra.mxu0 0.0
      %669 = vmatpush.msra.mxu0 0.0
      %670 = vmatpush.msra.mxu0 0.0
      %671 = vmatpush.msra.mxu0 0.0
      %672 = vmatpush.msra.mxu0 0.0
      %673 = vmatpush.msra.mxu0 0.0
      %674 = vmatpush.msra.mxu0 0.0
      %675 = vmatpush.msra.mxu0 0.0
      %676 = vmatpush.msra.mxu0 0.0
      %677 = vmatpush.msra.mxu0 0.0
      %678 = vmatpush.msra.mxu0 0.0
      %679 = vmatpush.msra.mxu0 0.0
      %680 = vmatpush.msra.mxu0 %v636
      %681 = vmatmul.f32.gmra.mxu0 %v643
      %v682 = vpop.f32.mrf.mxu0
      %v683 = vadd.f32 0.0, %v682
      %684 = vdwg.mxu0
      %685 = vmatpush.msra.mxu0 0.0
      %686 = vmatpush.msra.mxu0 0.0
      %687 = vmatpush.msra.mxu0 0.0
      %688 = vmatpush.msra.mxu0 0.0
      %689 = vmatpush.msra.mxu0 0.0
      %690 = vmatpush.msra.mxu0 0.0
      %691 = vmatpush.msra.mxu0 0.0
      %692 = vmatpush.msra.mxu0 0.0
      %693 = vmatpush.msra.mxu0 0.0
      %694 = vmatpush.msra.mxu0 0.0
      %695 = vmatpush.msra.mxu0 0.0
      %696 = vmatpush.msra.mxu0 0.0
      %697 = vmatpush.msra.mxu0 0.0
      %698 = vmatpush.msra.mxu0 0.0
      %699 = vmatpush.msra.mxu0 0.0
      %700 = vmatpush.msra.mxu0 %v637
      %701 = vmatmul.f32.gmra.mxu0 %v643
      %v702 = vpop.f32.mrf.mxu0
      %v703 = vadd.f32 0.0, %v702
      %704 = vdwg.mxu0
      %705 = vmatpush.msra.mxu0 0.0
      %706 = vmatpush.msra.mxu0 0.0
      %707 = vmatpush.msra.mxu0 0.0
      %708 = vmatpush.msra.mxu0 0.0
      %709 = vmatpush.msra.mxu0 0.0
      %710 = vmatpush.msra.mxu0 0.0
      %711 = vmatpush.msra.mxu0 0.0
      %712 = vmatpush.msra.mxu0 0.0
      %713 = vmatpush.msra.mxu0 0.0
      %714 = vmatpush.msra.mxu0 0.0
      %715 = vmatpush.msra.mxu0 0.0
      %716 = vmatpush.msra.mxu0 0.0
      %717 = vmatpush.msra.mxu0 0.0
      %718 = vmatpush.msra.mxu0 0.0
      %719 = vmatpush.msra.mxu0 0.0
      %720 = vmatpush.msra.mxu0 %v638
      %721 = vmatmul.f32.gmra.mxu0 %v643
      %v722 = vpop.f32.mrf.mxu0
      %v723 = vadd.f32 0.0, %v722
      %724 = vdwg.mxu0
      %v725 = vadd.f32 %v618, %v663
      %v726 = vadd.f32 %v619, %v683
      %v727 = vadd.f32 %v620, %v703
      %v728 = vadd.f32 %v621, %v723
      %729 = vrot.lane.b32.xlu0 %v321, 96
      %v730 = vpop.permute.xlu0 %729
      %731 = vrot.lane.b32.xlu0 %v315, 117
      %v732 = vpop.permute.xlu0 %731
      %733 = vrot.lane.b32.xlu0 %v316, 117
      %v734 = vpop.permute.xlu0 %733
      %735 = vrot.lane.b32.xlu0 %v317, 117
      %v736 = vpop.permute.xlu0 %735
      %737 = vrot.lane.b32.xlu0 %v318, 117
      %v738 = vpop.permute.xlu0 %737
      %739 = vrot.lane.b32.xlu0 %v319, 117
      %v740 = vpop.permute.xlu0 %739
      %vm741 = vcmask 957440
      %v742 = vsel %vm741, %v732, %v734
      %v743 = vsel %vm741, %v734, %v736
      %v744 = vsel %vm741, %v736, %v738
      %v745 = vsel %vm741, %v738, %v740
      %v750 = vsel %vm350, %v730, 0
      %752 = vmatpush.msra.mxu0 0.0
      %753 = vmatpush.msra.mxu0 0.0
      %754 = vmatpush.msra.mxu0 0.0
      %755 = vmatpush.msra.mxu0 0.0
      %756 = vmatpush.msra.mxu0 0.0
      %757 = vmatpush.msra.mxu0 0.0
      %758 = vmatpush.msra.mxu0 0.0
      %759 = vmatpush.msra.mxu0 0.0
      %760 = vmatpush.msra.mxu0 0.0
      %761 = vmatpush.msra.mxu0 0.0
      %762 = vmatpush.msra.mxu0 0.0
      %763 = vmatpush.msra.mxu0 0.0
      %764 = vmatpush.msra.mxu0 0.0
      %765 = vmatpush.msra.mxu0 0.0
      %766 = vmatpush.msra.mxu0 0.0
      %767 = vmatpush.msra.mxu0 %v742
      %768 = vmatmul.f32.gmra.mxu0 %v750
      %v769 = vpop.f32.mrf.mxu0
      %v770 = vadd.f32 0.0, %v769
      %771 = vdwg.mxu0
      %772 = vmatpush.msra.mxu0 0.0
      %773 = vmatpush.msra.mxu0 0.0
      %774 = vmatpush.msra.mxu0 0.0
      %775 = vmatpush.msra.mxu0 0.0
      %776 = vmatpush.msra.mxu0 0.0
      %777 = vmatpush.msra.mxu0 0.0
      %778 = vmatpush.msra.mxu0 0.0
      %779 = vmatpush.msra.mxu0 0.0
      %780 = vmatpush.msra.mxu0 0.0
      %781 = vmatpush.msra.mxu0 0.0
      %782 = vmatpush.msra.mxu0 0.0
      %783 = vmatpush.msra.mxu0 0.0
      %784 = vmatpush.msra.mxu0 0.0
      %785 = vmatpush.msra.mxu0 0.0
      %786 = vmatpush.msra.mxu0 0.0
      %787 = vmatpush.msra.mxu0 %v743
      %788 = vmatmul.f32.gmra.mxu0 %v750
      %v789 = vpop.f32.mrf.mxu0
      %v790 = vadd.f32 0.0, %v789
      %791 = vdwg.mxu0
      %792 = vmatpush.msra.mxu0 0.0
      %793 = vmatpush.msra.mxu0 0.0
      %794 = vmatpush.msra.mxu0 0.0
      %795 = vmatpush.msra.mxu0 0.0
      %796 = vmatpush.msra.mxu0 0.0
      %797 = vmatpush.msra.mxu0 0.0
      %798 = vmatpush.msra.mxu0 0.0
      %799 = vmatpush.msra.mxu0 0.0
      %800 = vmatpush.msra.mxu0 0.0
      %801 = vmatpush.msra.mxu0 0.0
      %802 = vmatpush.msra.mxu0 0.0
      %803 = vmatpush.msra.mxu0 0.0
      %804 = vmatpush.msra.mxu0 0.0
      %805 = vmatpush.msra.mxu0 0.0
      %806 = vmatpush.msra.mxu0 0.0
      %807 = vmatpush.msra.mxu0 %v744
      %808 = vmatmul.f32.gmra.mxu0 %v750
      %v809 = vpop.f32.mrf.mxu0
      %v810 = vadd.f32 0.0, %v809
      %811 = vdwg.mxu0
      %812 = vmatpush.msra.mxu0 0.0
      %813 = vmatpush.msra.mxu0 0.0
      %814 = vmatpush.msra.mxu0 0.0
      %815 = vmatpush.msra.mxu0 0.0
      %816 = vmatpush.msra.mxu0 0.0
      %817 = vmatpush.msra.mxu0 0.0
      %818 = vmatpush.msra.mxu0 0.0
      %819 = vmatpush.msra.mxu0 0.0
      %820 = vmatpush.msra.mxu0 0.0
      %821 = vmatpush.msra.mxu0 0.0
      %822 = vmatpush.msra.mxu0 0.0
      %823 = vmatpush.msra.mxu0 0.0
      %824 = vmatpush.msra.mxu0 0.0
      %825 = vmatpush.msra.mxu0 0.0
      %826 = vmatpush.msra.mxu0 0.0
      %827 = vmatpush.msra.mxu0 %v745
      %828 = vmatmul.f32.gmra.mxu0 %v750
      %v829 = vpop.f32.mrf.mxu0
      %v830 = vadd.f32 0.0, %v829
      %831 = vdwg.mxu0
      %v832 = vadd.f32 %v725, %v770
      %v833 = vadd.f32 %v726, %v790
      %v834 = vadd.f32 %v727, %v810
      %v835 = vadd.f32 %v728, %v830
      %836 = vrot.lane.b32.xlu0 %v321, 88
      %v837 = vpop.permute.xlu0 %836
      %838 = vrot.lane.b32.xlu0 %v315, 116
      %v839 = vpop.permute.xlu0 %838
      %840 = vrot.lane.b32.xlu0 %v316, 116
      %v841 = vpop.permute.xlu0 %840
      %842 = vrot.lane.b32.xlu0 %v317, 116
      %v843 = vpop.permute.xlu0 %842
      %844 = vrot.lane.b32.xlu0 %v318, 116
      %v845 = vpop.permute.xlu0 %844
      %846 = vrot.lane.b32.xlu0 %v319, 116
      %v847 = vpop.permute.xlu0 %846
      %vm848 = vcmask 949248
      %v849 = vsel %vm848, %v839, %v841
      %v850 = vsel %vm848, %v841, %v843
      %v851 = vsel %vm848, %v843, %v845
      %v852 = vsel %vm848, %v845, %v847
      %v857 = vsel %vm350, %v837, 0
      %859 = vmatpush.msra.mxu0 0.0
      %860 = vmatpush.msra.mxu0 0.0
      %861 = vmatpush.msra.mxu0 0.0
      %862 = vmatpush.msra.mxu0 0.0
      %863 = vmatpush.msra.mxu0 0.0
      %864 = vmatpush.msra.mxu0 0.0
      %865 = vmatpush.msra.mxu0 0.0
      %866 = vmatpush.msra.mxu0 0.0
      %867 = vmatpush.msra.mxu0 0.0
      %868 = vmatpush.msra.mxu0 0.0
      %869 = vmatpush.msra.mxu0 0.0
      %870 = vmatpush.msra.mxu0 0.0
      %871 = vmatpush.msra.mxu0 0.0
      %872 = vmatpush.msra.mxu0 0.0
      %873 = vmatpush.msra.mxu0 0.0
      %874 = vmatpush.msra.mxu0 %v849
      %875 = vmatmul.f32.gmra.mxu0 %v857
      %v876 = vpop.f32.mrf.mxu0
      %v877 = vadd.f32 0.0, %v876
      %878 = vdwg.mxu0
      %879 = vmatpush.msra.mxu0 0.0
      %880 = vmatpush.msra.mxu0 0.0
      %881 = vmatpush.msra.mxu0 0.0
      %882 = vmatpush.msra.mxu0 0.0
      %883 = vmatpush.msra.mxu0 0.0
      %884 = vmatpush.msra.mxu0 0.0
      %885 = vmatpush.msra.mxu0 0.0
      %886 = vmatpush.msra.mxu0 0.0
      %887 = vmatpush.msra.mxu0 0.0
      %888 = vmatpush.msra.mxu0 0.0
      %889 = vmatpush.msra.mxu0 0.0
      %890 = vmatpush.msra.mxu0 0.0
      %891 = vmatpush.msra.mxu0 0.0
      %892 = vmatpush.msra.mxu0 0.0
      %893 = vmatpush.msra.mxu0 0.0
      %894 = vmatpush.msra.mxu0 %v850
      %895 = vmatmul.f32.gmra.mxu0 %v857
      %v896 = vpop.f32.mrf.mxu0
      %v897 = vadd.f32 0.0, %v896
      %898 = vdwg.mxu0
      %899 = vmatpush.msra.mxu0 0.0
      %900 = vmatpush.msra.mxu0 0.0
      %901 = vmatpush.msra.mxu0 0.0
      %902 = vmatpush.msra.mxu0 0.0
      %903 = vmatpush.msra.mxu0 0.0
      %904 = vmatpush.msra.mxu0 0.0
      %905 = vmatpush.msra.mxu0 0.0
      %906 = vmatpush.msra.mxu0 0.0
      %907 = vmatpush.msra.mxu0 0.0
      %908 = vmatpush.msra.mxu0 0.0
      %909 = vmatpush.msra.mxu0 0.0
      %910 = vmatpush.msra.mxu0 0.0
      %911 = vmatpush.msra.mxu0 0.0
      %912 = vmatpush.msra.mxu0 0.0
      %913 = vmatpush.msra.mxu0 0.0
      %914 = vmatpush.msra.mxu0 %v851
      %915 = vmatmul.f32.gmra.mxu0 %v857
      %v916 = vpop.f32.mrf.mxu0
      %v917 = vadd.f32 0.0, %v916
      %918 = vdwg.mxu0
      %919 = vmatpush.msra.mxu0 0.0
      %920 = vmatpush.msra.mxu0 0.0
      %921 = vmatpush.msra.mxu0 0.0
      %922 = vmatpush.msra.mxu0 0.0
      %923 = vmatpush.msra.mxu0 0.0
      %924 = vmatpush.msra.mxu0 0.0
      %925 = vmatpush.msra.mxu0 0.0
      %926 = vmatpush.msra.mxu0 0.0
      %927 = vmatpush.msra.mxu0 0.0
      %928 = vmatpush.msra.mxu0 0.0
      %929 = vmatpush.msra.mxu0 0.0
      %930 = vmatpush.msra.mxu0 0.0
      %931 = vmatpush.msra.mxu0 0.0
      %932 = vmatpush.msra.mxu0 0.0
      %933 = vmatpush.msra.mxu0 0.0
      %934 = vmatpush.msra.mxu0 %v852
      %935 = vmatmul.f32.gmra.mxu0 %v857
      %v936 = vpop.f32.mrf.mxu0
      %v937 = vadd.f32 0.0, %v936
      %938 = vdwg.mxu0
      %v939 = vadd.f32 %v832, %v877
      %v940 = vadd.f32 %v833, %v897
      %v941 = vadd.f32 %v834, %v917
      %v942 = vadd.f32 %v835, %v937
      %943 = vrot.lane.b32.xlu0 %v321, 80
      %v944 = vpop.permute.xlu0 %943
      %945 = vrot.lane.b32.xlu0 %v315, 108
      %v946 = vpop.permute.xlu0 %945
      %947 = vrot.lane.b32.xlu0 %v316, 108
      %v948 = vpop.permute.xlu0 %947
      %949 = vrot.lane.b32.xlu0 %v317, 108
      %v950 = vpop.permute.xlu0 %949
      %951 = vrot.lane.b32.xlu0 %v318, 108
      %v952 = vpop.permute.xlu0 %951
      %953 = vrot.lane.b32.xlu0 %v319, 108
      %v954 = vpop.permute.xlu0 %953
      %vm955 = vcmask 883712
      %v956 = vsel %vm955, %v946, %v948
      %v957 = vsel %vm955, %v948, %v950
      %v958 = vsel %vm955, %v950, %v952
      %v959 = vsel %vm955, %v952, %v954
      %v964 = vsel %vm350, %v944, 0
      %966 = vmatpush.msra.mxu0 0.0
      %967 = vmatpush.msra.mxu0 0.0
      %968 = vmatpush.msra.mxu0 0.0
      %969 = vmatpush.msra.mxu0 0.0
      %970 = vmatpush.msra.mxu0 0.0
      %971 = vmatpush.msra.mxu0 0.0
      %972 = vmatpush.msra.mxu0 0.0
      %973 = vmatpush.msra.mxu0 0.0
      %974 = vmatpush.msra.mxu0 0.0
      %975 = vmatpush.msra.mxu0 0.0
      %976 = vmatpush.msra.mxu0 0.0
      %977 = vmatpush.msra.mxu0 0.0
      %978 = vmatpush.msra.mxu0 0.0
      %979 = vmatpush.msra.mxu0 0.0
      %980 = vmatpush.msra.mxu0 0.0
      %981 = vmatpush.msra.mxu0 %v956
      %982 = vmatmul.f32.gmra.mxu0 %v964
      %v983 = vpop.f32.mrf.mxu0
      %v984 = vadd.f32 0.0, %v983
      %985 = vdwg.mxu0
      %986 = vmatpush.msra.mxu0 0.0
      %987 = vmatpush.msra.mxu0 0.0
      %988 = vmatpush.msra.mxu0 0.0
      %989 = vmatpush.msra.mxu0 0.0
      %990 = vmatpush.msra.mxu0 0.0
      %991 = vmatpush.msra.mxu0 0.0
      %992 = vmatpush.msra.mxu0 0.0
      %993 = vmatpush.msra.mxu0 0.0
      %994 = vmatpush.msra.mxu0 0.0
      %995 = vmatpush.msra.mxu0 0.0
      %996 = vmatpush.msra.mxu0 0.0
      %997 = vmatpush.msra.mxu0 0.0
      %998 = vmatpush.msra.mxu0 0.0
      %999 = vmatpush.msra.mxu0 0.0
      %1000 = vmatpush.msra.mxu0 0.0
      %1001 = vmatpush.msra.mxu0 %v957
      %1002 = vmatmul.f32.gmra.mxu0 %v964
      %v1003 = vpop.f32.mrf.mxu0
      %v1004 = vadd.f32 0.0, %v1003
      %1005 = vdwg.mxu0
      %1006 = vmatpush.msra.mxu0 0.0
      %1007 = vmatpush.msra.mxu0 0.0
      %1008 = vmatpush.msra.mxu0 0.0
      %1009 = vmatpush.msra.mxu0 0.0
      %1010 = vmatpush.msra.mxu0 0.0
      %1011 = vmatpush.msra.mxu0 0.0
      %1012 = vmatpush.msra.mxu0 0.0
      %1013 = vmatpush.msra.mxu0 0.0
      %1014 = vmatpush.msra.mxu0 0.0
      %1015 = vmatpush.msra.mxu0 0.0
      %1016 = vmatpush.msra.mxu0 0.0
      %1017 = vmatpush.msra.mxu0 0.0
      %1018 = vmatpush.msra.mxu0 0.0
      %1019 = vmatpush.msra.mxu0 0.0
      %1020 = vmatpush.msra.mxu0 0.0
      %1021 = vmatpush.msra.mxu0 %v958
      %1022 = vmatmul.f32.gmra.mxu0 %v964
      %v1023 = vpop.f32.mrf.mxu0
      %v1024 = vadd.f32 0.0, %v1023
      %1025 = vdwg.mxu0
      %1026 = vmatpush.msra.mxu0 0.0
      %1027 = vmatpush.msra.mxu0 0.0
      %1028 = vmatpush.msra.mxu0 0.0
      %1029 = vmatpush.msra.mxu0 0.0
      %1030 = vmatpush.msra.mxu0 0.0
      %1031 = vmatpush.msra.mxu0 0.0
      %1032 = vmatpush.msra.mxu0 0.0
      %1033 = vmatpush.msra.mxu0 0.0
      %1034 = vmatpush.msra.mxu0 0.0
      %1035 = vmatpush.msra.mxu0 0.0
      %1036 = vmatpush.msra.mxu0 0.0
      %1037 = vmatpush.msra.mxu0 0.0
      %1038 = vmatpush.msra.mxu0 0.0
      %1039 = vmatpush.msra.mxu0 0.0
      %1040 = vmatpush.msra.mxu0 0.0
      %1041 = vmatpush.msra.mxu0 %v959
      %1042 = vmatmul.f32.gmra.mxu0 %v964
      %v1043 = vpop.f32.mrf.mxu0
      %v1044 = vadd.f32 0.0, %v1043
      %1045 = vdwg.mxu0
      %v1046 = vadd.f32 %v939, %v984
      %v1047 = vadd.f32 %v940, %v1004
      %v1048 = vadd.f32 %v941, %v1024
      %v1049 = vadd.f32 %v942, %v1044
      %1050 = vrot.lane.b32.xlu0 %v321, 72
      %v1051 = vpop.permute.xlu0 %1050
      %1052 = vrot.lane.b32.xlu0 %v315, 107
      %v1053 = vpop.permute.xlu0 %1052
      %1054 = vrot.lane.b32.xlu0 %v316, 107
      %v1055 = vpop.permute.xlu0 %1054
      %1056 = vrot.lane.b32.xlu0 %v317, 107
      %v1057 = vpop.permute.xlu0 %1056
      %1058 = vrot.lane.b32.xlu0 %v318, 107
      %v1059 = vpop.permute.xlu0 %1058
      %1060 = vrot.lane.b32.xlu0 %v319, 107
      %v1061 = vpop.permute.xlu0 %1060
      %vm1062 = vcmask 875520
      %v1063 = vsel %vm1062, %v1053, %v1055
      %v1064 = vsel %vm1062, %v1055, %v1057
      %v1065 = vsel %vm1062, %v1057, %v1059
      %v1066 = vsel %vm1062, %v1059, %v1061
      %v1071 = vsel %vm350, %v1051, 0
      %1073 = vmatpush.msra.mxu0 0.0
      %1074 = vmatpush.msra.mxu0 0.0
      %1075 = vmatpush.msra.mxu0 0.0
      %1076 = vmatpush.msra.mxu0 0.0
      %1077 = vmatpush.msra.mxu0 0.0
      %1078 = vmatpush.msra.mxu0 0.0
      %1079 = vmatpush.msra.mxu0 0.0
      %1080 = vmatpush.msra.mxu0 0.0
      %1081 = vmatpush.msra.mxu0 0.0
      %1082 = vmatpush.msra.mxu0 0.0
      %1083 = vmatpush.msra.mxu0 0.0
      %1084 = vmatpush.msra.mxu0 0.0
      %1085 = vmatpush.msra.mxu0 0.0
      %1086 = vmatpush.msra.mxu0 0.0
      %1087 = vmatpush.msra.mxu0 0.0
      %1088 = vmatpush.msra.mxu0 %v1063
      %1089 = vmatmul.f32.gmra.mxu0 %v1071
      %v1090 = vpop.f32.mrf.mxu0
      %v1091 = vadd.f32 0.0, %v1090
      %1092 = vdwg.mxu0
      %1093 = vmatpush.msra.mxu0 0.0
      %1094 = vmatpush.msra.mxu0 0.0
      %1095 = vmatpush.msra.mxu0 0.0
      %1096 = vmatpush.msra.mxu0 0.0
      %1097 = vmatpush.msra.mxu0 0.0
      %1098 = vmatpush.msra.mxu0 0.0
      %1099 = vmatpush.msra.mxu0 0.0
      %1100 = vmatpush.msra.mxu0 0.0
      %1101 = vmatpush.msra.mxu0 0.0
      %1102 = vmatpush.msra.mxu0 0.0
      %1103 = vmatpush.msra.mxu0 0.0
      %1104 = vmatpush.msra.mxu0 0.0
      %1105 = vmatpush.msra.mxu0 0.0
      %1106 = vmatpush.msra.mxu0 0.0
      %1107 = vmatpush.msra.mxu0 0.0
      %1108 = vmatpush.msra.mxu0 %v1064
      %1109 = vmatmul.f32.gmra.mxu0 %v1071
      %v1110 = vpop.f32.mrf.mxu0
      %v1111 = vadd.f32 0.0, %v1110
      %1112 = vdwg.mxu0
      %1113 = vmatpush.msra.mxu0 0.0
      %1114 = vmatpush.msra.mxu0 0.0
      %1115 = vmatpush.msra.mxu0 0.0
      %1116 = vmatpush.msra.mxu0 0.0
      %1117 = vmatpush.msra.mxu0 0.0
      %1118 = vmatpush.msra.mxu0 0.0
      %1119 = vmatpush.msra.mxu0 0.0
      %1120 = vmatpush.msra.mxu0 0.0
      %1121 = vmatpush.msra.mxu0 0.0
      %1122 = vmatpush.msra.mxu0 0.0
      %1123 = vmatpush.msra.mxu0 0.0
      %1124 = vmatpush.msra.mxu0 0.0
      %1125 = vmatpush.msra.mxu0 0.0
      %1126 = vmatpush.msra.mxu0 0.0
      %1127 = vmatpush.msra.mxu0 0.0
      %1128 = vmatpush.msra.mxu0 %v1065
      %1129 = vmatmul.f32.gmra.mxu0 %v1071
      %v1130 = vpop.f32.mrf.mxu0
      %v1131 = vadd.f32 0.0, %v1130
      %1132 = vdwg.mxu0
      %1133 = vmatpush.msra.mxu0 0.0
      %1134 = vmatpush.msra.mxu0 0.0
      %1135 = vmatpush.msra.mxu0 0.0
      %1136 = vmatpush.msra.mxu0 0.0
      %1137 = vmatpush.msra.mxu0 0.0
      %1138 = vmatpush.msra.mxu0 0.0
      %1139 = vmatpush.msra.mxu0 0.0
      %1140 = vmatpush.msra.mxu0 0.0
      %1141 = vmatpush.msra.mxu0 0.0
      %1142 = vmatpush.msra.mxu0 0.0
      %1143 = vmatpush.msra.mxu0 0.0
      %1144 = vmatpush.msra.mxu0 0.0
      %1145 = vmatpush.msra.mxu0 0.0
      %1146 = vmatpush.msra.mxu0 0.0
      %1147 = vmatpush.msra.mxu0 0.0
      %1148 = vmatpush.msra.mxu0 %v1066
      %1149 = vmatmul.f32.gmra.mxu0 %v1071
      %v1150 = vpop.f32.mrf.mxu0
      %v1151 = vadd.f32 0.0, %v1150
      %1152 = vdwg.mxu0
      %v1153 = vadd.f32 %v1046, %v1091
      %v1154 = vadd.f32 %v1047, %v1111
      %v1155 = vadd.f32 %v1048, %v1131
      %v1156 = vadd.f32 %v1049, %v1151
      %1157 = vrot.lane.b32.xlu0 %v321, 64
      %v1158 = vpop.permute.xlu0 %1157
      %1159 = vrot.lane.b32.xlu0 %v315, 106
      %v1160 = vpop.permute.xlu0 %1159
      %1161 = vrot.lane.b32.xlu0 %v316, 106
      %v1162 = vpop.permute.xlu0 %1161
      %1163 = vrot.lane.b32.xlu0 %v317, 106
      %v1164 = vpop.permute.xlu0 %1163
      %1165 = vrot.lane.b32.xlu0 %v318, 106
      %v1166 = vpop.permute.xlu0 %1165
      %1167 = vrot.lane.b32.xlu0 %v319, 106
      %v1168 = vpop.permute.xlu0 %1167
      %vm1169 = vcmask 867328
      %v1170 = vsel %vm1169, %v1160, %v1162
      %v1171 = vsel %vm1169, %v1162, %v1164
      %v1172 = vsel %vm1169, %v1164, %v1166
      %v1173 = vsel %vm1169, %v1166, %v1168
      %v1178 = vsel %vm350, %v1158, 0
      %1180 = vmatpush.msra.mxu0 0.0
      %1181 = vmatpush.msra.mxu0 0.0
      %1182 = vmatpush.msra.mxu0 0.0
      %1183 = vmatpush.msra.mxu0 0.0
      %1184 = vmatpush.msra.mxu0 0.0
      %1185 = vmatpush.msra.mxu0 0.0
      %1186 = vmatpush.msra.mxu0 0.0
      %1187 = vmatpush.msra.mxu0 0.0
      %1188 = vmatpush.msra.mxu0 0.0
      %1189 = vmatpush.msra.mxu0 0.0
      %1190 = vmatpush.msra.mxu0 0.0
      %1191 = vmatpush.msra.mxu0 0.0
      %1192 = vmatpush.msra.mxu0 0.0
      %1193 = vmatpush.msra.mxu0 0.0
      %1194 = vmatpush.msra.mxu0 0.0
      %1195 = vmatpush.msra.mxu0 %v1170
      %1196 = vmatmul.f32.gmra.mxu0 %v1178
      %v1197 = vpop.f32.mrf.mxu0
      %v1198 = vadd.f32 0.0, %v1197
      %1199 = vdwg.mxu0
      %1200 = vmatpush.msra.mxu0 0.0
      %1201 = vmatpush.msra.mxu0 0.0
      %1202 = vmatpush.msra.mxu0 0.0
      %1203 = vmatpush.msra.mxu0 0.0
      %1204 = vmatpush.msra.mxu0 0.0
      %1205 = vmatpush.msra.mxu0 0.0
      %1206 = vmatpush.msra.mxu0 0.0
      %1207 = vmatpush.msra.mxu0 0.0
      %1208 = vmatpush.msra.mxu0 0.0
      %1209 = vmatpush.msra.mxu0 0.0
      %1210 = vmatpush.msra.mxu0 0.0
      %1211 = vmatpush.msra.mxu0 0.0
      %1212 = vmatpush.msra.mxu0 0.0
      %1213 = vmatpush.msra.mxu0 0.0
      %1214 = vmatpush.msra.mxu0 0.0
      %1215 = vmatpush.msra.mxu0 %v1171
      %1216 = vmatmul.f32.gmra.mxu0 %v1178
      %v1217 = vpop.f32.mrf.mxu0
      %v1218 = vadd.f32 0.0, %v1217
      %1219 = vdwg.mxu0
      %1220 = vmatpush.msra.mxu0 0.0
      %1221 = vmatpush.msra.mxu0 0.0
      %1222 = vmatpush.msra.mxu0 0.0
      %1223 = vmatpush.msra.mxu0 0.0
      %1224 = vmatpush.msra.mxu0 0.0
      %1225 = vmatpush.msra.mxu0 0.0
      %1226 = vmatpush.msra.mxu0 0.0
      %1227 = vmatpush.msra.mxu0 0.0
      %1228 = vmatpush.msra.mxu0 0.0
      %1229 = vmatpush.msra.mxu0 0.0
      %1230 = vmatpush.msra.mxu0 0.0
      %1231 = vmatpush.msra.mxu0 0.0
      %1232 = vmatpush.msra.mxu0 0.0
      %1233 = vmatpush.msra.mxu0 0.0
      %1234 = vmatpush.msra.mxu0 0.0
      %1235 = vmatpush.msra.mxu0 %v1172
      %1236 = vmatmul.f32.gmra.mxu0 %v1178
      %v1237 = vpop.f32.mrf.mxu0
      %v1238 = vadd.f32 0.0, %v1237
      %1239 = vdwg.mxu0
      %1240 = vmatpush.msra.mxu0 0.0
      %1241 = vmatpush.msra.mxu0 0.0
      %1242 = vmatpush.msra.mxu0 0.0
      %1243 = vmatpush.msra.mxu0 0.0
      %1244 = vmatpush.msra.mxu0 0.0
      %1245 = vmatpush.msra.mxu0 0.0
      %1246 = vmatpush.msra.mxu0 0.0
      %1247 = vmatpush.msra.mxu0 0.0
      %1248 = vmatpush.msra.mxu0 0.0
      %1249 = vmatpush.msra.mxu0 0.0
      %1250 = vmatpush.msra.mxu0 0.0
      %1251 = vmatpush.msra.mxu0 0.0
      %1252 = vmatpush.msra.mxu0 0.0
      %1253 = vmatpush.msra.mxu0 0.0
      %1254 = vmatpush.msra.mxu0 0.0
      %1255 = vmatpush.msra.mxu0 %v1173
      %1256 = vmatmul.f32.gmra.mxu0 %v1178
      %v1257 = vpop.f32.mrf.mxu0
      %v1258 = vadd.f32 0.0, %v1257
      %1259 = vdwg.mxu0
      %v1260 = vadd.f32 %v1153, %v1198
      %v1261 = vadd.f32 %v1154, %v1218
      %v1262 = vadd.f32 %v1155, %v1238
      %v1263 = vadd.f32 %v1156, %v1258
      %1264 = vrot.lane.b32.xlu0 %v321, 56
      %v1265 = vpop.permute.xlu0 %1264
      %1266 = vrot.lane.b32.xlu0 %v315, 28
      %v1267 = vpop.permute.xlu0 %1266
      %1268 = vrot.lane.b32.xlu0 %v316, 28
      %v1269 = vpop.permute.xlu0 %1268
      %1270 = vrot.lane.b32.xlu0 %v317, 28
      %v1271 = vpop.permute.xlu0 %1270
      %1272 = vrot.lane.b32.xlu0 %v318, 28
      %v1273 = vpop.permute.xlu0 %1272
      %1274 = vrot.lane.b32.xlu0 %v319, 28
      %v1275 = vpop.permute.xlu0 %1274
      %vm1276 = vcmask 228352
      %v1277 = vsel %vm1276, %v1267, %v1269
      %v1278 = vsel %vm1276, %v1269, %v1271
      %v1279 = vsel %vm1276, %v1271, %v1273
      %v1280 = vsel %vm1276, %v1273, %v1275
      %v1285 = vsel %vm350, %v1265, 0
      %1287 = vmatpush.msra.mxu0 0.0
      %1288 = vmatpush.msra.mxu0 0.0
      %1289 = vmatpush.msra.mxu0 0.0
      %1290 = vmatpush.msra.mxu0 0.0
      %1291 = vmatpush.msra.mxu0 0.0
      %1292 = vmatpush.msra.mxu0 0.0
      %1293 = vmatpush.msra.mxu0 0.0
      %1294 = vmatpush.msra.mxu0 0.0
      %1295 = vmatpush.msra.mxu0 0.0
      %1296 = vmatpush.msra.mxu0 0.0
      %1297 = vmatpush.msra.mxu0 0.0
      %1298 = vmatpush.msra.mxu0 0.0
      %1299 = vmatpush.msra.mxu0 0.0
      %1300 = vmatpush.msra.mxu0 0.0
      %1301 = vmatpush.msra.mxu0 0.0
      %1302 = vmatpush.msra.mxu0 %v1277
      %1303 = vmatmul.f32.gmra.mxu0 %v1285
      %v1304 = vpop.f32.mrf.mxu0
      %v1305 = vadd.f32 0.0, %v1304
      %1306 = vdwg.mxu0
      %1307 = vmatpush.msra.mxu0 0.0
      %1308 = vmatpush.msra.mxu0 0.0
      %1309 = vmatpush.msra.mxu0 0.0
      %1310 = vmatpush.msra.mxu0 0.0
      %1311 = vmatpush.msra.mxu0 0.0
      %1312 = vmatpush.msra.mxu0 0.0
      %1313 = vmatpush.msra.mxu0 0.0
      %1314 = vmatpush.msra.mxu0 0.0
      %1315 = vmatpush.msra.mxu0 0.0
      %1316 = vmatpush.msra.mxu0 0.0
      %1317 = vmatpush.msra.mxu0 0.0
      %1318 = vmatpush.msra.mxu0 0.0
      %1319 = vmatpush.msra.mxu0 0.0
      %1320 = vmatpush.msra.mxu0 0.0
      %1321 = vmatpush.msra.mxu0 0.0
      %1322 = vmatpush.msra.mxu0 %v1278
      %1323 = vmatmul.f32.gmra.mxu0 %v1285
      %v1324 = vpop.f32.mrf.mxu0
      %v1325 = vadd.f32 0.0, %v1324
      %1326 = vdwg.mxu0
      %1327 = vmatpush.msra.mxu0 0.0
      %1328 = vmatpush.msra.mxu0 0.0
      %1329 = vmatpush.msra.mxu0 0.0
      %1330 = vmatpush.msra.mxu0 0.0
      %1331 = vmatpush.msra.mxu0 0.0
      %1332 = vmatpush.msra.mxu0 0.0
      %1333 = vmatpush.msra.mxu0 0.0
      %1334 = vmatpush.msra.mxu0 0.0
      %1335 = vmatpush.msra.mxu0 0.0
      %1336 = vmatpush.msra.mxu0 0.0
      %1337 = vmatpush.msra.mxu0 0.0
      %1338 = vmatpush.msra.mxu0 0.0
      %1339 = vmatpush.msra.mxu0 0.0
      %1340 = vmatpush.msra.mxu0 0.0
      %1341 = vmatpush.msra.mxu0 0.0
      %1342 = vmatpush.msra.mxu0 %v1279
      %1343 = vmatmul.f32.gmra.mxu0 %v1285
      %v1344 = vpop.f32.mrf.mxu0
      %v1345 = vadd.f32 0.0, %v1344
      %1346 = vdwg.mxu0
      %1347 = vmatpush.msra.mxu0 0.0
      %1348 = vmatpush.msra.mxu0 0.0
      %1349 = vmatpush.msra.mxu0 0.0
      %1350 = vmatpush.msra.mxu0 0.0
      %1351 = vmatpush.msra.mxu0 0.0
      %1352 = vmatpush.msra.mxu0 0.0
      %1353 = vmatpush.msra.mxu0 0.0
      %1354 = vmatpush.msra.mxu0 0.0
      %1355 = vmatpush.msra.mxu0 0.0
      %1356 = vmatpush.msra.mxu0 0.0
      %1357 = vmatpush.msra.mxu0 0.0
      %1358 = vmatpush.msra.mxu0 0.0
      %1359 = vmatpush.msra.mxu0 0.0
      %1360 = vmatpush.msra.mxu0 0.0
      %1361 = vmatpush.msra.mxu0 0.0
      %1362 = vmatpush.msra.mxu0 %v1280
      %1363 = vmatmul.f32.gmra.mxu0 %v1285
      %v1364 = vpop.f32.mrf.mxu0
      %v1365 = vadd.f32 0.0, %v1364
      %1366 = vdwg.mxu0
      %v1367 = vadd.f32 %v1260, %v1305
      %v1368 = vadd.f32 %v1261, %v1325
      %v1369 = vadd.f32 %v1262, %v1345
      %v1370 = vadd.f32 %v1263, %v1365
      %1371 = vrot.lane.b32.xlu0 %v321, 48
      %v1372 = vpop.permute.xlu0 %1371
      %1373 = vrot.lane.b32.xlu0 %v315, 27
      %v1374 = vpop.permute.xlu0 %1373
      %1375 = vrot.lane.b32.xlu0 %v316, 27
      %v1376 = vpop.permute.xlu0 %1375
      %1377 = vrot.lane.b32.xlu0 %v317, 27
      %v1378 = vpop.permute.xlu0 %1377
      %1379 = vrot.lane.b32.xlu0 %v318, 27
      %v1380 = vpop.permute.xlu0 %1379
      %1381 = vrot.lane.b32.xlu0 %v319, 27
      %v1382 = vpop.permute.xlu0 %1381
      %vm1383 = vcmask 220160
      %v1384 = vsel %vm1383, %v1374, %v1376
      %v1385 = vsel %vm1383, %v1376, %v1378
      %v1386 = vsel %vm1383, %v1378, %v1380
      %v1387 = vsel %vm1383, %v1380, %v1382
      %v1392 = vsel %vm350, %v1372, 0
      %1394 = vmatpush.msra.mxu0 0.0
      %1395 = vmatpush.msra.mxu0 0.0
      %1396 = vmatpush.msra.mxu0 0.0
      %1397 = vmatpush.msra.mxu0 0.0
      %1398 = vmatpush.msra.mxu0 0.0
      %1399 = vmatpush.msra.mxu0 0.0
      %1400 = vmatpush.msra.mxu0 0.0
      %1401 = vmatpush.msra.mxu0 0.0
      %1402 = vmatpush.msra.mxu0 0.0
      %1403 = vmatpush.msra.mxu0 0.0
      %1404 = vmatpush.msra.mxu0 0.0
      %1405 = vmatpush.msra.mxu0 0.0
      %1406 = vmatpush.msra.mxu0 0.0
      %1407 = vmatpush.msra.mxu0 0.0
      %1408 = vmatpush.msra.mxu0 0.0
      %1409 = vmatpush.msra.mxu0 %v1384
      %1410 = vmatmul.f32.gmra.mxu0 %v1392
      %v1411 = vpop.f32.mrf.mxu0
      %v1412 = vadd.f32 0.0, %v1411
      %1413 = vdwg.mxu0
      %1414 = vmatpush.msra.mxu0 0.0
      %1415 = vmatpush.msra.mxu0 0.0
      %1416 = vmatpush.msra.mxu0 0.0
      %1417 = vmatpush.msra.mxu0 0.0
      %1418 = vmatpush.msra.mxu0 0.0
      %1419 = vmatpush.msra.mxu0 0.0
      %1420 = vmatpush.msra.mxu0 0.0
      %1421 = vmatpush.msra.mxu0 0.0
      %1422 = vmatpush.msra.mxu0 0.0
      %1423 = vmatpush.msra.mxu0 0.0
      %1424 = vmatpush.msra.mxu0 0.0
      %1425 = vmatpush.msra.mxu0 0.0
      %1426 = vmatpush.msra.mxu0 0.0
      %1427 = vmatpush.msra.mxu0 0.0
      %1428 = vmatpush.msra.mxu0 0.0
      %1429 = vmatpush.msra.mxu0 %v1385
      %1430 = vmatmul.f32.gmra.mxu0 %v1392
      %v1431 = vpop.f32.mrf.mxu0
      %v1432 = vadd.f32 0.0, %v1431
      %1433 = vdwg.mxu0
      %1434 = vmatpush.msra.mxu0 0.0
      %1435 = vmatpush.msra.mxu0 0.0
      %1436 = vmatpush.msra.mxu0 0.0
      %1437 = vmatpush.msra.mxu0 0.0
      %1438 = vmatpush.msra.mxu0 0.0
      %1439 = vmatpush.msra.mxu0 0.0
      %1440 = vmatpush.msra.mxu0 0.0
      %1441 = vmatpush.msra.mxu0 0.0
      %1442 = vmatpush.msra.mxu0 0.0
      %1443 = vmatpush.msra.mxu0 0.0
      %1444 = vmatpush.msra.mxu0 0.0
      %1445 = vmatpush.msra.mxu0 0.0
      %1446 = vmatpush.msra.mxu0 0.0
      %1447 = vmatpush.msra.mxu0 0.0
      %1448 = vmatpush.msra.mxu0 0.0
      %1449 = vmatpush.msra.mxu0 %v1386
      %1450 = vmatmul.f32.gmra.mxu0 %v1392
      %v1451 = vpop.f32.mrf.mxu0
      %v1452 = vadd.f32 0.0, %v1451
      %1453 = vdwg.mxu0
      %1454 = vmatpush.msra.mxu0 0.0
      %1455 = vmatpush.msra.mxu0 0.0
      %1456 = vmatpush.msra.mxu0 0.0
      %1457 = vmatpush.msra.mxu0 0.0
      %1458 = vmatpush.msra.mxu0 0.0
      %1459 = vmatpush.msra.mxu0 0.0
      %1460 = vmatpush.msra.mxu0 0.0
      %1461 = vmatpush.msra.mxu0 0.0
      %1462 = vmatpush.msra.mxu0 0.0
      %1463 = vmatpush.msra.mxu0 0.0
      %1464 = vmatpush.msra.mxu0 0.0
      %1465 = vmatpush.msra.mxu0 0.0
      %1466 = vmatpush.msra.mxu0 0.0
      %1467 = vmatpush.msra.mxu0 0.0
      %1468 = vmatpush.msra.mxu0 0.0
      %1469 = vmatpush.msra.mxu0 %v1387
      %1470 = vmatmul.f32.gmra.mxu0 %v1392
      %v1471 = vpop.f32.mrf.mxu0
      %v1472 = vadd.f32 0.0, %v1471
      %1473 = vdwg.mxu0
      %v1474 = vadd.f32 %v1367, %v1412
      %v1475 = vadd.f32 %v1368, %v1432
      %v1476 = vadd.f32 %v1369, %v1452
      %v1477 = vadd.f32 %v1370, %v1472
      %1478 = vrot.lane.b32.xlu0 %v321, 40
      %v1479 = vpop.permute.xlu0 %1478
      %1480 = vrot.lane.b32.xlu0 %v315, 26
      %v1481 = vpop.permute.xlu0 %1480
      %1482 = vrot.lane.b32.xlu0 %v316, 26
      %v1483 = vpop.permute.xlu0 %1482
      %1484 = vrot.lane.b32.xlu0 %v317, 26
      %v1485 = vpop.permute.xlu0 %1484
      %1486 = vrot.lane.b32.xlu0 %v318, 26
      %v1487 = vpop.permute.xlu0 %1486
      %1488 = vrot.lane.b32.xlu0 %v319, 26
      %v1489 = vpop.permute.xlu0 %1488
      %vm1490 = vcmask 211968
      %v1491 = vsel %vm1490, %v1481, %v1483
      %v1492 = vsel %vm1490, %v1483, %v1485
      %v1493 = vsel %vm1490, %v1485, %v1487
      %v1494 = vsel %vm1490, %v1487, %v1489
      %v1499 = vsel %vm350, %v1479, 0
      %1501 = vmatpush.msra.mxu0 0.0
      %1502 = vmatpush.msra.mxu0 0.0
      %1503 = vmatpush.msra.mxu0 0.0
      %1504 = vmatpush.msra.mxu0 0.0
      %1505 = vmatpush.msra.mxu0 0.0
      %1506 = vmatpush.msra.mxu0 0.0
      %1507 = vmatpush.msra.mxu0 0.0
      %1508 = vmatpush.msra.mxu0 0.0
      %1509 = vmatpush.msra.mxu0 0.0
      %1510 = vmatpush.msra.mxu0 0.0
      %1511 = vmatpush.msra.mxu0 0.0
      %1512 = vmatpush.msra.mxu0 0.0
      %1513 = vmatpush.msra.mxu0 0.0
      %1514 = vmatpush.msra.mxu0 0.0
      %1515 = vmatpush.msra.mxu0 0.0
      %1516 = vmatpush.msra.mxu0 %v1491
      %1517 = vmatmul.f32.gmra.mxu0 %v1499
      %v1518 = vpop.f32.mrf.mxu0
      %v1519 = vadd.f32 0.0, %v1518
      %1520 = vdwg.mxu0
      %1521 = vmatpush.msra.mxu0 0.0
      %1522 = vmatpush.msra.mxu0 0.0
      %1523 = vmatpush.msra.mxu0 0.0
      %1524 = vmatpush.msra.mxu0 0.0
      %1525 = vmatpush.msra.mxu0 0.0
      %1526 = vmatpush.msra.mxu0 0.0
      %1527 = vmatpush.msra.mxu0 0.0
      %1528 = vmatpush.msra.mxu0 0.0
      %1529 = vmatpush.msra.mxu0 0.0
      %1530 = vmatpush.msra.mxu0 0.0
      %1531 = vmatpush.msra.mxu0 0.0
      %1532 = vmatpush.msra.mxu0 0.0
      %1533 = vmatpush.msra.mxu0 0.0
      %1534 = vmatpush.msra.mxu0 0.0
      %1535 = vmatpush.msra.mxu0 0.0
      %1536 = vmatpush.msra.mxu0 %v1492
      %1537 = vmatmul.f32.gmra.mxu0 %v1499
      %v1538 = vpop.f32.mrf.mxu0
      %v1539 = vadd.f32 0.0, %v1538
      %1540 = vdwg.mxu0
      %1541 = vmatpush.msra.mxu0 0.0
      %1542 = vmatpush.msra.mxu0 0.0
      %1543 = vmatpush.msra.mxu0 0.0
      %1544 = vmatpush.msra.mxu0 0.0
      %1545 = vmatpush.msra.mxu0 0.0
      %1546 = vmatpush.msra.mxu0 0.0
      %1547 = vmatpush.msra.mxu0 0.0
      %1548 = vmatpush.msra.mxu0 0.0
      %1549 = vmatpush.msra.mxu0 0.0
      %1550 = vmatpush.msra.mxu0 0.0
      %1551 = vmatpush.msra.mxu0 0.0
      %1552 = vmatpush.msra.mxu0 0.0
      %1553 = vmatpush.msra.mxu0 0.0
      %1554 = vmatpush.msra.mxu0 0.0
      %1555 = vmatpush.msra.mxu0 0.0
      %1556 = vmatpush.msra.mxu0 %v1493
      %1557 = vmatmul.f32.gmra.mxu0 %v1499
      %v1558 = vpop.f32.mrf.mxu0
      %v1559 = vadd.f32 0.0, %v1558
      %1560 = vdwg.mxu0
      %1561 = vmatpush.msra.mxu0 0.0
      %1562 = vmatpush.msra.mxu0 0.0
      %1563 = vmatpush.msra.mxu0 0.0
      %1564 = vmatpush.msra.mxu0 0.0
      %1565 = vmatpush.msra.mxu0 0.0
      %1566 = vmatpush.msra.mxu0 0.0
      %1567 = vmatpush.msra.mxu0 0.0
      %1568 = vmatpush.msra.mxu0 0.0
      %1569 = vmatpush.msra.mxu0 0.0
      %1570 = vmatpush.msra.mxu0 0.0
      %1571 = vmatpush.msra.mxu0 0.0
      %1572 = vmatpush.msra.mxu0 0.0
      %1573 = vmatpush.msra.mxu0 0.0
      %1574 = vmatpush.msra.mxu0 0.0
      %1575 = vmatpush.msra.mxu0 0.0
      %1576 = vmatpush.msra.mxu0 %v1494
      %1577 = vmatmul.f32.gmra.mxu0 %v1499
      %v1578 = vpop.f32.mrf.mxu0
      %v1579 = vadd.f32 0.0, %v1578
      %1580 = vdwg.mxu0
      %v1581 = vadd.f32 %v1474, %v1519
      %v1582 = vadd.f32 %v1475, %v1539
      %v1583 = vadd.f32 %v1476, %v1559
      %v1584 = vadd.f32 %v1477, %v1579
      %1585 = vrot.lane.b32.xlu0 %v321, 32
      %v1586 = vpop.permute.xlu0 %1585
      %1587 = vrot.lane.b32.xlu0 %v315, 18
      %v1588 = vpop.permute.xlu0 %1587
      %1589 = vrot.lane.b32.xlu0 %v316, 18
      %v1590 = vpop.permute.xlu0 %1589
      %1591 = vrot.lane.b32.xlu0 %v317, 18
      %v1592 = vpop.permute.xlu0 %1591
      %1593 = vrot.lane.b32.xlu0 %v318, 18
      %v1594 = vpop.permute.xlu0 %1593
      %1595 = vrot.lane.b32.xlu0 %v319, 18
      %v1596 = vpop.permute.xlu0 %1595
      %vm1597 = vcmask 146432
      %v1598 = vsel %vm1597, %v1588, %v1590
      %v1599 = vsel %vm1597, %v1590, %v1592
      %v1600 = vsel %vm1597, %v1592, %v1594
      %v1601 = vsel %vm1597, %v1594, %v1596
      %v1606 = vsel %vm350, %v1586, 0
      %1608 = vmatpush.msra.mxu0 0.0
      %1609 = vmatpush.msra.mxu0 0.0
      %1610 = vmatpush.msra.mxu0 0.0
      %1611 = vmatpush.msra.mxu0 0.0
      %1612 = vmatpush.msra.mxu0 0.0
      %1613 = vmatpush.msra.mxu0 0.0
      %1614 = vmatpush.msra.mxu0 0.0
      %1615 = vmatpush.msra.mxu0 0.0
      %1616 = vmatpush.msra.mxu0 0.0
      %1617 = vmatpush.msra.mxu0 0.0
      %1618 = vmatpush.msra.mxu0 0.0
      %1619 = vmatpush.msra.mxu0 0.0
      %1620 = vmatpush.msra.mxu0 0.0
      %1621 = vmatpush.msra.mxu0 0.0
      %1622 = vmatpush.msra.mxu0 0.0
      %1623 = vmatpush.msra.mxu0 %v1598
      %1624 = vmatmul.f32.gmra.mxu0 %v1606
      %v1625 = vpop.f32.mrf.mxu0
      %v1626 = vadd.f32 0.0, %v1625
      %1627 = vdwg.mxu0
      %1628 = vmatpush.msra.mxu0 0.0
      %1629 = vmatpush.msra.mxu0 0.0
      %1630 = vmatpush.msra.mxu0 0.0
      %1631 = vmatpush.msra.mxu0 0.0
      %1632 = vmatpush.msra.mxu0 0.0
      %1633 = vmatpush.msra.mxu0 0.0
      %1634 = vmatpush.msra.mxu0 0.0
      %1635 = vmatpush.msra.mxu0 0.0
      %1636 = vmatpush.msra.mxu0 0.0
      %1637 = vmatpush.msra.mxu0 0.0
      %1638 = vmatpush.msra.mxu0 0.0
      %1639 = vmatpush.msra.mxu0 0.0
      %1640 = vmatpush.msra.mxu0 0.0
      %1641 = vmatpush.msra.mxu0 0.0
      %1642 = vmatpush.msra.mxu0 0.0
      %1643 = vmatpush.msra.mxu0 %v1599
      %1644 = vmatmul.f32.gmra.mxu0 %v1606
      %v1645 = vpop.f32.mrf.mxu0
      %v1646 = vadd.f32 0.0, %v1645
      %1647 = vdwg.mxu0
      %1648 = vmatpush.msra.mxu0 0.0
      %1649 = vmatpush.msra.mxu0 0.0
      %1650 = vmatpush.msra.mxu0 0.0
      %1651 = vmatpush.msra.mxu0 0.0
      %1652 = vmatpush.msra.mxu0 0.0
      %1653 = vmatpush.msra.mxu0 0.0
      %1654 = vmatpush.msra.mxu0 0.0
      %1655 = vmatpush.msra.mxu0 0.0
      %1656 = vmatpush.msra.mxu0 0.0
      %1657 = vmatpush.msra.mxu0 0.0
      %1658 = vmatpush.msra.mxu0 0.0
      %1659 = vmatpush.msra.mxu0 0.0
      %1660 = vmatpush.msra.mxu0 0.0
      %1661 = vmatpush.msra.mxu0 0.0
      %1662 = vmatpush.msra.mxu0 0.0
      %1663 = vmatpush.msra.mxu0 %v1600
      %1664 = vmatmul.f32.gmra.mxu0 %v1606
      %v1665 = vpop.f32.mrf.mxu0
      %v1666 = vadd.f32 0.0, %v1665
      %1667 = vdwg.mxu0
      %1668 = vmatpush.msra.mxu0 0.0
      %1669 = vmatpush.msra.mxu0 0.0
      %1670 = vmatpush.msra.mxu0 0.0
      %1671 = vmatpush.msra.mxu0 0.0
      %1672 = vmatpush.msra.mxu0 0.0
      %1673 = vmatpush.msra.mxu0 0.0
      %1674 = vmatpush.msra.mxu0 0.0
      %1675 = vmatpush.msra.mxu0 0.0
      %1676 = vmatpush.msra.mxu0 0.0
      %1677 = vmatpush.msra.mxu0 0.0
      %1678 = vmatpush.msra.mxu0 0.0
      %1679 = vmatpush.msra.mxu0 0.0
      %1680 = vmatpush.msra.mxu0 0.0
      %1681 = vmatpush.msra.mxu0 0.0
      %1682 = vmatpush.msra.mxu0 0.0
      %1683 = vmatpush.msra.mxu0 %v1601
      %1684 = vmatmul.f32.gmra.mxu0 %v1606
      %v1685 = vpop.f32.mrf.mxu0
      %v1686 = vadd.f32 0.0, %v1685
      %1687 = vdwg.mxu0
      %v1688 = vadd.f32 %v1581, %v1626
      %v1689 = vadd.f32 %v1582, %v1646
      %v1690 = vadd.f32 %v1583, %v1666
      %v1691 = vadd.f32 %v1584, %v1686
      %1692 = vrot.lane.b32.xlu0 %v321, 24
      %v1693 = vpop.permute.xlu0 %1692
      %1694 = vrot.lane.b32.xlu0 %v315, 17
      %v1695 = vpop.permute.xlu0 %1694
      %1696 = vrot.lane.b32.xlu0 %v316, 17
      %v1697 = vpop.permute.xlu0 %1696
      %1698 = vrot.lane.b32.xlu0 %v317, 17
      %v1699 = vpop.permute.xlu0 %1698
      %1700 = vrot.lane.b32.xlu0 %v318, 17
      %v1701 = vpop.permute.xlu0 %1700
      %1702 = vrot.lane.b32.xlu0 %v319, 17
      %v1703 = vpop.permute.xlu0 %1702
      %vm1704 = vcmask 138240
      %v1705 = vsel %vm1704, %v1695, %v1697
      %v1706 = vsel %vm1704, %v1697, %v1699
      %v1707 = vsel %vm1704, %v1699, %v1701
      %v1708 = vsel %vm1704, %v1701, %v1703
      %v1713 = vsel %vm350, %v1693, 0
      %1715 = vmatpush.msra.mxu0 0.0
      %1716 = vmatpush.msra.mxu0 0.0
      %1717 = vmatpush.msra.mxu0 0.0
      %1718 = vmatpush.msra.mxu0 0.0
      %1719 = vmatpush.msra.mxu0 0.0
      %1720 = vmatpush.msra.mxu0 0.0
      %1721 = vmatpush.msra.mxu0 0.0
      %1722 = vmatpush.msra.mxu0 0.0
      %1723 = vmatpush.msra.mxu0 0.0
      %1724 = vmatpush.msra.mxu0 0.0
      %1725 = vmatpush.msra.mxu0 0.0
      %1726 = vmatpush.msra.mxu0 0.0
      %1727 = vmatpush.msra.mxu0 0.0
      %1728 = vmatpush.msra.mxu0 0.0
      %1729 = vmatpush.msra.mxu0 0.0
      %1730 = vmatpush.msra.mxu0 %v1705
      %1731 = vmatmul.f32.gmra.mxu0 %v1713
      %v1732 = vpop.f32.mrf.mxu0
      %v1733 = vadd.f32 0.0, %v1732
      %1734 = vdwg.mxu0
      %1735 = vmatpush.msra.mxu0 0.0
      %1736 = vmatpush.msra.mxu0 0.0
      %1737 = vmatpush.msra.mxu0 0.0
      %1738 = vmatpush.msra.mxu0 0.0
      %1739 = vmatpush.msra.mxu0 0.0
      %1740 = vmatpush.msra.mxu0 0.0
      %1741 = vmatpush.msra.mxu0 0.0
      %1742 = vmatpush.msra.mxu0 0.0
      %1743 = vmatpush.msra.mxu0 0.0
      %1744 = vmatpush.msra.mxu0 0.0
      %1745 = vmatpush.msra.mxu0 0.0
      %1746 = vmatpush.msra.mxu0 0.0
      %1747 = vmatpush.msra.mxu0 0.0
      %1748 = vmatpush.msra.mxu0 0.0
      %1749 = vmatpush.msra.mxu0 0.0
      %1750 = vmatpush.msra.mxu0 %v1706
      %1751 = vmatmul.f32.gmra.mxu0 %v1713
      %v1752 = vpop.f32.mrf.mxu0
      %v1753 = vadd.f32 0.0, %v1752
      %1754 = vdwg.mxu0
      %1755 = vmatpush.msra.mxu0 0.0
      %1756 = vmatpush.msra.mxu0 0.0
      %1757 = vmatpush.msra.mxu0 0.0
      %1758 = vmatpush.msra.mxu0 0.0
      %1759 = vmatpush.msra.mxu0 0.0
      %1760 = vmatpush.msra.mxu0 0.0
      %1761 = vmatpush.msra.mxu0 0.0
      %1762 = vmatpush.msra.mxu0 0.0
      %1763 = vmatpush.msra.mxu0 0.0
      %1764 = vmatpush.msra.mxu0 0.0
      %1765 = vmatpush.msra.mxu0 0.0
      %1766 = vmatpush.msra.mxu0 0.0
      %1767 = vmatpush.msra.mxu0 0.0
      %1768 = vmatpush.msra.mxu0 0.0
      %1769 = vmatpush.msra.mxu0 0.0
      %1770 = vmatpush.msra.mxu0 %v1707
      %1771 = vmatmul.f32.gmra.mxu0 %v1713
      %v1772 = vpop.f32.mrf.mxu0
      %v1773 = vadd.f32 0.0, %v1772
      %1774 = vdwg.mxu0
      %1775 = vmatpush.msra.mxu0 0.0
      %1776 = vmatpush.msra.mxu0 0.0
      %1777 = vmatpush.msra.mxu0 0.0
      %1778 = vmatpush.msra.mxu0 0.0
      %1779 = vmatpush.msra.mxu0 0.0
      %1780 = vmatpush.msra.mxu0 0.0
      %1781 = vmatpush.msra.mxu0 0.0
      %1782 = vmatpush.msra.mxu0 0.0
      %1783 = vmatpush.msra.mxu0 0.0
      %1784 = vmatpush.msra.mxu0 0.0
      %1785 = vmatpush.msra.mxu0 0.0
      %1786 = vmatpush.msra.mxu0 0.0
      %1787 = vmatpush.msra.mxu0 0.0
      %1788 = vmatpush.msra.mxu0 0.0
      %1789 = vmatpush.msra.mxu0 0.0
      %1790 = vmatpush.msra.mxu0 %v1708
      %1791 = vmatmul.f32.gmra.mxu0 %v1713
      %v1792 = vpop.f32.mrf.mxu0
      %v1793 = vadd.f32 0.0, %v1792
      %1794 = vdwg.mxu0
      %v1795 = vadd.f32 %v1688, %v1733
      %v1796 = vadd.f32 %v1689, %v1753
      %v1797 = vadd.f32 %v1690, %v1773
      %v1798 = vadd.f32 %v1691, %v1793
      %1799 = vrot.lane.b32.xlu0 %v321, 16
      %v1800 = vpop.permute.xlu0 %1799
      %1801 = vrot.lane.b32.xlu0 %v315, 16
      %v1802 = vpop.permute.xlu0 %1801
      %1803 = vrot.lane.b32.xlu0 %v316, 16
      %v1804 = vpop.permute.xlu0 %1803
      %1805 = vrot.lane.b32.xlu0 %v317, 16
      %v1806 = vpop.permute.xlu0 %1805
      %1807 = vrot.lane.b32.xlu0 %v318, 16
      %v1808 = vpop.permute.xlu0 %1807
      %1809 = vrot.lane.b32.xlu0 %v319, 16
      %v1810 = vpop.permute.xlu0 %1809
      %vm1811 = vcmask 130048
      %v1812 = vsel %vm1811, %v1802, %v1804
      %v1813 = vsel %vm1811, %v1804, %v1806
      %v1814 = vsel %vm1811, %v1806, %v1808
      %v1815 = vsel %vm1811, %v1808, %v1810
      %v1820 = vsel %vm350, %v1800, 0
      %1822 = vmatpush.msra.mxu0 0.0
      %1823 = vmatpush.msra.mxu0 0.0
      %1824 = vmatpush.msra.mxu0 0.0
      %1825 = vmatpush.msra.mxu0 0.0
      %1826 = vmatpush.msra.mxu0 0.0
      %1827 = vmatpush.msra.mxu0 0.0
      %1828 = vmatpush.msra.mxu0 0.0
      %1829 = vmatpush.msra.mxu0 0.0
      %1830 = vmatpush.msra.mxu0 0.0
      %1831 = vmatpush.msra.mxu0 0.0
      %1832 = vmatpush.msra.mxu0 0.0
      %1833 = vmatpush.msra.mxu0 0.0
      %1834 = vmatpush.msra.mxu0 0.0
      %1835 = vmatpush.msra.mxu0 0.0
      %1836 = vmatpush.msra.mxu0 0.0
      %1837 = vmatpush.msra.mxu0 %v1812
      %1838 = vmatmul.f32.gmra.mxu0 %v1820
      %v1839 = vpop.f32.mrf.mxu0
      %v1840 = vadd.f32 0.0, %v1839
      %1841 = vdwg.mxu0
      %1842 = vmatpush.msra.mxu0 0.0
      %1843 = vmatpush.msra.mxu0 0.0
      %1844 = vmatpush.msra.mxu0 0.0
      %1845 = vmatpush.msra.mxu0 0.0
      %1846 = vmatpush.msra.mxu0 0.0
      %1847 = vmatpush.msra.mxu0 0.0
      %1848 = vmatpush.msra.mxu0 0.0
      %1849 = vmatpush.msra.mxu0 0.0
      %1850 = vmatpush.msra.mxu0 0.0
      %1851 = vmatpush.msra.mxu0 0.0
      %1852 = vmatpush.msra.mxu0 0.0
      %1853 = vmatpush.msra.mxu0 0.0
      %1854 = vmatpush.msra.mxu0 0.0
      %1855 = vmatpush.msra.mxu0 0.0
      %1856 = vmatpush.msra.mxu0 0.0
      %1857 = vmatpush.msra.mxu0 %v1813
      %1858 = vmatmul.f32.gmra.mxu0 %v1820
      %v1859 = vpop.f32.mrf.mxu0
      %v1860 = vadd.f32 0.0, %v1859
      %1861 = vdwg.mxu0
      %1862 = vmatpush.msra.mxu0 0.0
      %1863 = vmatpush.msra.mxu0 0.0
      %1864 = vmatpush.msra.mxu0 0.0
      %1865 = vmatpush.msra.mxu0 0.0
      %1866 = vmatpush.msra.mxu0 0.0
      %1867 = vmatpush.msra.mxu0 0.0
      %1868 = vmatpush.msra.mxu0 0.0
      %1869 = vmatpush.msra.mxu0 0.0
      %1870 = vmatpush.msra.mxu0 0.0
      %1871 = vmatpush.msra.mxu0 0.0
      %1872 = vmatpush.msra.mxu0 0.0
      %1873 = vmatpush.msra.mxu0 0.0
      %1874 = vmatpush.msra.mxu0 0.0
      %1875 = vmatpush.msra.mxu0 0.0
      %1876 = vmatpush.msra.mxu0 0.0
      %1877 = vmatpush.msra.mxu0 %v1814
      %1878 = vmatmul.f32.gmra.mxu0 %v1820
      %v1879 = vpop.f32.mrf.mxu0
      %v1880 = vadd.f32 0.0, %v1879
      %1881 = vdwg.mxu0
      %1882 = vmatpush.msra.mxu0 0.0
      %1883 = vmatpush.msra.mxu0 0.0
      %1884 = vmatpush.msra.mxu0 0.0
      %1885 = vmatpush.msra.mxu0 0.0
      %1886 = vmatpush.msra.mxu0 0.0
      %1887 = vmatpush.msra.mxu0 0.0
      %1888 = vmatpush.msra.mxu0 0.0
      %1889 = vmatpush.msra.mxu0 0.0
      %1890 = vmatpush.msra.mxu0 0.0
      %1891 = vmatpush.msra.mxu0 0.0
      %1892 = vmatpush.msra.mxu0 0.0
      %1893 = vmatpush.msra.mxu0 0.0
      %1894 = vmatpush.msra.mxu0 0.0
      %1895 = vmatpush.msra.mxu0 0.0
      %1896 = vmatpush.msra.mxu0 0.0
      %1897 = vmatpush.msra.mxu0 %v1815
      %1898 = vmatmul.f32.gmra.mxu0 %v1820
      %v1899 = vpop.f32.mrf.mxu0
      %v1900 = vadd.f32 0.0, %v1899
      %1901 = vdwg.mxu0
      %v1902 = vadd.f32 %v1795, %v1840
      %v1903 = vadd.f32 %v1796, %v1860
      %v1904 = vadd.f32 %v1797, %v1880
      %v1905 = vadd.f32 %v1798, %v1900
      %1906 = vrot.lane.b32.xlu0 %v321, 8
      %v1907 = vpop.permute.xlu0 %1906
      %1908 = vrot.lane.b32.xlu0 %v315, 8
      %v1909 = vpop.permute.xlu0 %1908
      %1910 = vrot.lane.b32.xlu0 %v316, 8
      %v1911 = vpop.permute.xlu0 %1910
      %1912 = vrot.lane.b32.xlu0 %v317, 8
      %v1913 = vpop.permute.xlu0 %1912
      %1914 = vrot.lane.b32.xlu0 %v318, 8
      %v1915 = vpop.permute.xlu0 %1914
      %1916 = vrot.lane.b32.xlu0 %v319, 8
      %v1917 = vpop.permute.xlu0 %1916
      %v1918 = vsel %vm350, %v1909, %v1911
      %v1919 = vsel %vm350, %v1911, %v1913
      %v1920 = vsel %vm350, %v1913, %v1915
      %v1921 = vsel %vm350, %v1915, %v1917
      %v1926 = vsel %vm350, %v1907, 0
      %1928 = vmatpush.msra.mxu0 0.0
      %1929 = vmatpush.msra.mxu0 0.0
      %1930 = vmatpush.msra.mxu0 0.0
      %1931 = vmatpush.msra.mxu0 0.0
      %1932 = vmatpush.msra.mxu0 0.0
      %1933 = vmatpush.msra.mxu0 0.0
      %1934 = vmatpush.msra.mxu0 0.0
      %1935 = vmatpush.msra.mxu0 0.0
      %1936 = vmatpush.msra.mxu0 0.0
      %1937 = vmatpush.msra.mxu0 0.0
      %1938 = vmatpush.msra.mxu0 0.0
      %1939 = vmatpush.msra.mxu0 0.0
      %1940 = vmatpush.msra.mxu0 0.0
      %1941 = vmatpush.msra.mxu0 0.0
      %1942 = vmatpush.msra.mxu0 0.0
      %1943 = vmatpush.msra.mxu0 %v1918
      %1944 = vmatmul.f32.gmra.mxu0 %v1926
      %v1945 = vpop.f32.mrf.mxu0
      %v1946 = vadd.f32 0.0, %v1945
      %1947 = vdwg.mxu0
      %1948 = vmatpush.msra.mxu0 0.0
      %1949 = vmatpush.msra.mxu0 0.0
      %1950 = vmatpush.msra.mxu0 0.0
      %1951 = vmatpush.msra.mxu0 0.0
      %1952 = vmatpush.msra.mxu0 0.0
      %1953 = vmatpush.msra.mxu0 0.0
      %1954 = vmatpush.msra.mxu0 0.0
      %1955 = vmatpush.msra.mxu0 0.0
      %1956 = vmatpush.msra.mxu0 0.0
      %1957 = vmatpush.msra.mxu0 0.0
      %1958 = vmatpush.msra.mxu0 0.0
      %1959 = vmatpush.msra.mxu0 0.0
      %1960 = vmatpush.msra.mxu0 0.0
      %1961 = vmatpush.msra.mxu0 0.0
      %1962 = vmatpush.msra.mxu0 0.0
      %1963 = vmatpush.msra.mxu0 %v1919
      %1964 = vmatmul.f32.gmra.mxu0 %v1926
      %v1965 = vpop.f32.mrf.mxu0
      %v1966 = vadd.f32 0.0, %v1965
      %1967 = vdwg.mxu0
      %1968 = vmatpush.msra.mxu0 0.0
      %1969 = vmatpush.msra.mxu0 0.0
      %1970 = vmatpush.msra.mxu0 0.0
      %1971 = vmatpush.msra.mxu0 0.0
      %1972 = vmatpush.msra.mxu0 0.0
      %1973 = vmatpush.msra.mxu0 0.0
      %1974 = vmatpush.msra.mxu0 0.0
      %1975 = vmatpush.msra.mxu0 0.0
      %1976 = vmatpush.msra.mxu0 0.0
      %1977 = vmatpush.msra.mxu0 0.0
      %1978 = vmatpush.msra.mxu0 0.0
      %1979 = vmatpush.msra.mxu0 0.0
      %1980 = vmatpush.msra.mxu0 0.0
      %1981 = vmatpush.msra.mxu0 0.0
      %1982 = vmatpush.msra.mxu0 0.0
      %1983 = vmatpush.msra.mxu0 %v1920
      %1984 = vmatmul.f32.gmra.mxu0 %v1926
      %v1985 = vpop.f32.mrf.mxu0
      %v1986 = vadd.f32 0.0, %v1985
      %1987 = vdwg.mxu0
      %1988 = vmatpush.msra.mxu0 0.0
      %1989 = vmatpush.msra.mxu0 0.0
      %1990 = vmatpush.msra.mxu0 0.0
      %1991 = vmatpush.msra.mxu0 0.0
      %1992 = vmatpush.msra.mxu0 0.0
      %1993 = vmatpush.msra.mxu0 0.0
      %1994 = vmatpush.msra.mxu0 0.0
      %1995 = vmatpush.msra.mxu0 0.0
      %1996 = vmatpush.msra.mxu0 0.0
      %1997 = vmatpush.msra.mxu0 0.0
      %1998 = vmatpush.msra.mxu0 0.0
      %1999 = vmatpush.msra.mxu0 0.0
      %2000 = vmatpush.msra.mxu0 0.0
      %2001 = vmatpush.msra.mxu0 0.0
      %2002 = vmatpush.msra.mxu0 0.0
      %2003 = vmatpush.msra.mxu0 %v1921
      %2004 = vmatmul.f32.gmra.mxu0 %v1926
      %v2005 = vpop.f32.mrf.mxu0
      %v2006 = vadd.f32 0.0, %v2005
      %2007 = vdwg.mxu0
      %v2008 = vadd.f32 %v1902, %v1946
      %v2009 = vadd.f32 %v1903, %v1966
      %v2010 = vadd.f32 %v1904, %v1986
      %v2011 = vadd.f32 %v1905, %v2006
      %2012 = vrot.lane.b32.xlu0 %v315, 7
      %v2013 = vpop.permute.xlu0 %2012
      %2014 = vrot.lane.b32.xlu0 %v316, 7
      %v2015 = vpop.permute.xlu0 %2014
      %2016 = vrot.lane.b32.xlu0 %v317, 7
      %v2017 = vpop.permute.xlu0 %2016
      %2018 = vrot.lane.b32.xlu0 %v318, 7
      %v2019 = vpop.permute.xlu0 %2018
      %2020 = vrot.lane.b32.xlu0 %v319, 7
      %v2021 = vpop.permute.xlu0 %2020
      %vm2022 = vcmask 56320
      %v2023 = vsel %vm2022, %v2013, %v2015
      %v2024 = vsel %vm2022, %v2015, %v2017
      %v2025 = vsel %vm2022, %v2017, %v2019
      %v2026 = vsel %vm2022, %v2019, %v2021
      %v2032 = vsel %vm350, %v322, 0
      %2034 = vmatpush.msra.mxu0 0.0
      %2035 = vmatpush.msra.mxu0 0.0
      %2036 = vmatpush.msra.mxu0 0.0
      %2037 = vmatpush.msra.mxu0 0.0
      %2038 = vmatpush.msra.mxu0 0.0
      %2039 = vmatpush.msra.mxu0 0.0
      %2040 = vmatpush.msra.mxu0 0.0
      %2041 = vmatpush.msra.mxu0 0.0
      %2042 = vmatpush.msra.mxu0 0.0
      %2043 = vmatpush.msra.mxu0 0.0
      %2044 = vmatpush.msra.mxu0 0.0
      %2045 = vmatpush.msra.mxu0 0.0
      %2046 = vmatpush.msra.mxu0 0.0
      %2047 = vmatpush.msra.mxu0 0.0
      %2048 = vmatpush.msra.mxu0 0.0
      %2049 = vmatpush.msra.mxu0 %v2023
      %2050 = vmatmul.f32.gmra.mxu0 %v2032
      %v2051 = vpop.f32.mrf.mxu0
      %v2052 = vadd.f32 0.0, %v2051
      %2053 = vdwg.mxu0
      %2054 = vmatpush.msra.mxu0 0.0
      %2055 = vmatpush.msra.mxu0 0.0
      %2056 = vmatpush.msra.mxu0 0.0
      %2057 = vmatpush.msra.mxu0 0.0
      %2058 = vmatpush.msra.mxu0 0.0
      %2059 = vmatpush.msra.mxu0 0.0
      %2060 = vmatpush.msra.mxu0 0.0
      %2061 = vmatpush.msra.mxu0 0.0
      %2062 = vmatpush.msra.mxu0 0.0
      %2063 = vmatpush.msra.mxu0 0.0
      %2064 = vmatpush.msra.mxu0 0.0
      %2065 = vmatpush.msra.mxu0 0.0
      %2066 = vmatpush.msra.mxu0 0.0
      %2067 = vmatpush.msra.mxu0 0.0
      %2068 = vmatpush.msra.mxu0 0.0
      %2069 = vmatpush.msra.mxu0 %v2024
      %2070 = vmatmul.f32.gmra.mxu0 %v2032
      %v2071 = vpop.f32.mrf.mxu0
      %v2072 = vadd.f32 0.0, %v2071
      %2073 = vdwg.mxu0
      %2074 = vmatpush.msra.mxu0 0.0
      %2075 = vmatpush.msra.mxu0 0.0
      %2076 = vmatpush.msra.mxu0 0.0
      %2077 = vmatpush.msra.mxu0 0.0
      %2078 = vmatpush.msra.mxu0 0.0
      %2079 = vmatpush.msra.mxu0 0.0
      %2080 = vmatpush.msra.mxu0 0.0
      %2081 = vmatpush.msra.mxu0 0.0
      %2082 = vmatpush.msra.mxu0 0.0
      %2083 = vmatpush.msra.mxu0 0.0
      %2084 = vmatpush.msra.mxu0 0.0
      %2085 = vmatpush.msra.mxu0 0.0
      %2086 = vmatpush.msra.mxu0 0.0
      %2087 = vmatpush.msra.mxu0 0.0
      %2088 = vmatpush.msra.mxu0 0.0
      %2089 = vmatpush.msra.mxu0 %v2025
      %2090 = vmatmul.f32.gmra.mxu0 %v2032
      %v2091 = vpop.f32.mrf.mxu0
      %v2092 = vadd.f32 0.0, %v2091
      %2093 = vdwg.mxu0
      %2094 = vmatpush.msra.mxu0 0.0
      %2095 = vmatpush.msra.mxu0 0.0
      %2096 = vmatpush.msra.mxu0 0.0
      %2097 = vmatpush.msra.mxu0 0.0
      %2098 = vmatpush.msra.mxu0 0.0
      %2099 = vmatpush.msra.mxu0 0.0
      %2100 = vmatpush.msra.mxu0 0.0
      %2101 = vmatpush.msra.mxu0 0.0
      %2102 = vmatpush.msra.mxu0 0.0
      %2103 = vmatpush.msra.mxu0 0.0
      %2104 = vmatpush.msra.mxu0 0.0
      %2105 = vmatpush.msra.mxu0 0.0
      %2106 = vmatpush.msra.mxu0 0.0
      %2107 = vmatpush.msra.mxu0 0.0
      %2108 = vmatpush.msra.mxu0 0.0
      %2109 = vmatpush.msra.mxu0 %v2026
      %2110 = vmatmul.f32.gmra.mxu0 %v2032
      %v2111 = vpop.f32.mrf.mxu0
      %v2112 = vadd.f32 0.0, %v2111
      %2113 = vdwg.mxu0
      %v2114 = vadd.f32 %v2008, %v2052
      %v2115 = vadd.f32 %v2009, %v2072
      %v2116 = vadd.f32 %v2010, %v2092
      %v2117 = vadd.f32 %v2011, %v2112
      %2118 = vrot.lane.b32.xlu0 %v322, 120
      %v2119 = vpop.permute.xlu0 %2118
      %2120 = vrot.lane.b32.xlu0 %v315, 6
      %v2121 = vpop.permute.xlu0 %2120
      %2122 = vrot.lane.b32.xlu0 %v316, 6
      %v2123 = vpop.permute.xlu0 %2122
      %2124 = vrot.lane.b32.xlu0 %v317, 6
      %v2125 = vpop.permute.xlu0 %2124
      %2126 = vrot.lane.b32.xlu0 %v318, 6
      %v2127 = vpop.permute.xlu0 %2126
      %2128 = vrot.lane.b32.xlu0 %v319, 6
      %v2129 = vpop.permute.xlu0 %2128
      %vm2130 = vcmask 48128
      %v2131 = vsel %vm2130, %v2121, %v2123
      %v2132 = vsel %vm2130, %v2123, %v2125
      %v2133 = vsel %vm2130, %v2125, %v2127
      %v2134 = vsel %vm2130, %v2127, %v2129
      %v2139 = vsel %vm350, %v2119, 0
      %2141 = vmatpush.msra.mxu0 0.0
      %2142 = vmatpush.msra.mxu0 0.0
      %2143 = vmatpush.msra.mxu0 0.0
      %2144 = vmatpush.msra.mxu0 0.0
      %2145 = vmatpush.msra.mxu0 0.0
      %2146 = vmatpush.msra.mxu0 0.0
      %2147 = vmatpush.msra.mxu0 0.0
      %2148 = vmatpush.msra.mxu0 0.0
      %2149 = vmatpush.msra.mxu0 0.0
      %2150 = vmatpush.msra.mxu0 0.0
      %2151 = vmatpush.msra.mxu0 0.0
      %2152 = vmatpush.msra.mxu0 0.0
      %2153 = vmatpush.msra.mxu0 0.0
      %2154 = vmatpush.msra.mxu0 0.0
      %2155 = vmatpush.msra.mxu0 0.0
      %2156 = vmatpush.msra.mxu0 %v2131
      %2157 = vmatmul.f32.gmra.mxu0 %v2139
      %v2158 = vpop.f32.mrf.mxu0
      %v2159 = vadd.f32 0.0, %v2158
      %2160 = vdwg.mxu0
      %2161 = vmatpush.msra.mxu0 0.0
      %2162 = vmatpush.msra.mxu0 0.0
      %2163 = vmatpush.msra.mxu0 0.0
      %2164 = vmatpush.msra.mxu0 0.0
      %2165 = vmatpush.msra.mxu0 0.0
      %2166 = vmatpush.msra.mxu0 0.0
      %2167 = vmatpush.msra.mxu0 0.0
      %2168 = vmatpush.msra.mxu0 0.0
      %2169 = vmatpush.msra.mxu0 0.0
      %2170 = vmatpush.msra.mxu0 0.0
      %2171 = vmatpush.msra.mxu0 0.0
      %2172 = vmatpush.msra.mxu0 0.0
      %2173 = vmatpush.msra.mxu0 0.0
      %2174 = vmatpush.msra.mxu0 0.0
      %2175 = vmatpush.msra.mxu0 0.0
      %2176 = vmatpush.msra.mxu0 %v2132
      %2177 = vmatmul.f32.gmra.mxu0 %v2139
      %v2178 = vpop.f32.mrf.mxu0
      %v2179 = vadd.f32 0.0, %v2178
      %2180 = vdwg.mxu0
      %2181 = vmatpush.msra.mxu0 0.0
      %2182 = vmatpush.msra.mxu0 0.0
      %2183 = vmatpush.msra.mxu0 0.0
      %2184 = vmatpush.msra.mxu0 0.0
      %2185 = vmatpush.msra.mxu0 0.0
      %2186 = vmatpush.msra.mxu0 0.0
      %2187 = vmatpush.msra.mxu0 0.0
      %2188 = vmatpush.msra.mxu0 0.0
      %2189 = vmatpush.msra.mxu0 0.0
      %2190 = vmatpush.msra.mxu0 0.0
      %2191 = vmatpush.msra.mxu0 0.0
      %2192 = vmatpush.msra.mxu0 0.0
      %2193 = vmatpush.msra.mxu0 0.0
      %2194 = vmatpush.msra.mxu0 0.0
      %2195 = vmatpush.msra.mxu0 0.0
      %2196 = vmatpush.msra.mxu0 %v2133
      %2197 = vmatmul.f32.gmra.mxu0 %v2139
      %v2198 = vpop.f32.mrf.mxu0
      %v2199 = vadd.f32 0.0, %v2198
      %2200 = vdwg.mxu0
      %2201 = vmatpush.msra.mxu0 0.0
      %2202 = vmatpush.msra.mxu0 0.0
      %2203 = vmatpush.msra.mxu0 0.0
      %2204 = vmatpush.msra.mxu0 0.0
      %2205 = vmatpush.msra.mxu0 0.0
      %2206 = vmatpush.msra.mxu0 0.0
      %2207 = vmatpush.msra.mxu0 0.0
      %2208 = vmatpush.msra.mxu0 0.0
      %2209 = vmatpush.msra.mxu0 0.0
      %2210 = vmatpush.msra.mxu0 0.0
      %2211 = vmatpush.msra.mxu0 0.0
      %2212 = vmatpush.msra.mxu0 0.0
      %2213 = vmatpush.msra.mxu0 0.0
      %2214 = vmatpush.msra.mxu0 0.0
      %2215 = vmatpush.msra.mxu0 0.0
      %2216 = vmatpush.msra.mxu0 %v2134
      %2217 = vmatmul.f32.gmra.mxu0 %v2139
      %v2218 = vpop.f32.mrf.mxu0
      %v2219 = vadd.f32 0.0, %v2218
      %2220 = vdwg.mxu0
      %v2221 = vadd.f32 %v2114, %v2159
      %v2222 = vadd.f32 %v2115, %v2179
      %v2223 = vadd.f32 %v2116, %v2199
      %v2224 = vadd.f32 %v2117, %v2219
      %2225 = vrot.lane.b32.xlu0 %v322, 112
      %v2226 = vpop.permute.xlu0 %2225
      %2228 = vrot.lane.b32.xlu0 %v316, 56
      %v2229 = vpop.permute.xlu0 %2228
      %2230 = vrot.lane.b32.xlu0 %v317, 56
      %v2231 = vpop.permute.xlu0 %2230
      %2232 = vrot.lane.b32.xlu0 %v318, 56
      %v2233 = vpop.permute.xlu0 %2232
      %2234 = vrot.lane.b32.xlu0 %v319, 56
      %v2235 = vpop.permute.xlu0 %2234
      %2236 = vrot.lane.b32.xlu0 %v320, 56
      %v2237 = vpop.permute.xlu0 %2236
      %vm2238 = vcmask 457728
      %v2239 = vsel %vm2238, %v2229, %v2231
      %v2240 = vsel %vm2238, %v2231, %v2233
      %v2241 = vsel %vm2238, %v2233, %v2235
      %v2242 = vsel %vm2238, %v2235, %v2237
      %v2247 = vsel %vm350, %v2226, 0
      %2249 = vmatpush.msra.mxu0 0.0
      %2250 = vmatpush.msra.mxu0 0.0
      %2251 = vmatpush.msra.mxu0 0.0
      %2252 = vmatpush.msra.mxu0 0.0
      %2253 = vmatpush.msra.mxu0 0.0
      %2254 = vmatpush.msra.mxu0 0.0
      %2255 = vmatpush.msra.mxu0 0.0
      %2256 = vmatpush.msra.mxu0 0.0
      %2257 = vmatpush.msra.mxu0 0.0
      %2258 = vmatpush.msra.mxu0 0.0
      %2259 = vmatpush.msra.mxu0 0.0
      %2260 = vmatpush.msra.mxu0 0.0
      %2261 = vmatpush.msra.mxu0 0.0
      %2262 = vmatpush.msra.mxu0 0.0
      %2263 = vmatpush.msra.mxu0 0.0
      %2264 = vmatpush.msra.mxu0 %v2239
      %2265 = vmatmul.f32.gmra.mxu0 %v2247
      %v2266 = vpop.f32.mrf.mxu0
      %v2267 = vadd.f32 0.0, %v2266
      %2268 = vdwg.mxu0
      %2269 = vmatpush.msra.mxu0 0.0
      %2270 = vmatpush.msra.mxu0 0.0
      %2271 = vmatpush.msra.mxu0 0.0
      %2272 = vmatpush.msra.mxu0 0.0
      %2273 = vmatpush.msra.mxu0 0.0
      %2274 = vmatpush.msra.mxu0 0.0
      %2275 = vmatpush.msra.mxu0 0.0
      %2276 = vmatpush.msra.mxu0 0.0
      %2277 = vmatpush.msra.mxu0 0.0
      %2278 = vmatpush.msra.mxu0 0.0
      %2279 = vmatpush.msra.mxu0 0.0
      %2280 = vmatpush.msra.mxu0 0.0
      %2281 = vmatpush.msra.mxu0 0.0
      %2282 = vmatpush.msra.mxu0 0.0
      %2283 = vmatpush.msra.mxu0 0.0
      %2284 = vmatpush.msra.mxu0 %v2240
      %2285 = vmatmul.f32.gmra.mxu0 %v2247
      %v2286 = vpop.f32.mrf.mxu0
      %v2287 = vadd.f32 0.0, %v2286
      %2288 = vdwg.mxu0
      %2289 = vmatpush.msra.mxu0 0.0
      %2290 = vmatpush.msra.mxu0 0.0
      %2291 = vmatpush.msra.mxu0 0.0
      %2292 = vmatpush.msra.mxu0 0.0
      %2293 = vmatpush.msra.mxu0 0.0
      %2294 = vmatpush.msra.mxu0 0.0
      %2295 = vmatpush.msra.mxu0 0.0
      %2296 = vmatpush.msra.mxu0 0.0
      %2297 = vmatpush.msra.mxu0 0.0
      %2298 = vmatpush.msra.mxu0 0.0
      %2299 = vmatpush.msra.mxu0 0.0
      %2300 = vmatpush.msra.mxu0 0.0
      %2301 = vmatpush.msra.mxu0 0.0
      %2302 = vmatpush.msra.mxu0 0.0
      %2303 = vmatpush.msra.mxu0 0.0
      %2304 = vmatpush.msra.mxu0 %v2241
      %2305 = vmatmul.f32.gmra.mxu0 %v2247
      %v2306 = vpop.f32.mrf.mxu0
      %v2307 = vadd.f32 0.0, %v2306
      %2308 = vdwg.mxu0
      %2309 = vmatpush.msra.mxu0 0.0
      %2310 = vmatpush.msra.mxu0 0.0
      %2311 = vmatpush.msra.mxu0 0.0
      %2312 = vmatpush.msra.mxu0 0.0
      %2313 = vmatpush.msra.mxu0 0.0
      %2314 = vmatpush.msra.mxu0 0.0
      %2315 = vmatpush.msra.mxu0 0.0
      %2316 = vmatpush.msra.mxu0 0.0
      %2317 = vmatpush.msra.mxu0 0.0
      %2318 = vmatpush.msra.mxu0 0.0
      %2319 = vmatpush.msra.mxu0 0.0
      %2320 = vmatpush.msra.mxu0 0.0
      %2321 = vmatpush.msra.mxu0 0.0
      %2322 = vmatpush.msra.mxu0 0.0
      %2323 = vmatpush.msra.mxu0 0.0
      %2324 = vmatpush.msra.mxu0 %v2242
      %2325 = vmatmul.f32.gmra.mxu0 %v2247
      %v2326 = vpop.f32.mrf.mxu0
      %v2327 = vadd.f32 0.0, %v2326
      %2328 = vdwg.mxu0
      %v2329 = vadd.f32 %v2221, %v2267
      %v2330 = vadd.f32 %v2222, %v2287
      %v2331 = vadd.f32 %v2223, %v2307
      %v2332 = vadd.f32 %v2224, %v2327
      %2333 = vrot.lane.b32.xlu0 %v322, 104
      %v2334 = vpop.permute.xlu0 %2333
      %2335 = vrot.lane.b32.xlu0 %v316, 55
      %v2336 = vpop.permute.xlu0 %2335
      %2337 = vrot.lane.b32.xlu0 %v317, 55
      %v2338 = vpop.permute.xlu0 %2337
      %2339 = vrot.lane.b32.xlu0 %v318, 55
      %v2340 = vpop.permute.xlu0 %2339
      %2341 = vrot.lane.b32.xlu0 %v319, 55
      %v2342 = vpop.permute.xlu0 %2341
      %2343 = vrot.lane.b32.xlu0 %v320, 55
      %v2344 = vpop.permute.xlu0 %2343
      %vm2345 = vcmask 449536
      %v2346 = vsel %vm2345, %v2336, %v2338
      %v2347 = vsel %vm2345, %v2338, %v2340
      %v2348 = vsel %vm2345, %v2340, %v2342
      %v2349 = vsel %vm2345, %v2342, %v2344
      %v2354 = vsel %vm350, %v2334, 0
      %2356 = vmatpush.msra.mxu0 0.0
      %2357 = vmatpush.msra.mxu0 0.0
      %2358 = vmatpush.msra.mxu0 0.0
      %2359 = vmatpush.msra.mxu0 0.0
      %2360 = vmatpush.msra.mxu0 0.0
      %2361 = vmatpush.msra.mxu0 0.0
      %2362 = vmatpush.msra.mxu0 0.0
      %2363 = vmatpush.msra.mxu0 0.0
      %2364 = vmatpush.msra.mxu0 0.0
      %2365 = vmatpush.msra.mxu0 0.0
      %2366 = vmatpush.msra.mxu0 0.0
      %2367 = vmatpush.msra.mxu0 0.0
      %2368 = vmatpush.msra.mxu0 0.0
      %2369 = vmatpush.msra.mxu0 0.0
      %2370 = vmatpush.msra.mxu0 0.0
      %2371 = vmatpush.msra.mxu0 %v2346
      %2372 = vmatmul.f32.gmra.mxu0 %v2354
      %v2373 = vpop.f32.mrf.mxu0
      %v2374 = vadd.f32 0.0, %v2373
      %2375 = vdwg.mxu0
      %2376 = vmatpush.msra.mxu0 0.0
      %2377 = vmatpush.msra.mxu0 0.0
      %2378 = vmatpush.msra.mxu0 0.0
      %2379 = vmatpush.msra.mxu0 0.0
      %2380 = vmatpush.msra.mxu0 0.0
      %2381 = vmatpush.msra.mxu0 0.0
      %2382 = vmatpush.msra.mxu0 0.0
      %2383 = vmatpush.msra.mxu0 0.0
      %2384 = vmatpush.msra.mxu0 0.0
      %2385 = vmatpush.msra.mxu0 0.0
      %2386 = vmatpush.msra.mxu0 0.0
      %2387 = vmatpush.msra.mxu0 0.0
      %2388 = vmatpush.msra.mxu0 0.0
      %2389 = vmatpush.msra.mxu0 0.0
      %2390 = vmatpush.msra.mxu0 0.0
      %2391 = vmatpush.msra.mxu0 %v2347
      %2392 = vmatmul.f32.gmra.mxu0 %v2354
      %v2393 = vpop.f32.mrf.mxu0
      %v2394 = vadd.f32 0.0, %v2393
      %2395 = vdwg.mxu0
      %2396 = vmatpush.msra.mxu0 0.0
      %2397 = vmatpush.msra.mxu0 0.0
      %2398 = vmatpush.msra.mxu0 0.0
      %2399 = vmatpush.msra.mxu0 0.0
      %2400 = vmatpush.msra.mxu0 0.0
      %2401 = vmatpush.msra.mxu0 0.0
      %2402 = vmatpush.msra.mxu0 0.0
      %2403 = vmatpush.msra.mxu0 0.0
      %2404 = vmatpush.msra.mxu0 0.0
      %2405 = vmatpush.msra.mxu0 0.0
      %2406 = vmatpush.msra.mxu0 0.0
      %2407 = vmatpush.msra.mxu0 0.0
      %2408 = vmatpush.msra.mxu0 0.0
      %2409 = vmatpush.msra.mxu0 0.0
      %2410 = vmatpush.msra.mxu0 0.0
      %2411 = vmatpush.msra.mxu0 %v2348
      %2412 = vmatmul.f32.gmra.mxu0 %v2354
      %v2413 = vpop.f32.mrf.mxu0
      %v2414 = vadd.f32 0.0, %v2413
      %2415 = vdwg.mxu0
      %2416 = vmatpush.msra.mxu0 0.0
      %2417 = vmatpush.msra.mxu0 0.0
      %2418 = vmatpush.msra.mxu0 0.0
      %2419 = vmatpush.msra.mxu0 0.0
      %2420 = vmatpush.msra.mxu0 0.0
      %2421 = vmatpush.msra.mxu0 0.0
      %2422 = vmatpush.msra.mxu0 0.0
      %2423 = vmatpush.msra.mxu0 0.0
      %2424 = vmatpush.msra.mxu0 0.0
      %2425 = vmatpush.msra.mxu0 0.0
      %2426 = vmatpush.msra.mxu0 0.0
      %2427 = vmatpush.msra.mxu0 0.0
      %2428 = vmatpush.msra.mxu0 0.0
      %2429 = vmatpush.msra.mxu0 0.0
      %2430 = vmatpush.msra.mxu0 0.0
      %2431 = vmatpush.msra.mxu0 %v2349
      %2432 = vmatmul.f32.gmra.mxu0 %v2354
      %v2433 = vpop.f32.mrf.mxu0
      %v2434 = vadd.f32 0.0, %v2433
      %2435 = vdwg.mxu0
      %v2436 = vadd.f32 %v2329, %v2374
      %v2437 = vadd.f32 %v2330, %v2394
      %v2438 = vadd.f32 %v2331, %v2414
      %v2439 = vadd.f32 %v2332, %v2434
      %2440 = vrot.lane.b32.xlu0 %v322, 96
      %v2441 = vpop.permute.xlu0 %2440
      %2442 = vrot.lane.b32.xlu0 %v316, 54
      %v2443 = vpop.permute.xlu0 %2442
      %2444 = vrot.lane.b32.xlu0 %v317, 54
      %v2445 = vpop.permute.xlu0 %2444
      %2446 = vrot.lane.b32.xlu0 %v318, 54
      %v2447 = vpop.permute.xlu0 %2446
      %2448 = vrot.lane.b32.xlu0 %v319, 54
      %v2449 = vpop.permute.xlu0 %2448
      %2450 = vrot.lane.b32.xlu0 %v320, 54
      %v2451 = vpop.permute.xlu0 %2450
      %vm2452 = vcmask 441344
      %v2453 = vsel %vm2452, %v2443, %v2445
      %v2454 = vsel %vm2452, %v2445, %v2447
      %v2455 = vsel %vm2452, %v2447, %v2449
      %v2456 = vsel %vm2452, %v2449, %v2451
      %v2461 = vsel %vm350, %v2441, 0
      %2463 = vmatpush.msra.mxu0 0.0
      %2464 = vmatpush.msra.mxu0 0.0
      %2465 = vmatpush.msra.mxu0 0.0
      %2466 = vmatpush.msra.mxu0 0.0
      %2467 = vmatpush.msra.mxu0 0.0
      %2468 = vmatpush.msra.mxu0 0.0
      %2469 = vmatpush.msra.mxu0 0.0
      %2470 = vmatpush.msra.mxu0 0.0
      %2471 = vmatpush.msra.mxu0 0.0
      %2472 = vmatpush.msra.mxu0 0.0
      %2473 = vmatpush.msra.mxu0 0.0
      %2474 = vmatpush.msra.mxu0 0.0
      %2475 = vmatpush.msra.mxu0 0.0
      %2476 = vmatpush.msra.mxu0 0.0
      %2477 = vmatpush.msra.mxu0 0.0
      %2478 = vmatpush.msra.mxu0 %v2453
      %2479 = vmatmul.f32.gmra.mxu0 %v2461
      %v2480 = vpop.f32.mrf.mxu0
      %v2481 = vadd.f32 0.0, %v2480
      %2482 = vdwg.mxu0
      %2483 = vmatpush.msra.mxu0 0.0
      %2484 = vmatpush.msra.mxu0 0.0
      %2485 = vmatpush.msra.mxu0 0.0
      %2486 = vmatpush.msra.mxu0 0.0
      %2487 = vmatpush.msra.mxu0 0.0
      %2488 = vmatpush.msra.mxu0 0.0
      %2489 = vmatpush.msra.mxu0 0.0
      %2490 = vmatpush.msra.mxu0 0.0
      %2491 = vmatpush.msra.mxu0 0.0
      %2492 = vmatpush.msra.mxu0 0.0
      %2493 = vmatpush.msra.mxu0 0.0
      %2494 = vmatpush.msra.mxu0 0.0
      %2495 = vmatpush.msra.mxu0 0.0
      %2496 = vmatpush.msra.mxu0 0.0
      %2497 = vmatpush.msra.mxu0 0.0
      %2498 = vmatpush.msra.mxu0 %v2454
      %2499 = vmatmul.f32.gmra.mxu0 %v2461
      %v2500 = vpop.f32.mrf.mxu0
      %v2501 = vadd.f32 0.0, %v2500
      %2502 = vdwg.mxu0
      %2503 = vmatpush.msra.mxu0 0.0
      %2504 = vmatpush.msra.mxu0 0.0
      %2505 = vmatpush.msra.mxu0 0.0
      %2506 = vmatpush.msra.mxu0 0.0
      %2507 = vmatpush.msra.mxu0 0.0
      %2508 = vmatpush.msra.mxu0 0.0
      %2509 = vmatpush.msra.mxu0 0.0
      %2510 = vmatpush.msra.mxu0 0.0
      %2511 = vmatpush.msra.mxu0 0.0
      %2512 = vmatpush.msra.mxu0 0.0
      %2513 = vmatpush.msra.mxu0 0.0
      %2514 = vmatpush.msra.mxu0 0.0
      %2515 = vmatpush.msra.mxu0 0.0
      %2516 = vmatpush.msra.mxu0 0.0
      %2517 = vmatpush.msra.mxu0 0.0
      %2518 = vmatpush.msra.mxu0 %v2455
      %2519 = vmatmul.f32.gmra.mxu0 %v2461
      %v2520 = vpop.f32.mrf.mxu0
      %v2521 = vadd.f32 0.0, %v2520
      %2522 = vdwg.mxu0
      %2523 = vmatpush.msra.mxu0 0.0
      %2524 = vmatpush.msra.mxu0 0.0
      %2525 = vmatpush.msra.mxu0 0.0
      %2526 = vmatpush.msra.mxu0 0.0
      %2527 = vmatpush.msra.mxu0 0.0
      %2528 = vmatpush.msra.mxu0 0.0
      %2529 = vmatpush.msra.mxu0 0.0
      %2530 = vmatpush.msra.mxu0 0.0
      %2531 = vmatpush.msra.mxu0 0.0
      %2532 = vmatpush.msra.mxu0 0.0
      %2533 = vmatpush.msra.mxu0 0.0
      %2534 = vmatpush.msra.mxu0 0.0
      %2535 = vmatpush.msra.mxu0 0.0
      %2536 = vmatpush.msra.mxu0 0.0
      %2537 = vmatpush.msra.mxu0 0.0
      %2538 = vmatpush.msra.mxu0 %v2456
      %2539 = vmatmul.f32.gmra.mxu0 %v2461
      %v2540 = vpop.f32.mrf.mxu0
      %v2541 = vadd.f32 0.0, %v2540
      %2542 = vdwg.mxu0
      %v2543 = vadd.f32 %v2436, %v2481
      %v2544 = vadd.f32 %v2437, %v2501
      %v2545 = vadd.f32 %v2438, %v2521
      %v2546 = vadd.f32 %v2439, %v2541
      %2547 = vrot.lane.b32.xlu0 %v322, 88
      %v2548 = vpop.permute.xlu0 %2547
      %2549 = vrot.lane.b32.xlu0 %v316, 46
      %v2550 = vpop.permute.xlu0 %2549
      %2551 = vrot.lane.b32.xlu0 %v317, 46
      %v2552 = vpop.permute.xlu0 %2551
      %2553 = vrot.lane.b32.xlu0 %v318, 46
      %v2554 = vpop.permute.xlu0 %2553
      %2555 = vrot.lane.b32.xlu0 %v319, 46
      %v2556 = vpop.permute.xlu0 %2555
      %2557 = vrot.lane.b32.xlu0 %v320, 46
      %v2558 = vpop.permute.xlu0 %2557
      %vm2559 = vcmask 375808
      %v2560 = vsel %vm2559, %v2550, %v2552
      %v2561 = vsel %vm2559, %v2552, %v2554
      %v2562 = vsel %vm2559, %v2554, %v2556
      %v2563 = vsel %vm2559, %v2556, %v2558
      %v2568 = vsel %vm350, %v2548, 0
      %2570 = vmatpush.msra.mxu0 0.0
      %2571 = vmatpush.msra.mxu0 0.0
      %2572 = vmatpush.msra.mxu0 0.0
      %2573 = vmatpush.msra.mxu0 0.0
      %2574 = vmatpush.msra.mxu0 0.0
      %2575 = vmatpush.msra.mxu0 0.0
      %2576 = vmatpush.msra.mxu0 0.0
      %2577 = vmatpush.msra.mxu0 0.0
      %2578 = vmatpush.msra.mxu0 0.0
      %2579 = vmatpush.msra.mxu0 0.0
      %2580 = vmatpush.msra.mxu0 0.0
      %2581 = vmatpush.msra.mxu0 0.0
      %2582 = vmatpush.msra.mxu0 0.0
      %2583 = vmatpush.msra.mxu0 0.0
      %2584 = vmatpush.msra.mxu0 0.0
      %2585 = vmatpush.msra.mxu0 %v2560
      %2586 = vmatmul.f32.gmra.mxu0 %v2568
      %v2587 = vpop.f32.mrf.mxu0
      %v2588 = vadd.f32 0.0, %v2587
      %2589 = vdwg.mxu0
      %2590 = vmatpush.msra.mxu0 0.0
      %2591 = vmatpush.msra.mxu0 0.0
      %2592 = vmatpush.msra.mxu0 0.0
      %2593 = vmatpush.msra.mxu0 0.0
      %2594 = vmatpush.msra.mxu0 0.0
      %2595 = vmatpush.msra.mxu0 0.0
      %2596 = vmatpush.msra.mxu0 0.0
      %2597 = vmatpush.msra.mxu0 0.0
      %2598 = vmatpush.msra.mxu0 0.0
      %2599 = vmatpush.msra.mxu0 0.0
      %2600 = vmatpush.msra.mxu0 0.0
      %2601 = vmatpush.msra.mxu0 0.0
      %2602 = vmatpush.msra.mxu0 0.0
      %2603 = vmatpush.msra.mxu0 0.0
      %2604 = vmatpush.msra.mxu0 0.0
      %2605 = vmatpush.msra.mxu0 %v2561
      %2606 = vmatmul.f32.gmra.mxu0 %v2568
      %v2607 = vpop.f32.mrf.mxu0
      %v2608 = vadd.f32 0.0, %v2607
      %2609 = vdwg.mxu0
      %2610 = vmatpush.msra.mxu0 0.0
      %2611 = vmatpush.msra.mxu0 0.0
      %2612 = vmatpush.msra.mxu0 0.0
      %2613 = vmatpush.msra.mxu0 0.0
      %2614 = vmatpush.msra.mxu0 0.0
      %2615 = vmatpush.msra.mxu0 0.0
      %2616 = vmatpush.msra.mxu0 0.0
      %2617 = vmatpush.msra.mxu0 0.0
      %2618 = vmatpush.msra.mxu0 0.0
      %2619 = vmatpush.msra.mxu0 0.0
      %2620 = vmatpush.msra.mxu0 0.0
      %2621 = vmatpush.msra.mxu0 0.0
      %2622 = vmatpush.msra.mxu0 0.0
      %2623 = vmatpush.msra.mxu0 0.0
      %2624 = vmatpush.msra.mxu0 0.0
      %2625 = vmatpush.msra.mxu0 %v2562
      %2626 = vmatmul.f32.gmra.mxu0 %v2568
      %v2627 = vpop.f32.mrf.mxu0
      %v2628 = vadd.f32 0.0, %v2627
      %2629 = vdwg.mxu0
      %2630 = vmatpush.msra.mxu0 0.0
      %2631 = vmatpush.msra.mxu0 0.0
      %2632 = vmatpush.msra.mxu0 0.0
      %2633 = vmatpush.msra.mxu0 0.0
      %2634 = vmatpush.msra.mxu0 0.0
      %2635 = vmatpush.msra.mxu0 0.0
      %2636 = vmatpush.msra.mxu0 0.0
      %2637 = vmatpush.msra.mxu0 0.0
      %2638 = vmatpush.msra.mxu0 0.0
      %2639 = vmatpush.msra.mxu0 0.0
      %2640 = vmatpush.msra.mxu0 0.0
      %2641 = vmatpush.msra.mxu0 0.0
      %2642 = vmatpush.msra.mxu0 0.0
      %2643 = vmatpush.msra.mxu0 0.0
      %2644 = vmatpush.msra.mxu0 0.0
      %2645 = vmatpush.msra.mxu0 %v2563
      %2646 = vmatmul.f32.gmra.mxu0 %v2568
      %v2647 = vpop.f32.mrf.mxu0
      %v2648 = vadd.f32 0.0, %v2647
      %2649 = vdwg.mxu0
      %v2650 = vadd.f32 %v2543, %v2588
      %v2651 = vadd.f32 %v2544, %v2608
      %v2652 = vadd.f32 %v2545, %v2628
      %v2653 = vadd.f32 %v2546, %v2648
      %2654 = vrot.lane.b32.xlu0 %v322, 80
      %v2655 = vpop.permute.xlu0 %2654
      %2656 = vrot.lane.b32.xlu0 %v316, 45
      %v2657 = vpop.permute.xlu0 %2656
      %2658 = vrot.lane.b32.xlu0 %v317, 45
      %v2659 = vpop.permute.xlu0 %2658
      %2660 = vrot.lane.b32.xlu0 %v318, 45
      %v2661 = vpop.permute.xlu0 %2660
      %2662 = vrot.lane.b32.xlu0 %v319, 45
      %v2663 = vpop.permute.xlu0 %2662
      %2664 = vrot.lane.b32.xlu0 %v320, 45
      %v2665 = vpop.permute.xlu0 %2664
      %vm2666 = vcmask 367616
      %v2667 = vsel %vm2666, %v2657, %v2659
      %v2668 = vsel %vm2666, %v2659, %v2661
      %v2669 = vsel %vm2666, %v2661, %v2663
      %v2670 = vsel %vm2666, %v2663, %v2665
      %v2675 = vsel %vm350, %v2655, 0
      %2677 = vmatpush.msra.mxu0 0.0
      %2678 = vmatpush.msra.mxu0 0.0
      %2679 = vmatpush.msra.mxu0 0.0
      %2680 = vmatpush.msra.mxu0 0.0
      %2681 = vmatpush.msra.mxu0 0.0
      %2682 = vmatpush.msra.mxu0 0.0
      %2683 = vmatpush.msra.mxu0 0.0
      %2684 = vmatpush.msra.mxu0 0.0
      %2685 = vmatpush.msra.mxu0 0.0
      %2686 = vmatpush.msra.mxu0 0.0
      %2687 = vmatpush.msra.mxu0 0.0
      %2688 = vmatpush.msra.mxu0 0.0
      %2689 = vmatpush.msra.mxu0 0.0
      %2690 = vmatpush.msra.mxu0 0.0
      %2691 = vmatpush.msra.mxu0 0.0
      %2692 = vmatpush.msra.mxu0 %v2667
      %2693 = vmatmul.f32.gmra.mxu0 %v2675
      %v2694 = vpop.f32.mrf.mxu0
      %v2695 = vadd.f32 0.0, %v2694
      %2696 = vdwg.mxu0
      %2697 = vmatpush.msra.mxu0 0.0
      %2698 = vmatpush.msra.mxu0 0.0
      %2699 = vmatpush.msra.mxu0 0.0
      %2700 = vmatpush.msra.mxu0 0.0
      %2701 = vmatpush.msra.mxu0 0.0
      %2702 = vmatpush.msra.mxu0 0.0
      %2703 = vmatpush.msra.mxu0 0.0
      %2704 = vmatpush.msra.mxu0 0.0
      %2705 = vmatpush.msra.mxu0 0.0
      %2706 = vmatpush.msra.mxu0 0.0
      %2707 = vmatpush.msra.mxu0 0.0
      %2708 = vmatpush.msra.mxu0 0.0
      %2709 = vmatpush.msra.mxu0 0.0
      %2710 = vmatpush.msra.mxu0 0.0
      %2711 = vmatpush.msra.mxu0 0.0
      %2712 = vmatpush.msra.mxu0 %v2668
      %2713 = vmatmul.f32.gmra.mxu0 %v2675
      %v2714 = vpop.f32.mrf.mxu0
      %v2715 = vadd.f32 0.0, %v2714
      %2716 = vdwg.mxu0
      %2717 = vmatpush.msra.mxu0 0.0
      %2718 = vmatpush.msra.mxu0 0.0
      %2719 = vmatpush.msra.mxu0 0.0
      %2720 = vmatpush.msra.mxu0 0.0
      %2721 = vmatpush.msra.mxu0 0.0
      %2722 = vmatpush.msra.mxu0 0.0
      %2723 = vmatpush.msra.mxu0 0.0
      %2724 = vmatpush.msra.mxu0 0.0
      %2725 = vmatpush.msra.mxu0 0.0
      %2726 = vmatpush.msra.mxu0 0.0
      %2727 = vmatpush.msra.mxu0 0.0
      %2728 = vmatpush.msra.mxu0 0.0
      %2729 = vmatpush.msra.mxu0 0.0
      %2730 = vmatpush.msra.mxu0 0.0
      %2731 = vmatpush.msra.mxu0 0.0
      %2732 = vmatpush.msra.mxu0 %v2669
      %2733 = vmatmul.f32.gmra.mxu0 %v2675
      %v2734 = vpop.f32.mrf.mxu0
      %v2735 = vadd.f32 0.0, %v2734
      %2736 = vdwg.mxu0
      %2737 = vmatpush.msra.mxu0 0.0
      %2738 = vmatpush.msra.mxu0 0.0
      %2739 = vmatpush.msra.mxu0 0.0
      %2740 = vmatpush.msra.mxu0 0.0
      %2741 = vmatpush.msra.mxu0 0.0
      %2742 = vmatpush.msra.mxu0 0.0
      %2743 = vmatpush.msra.mxu0 0.0
      %2744 = vmatpush.msra.mxu0 0.0
      %2745 = vmatpush.msra.mxu0 0.0
      %2746 = vmatpush.msra.mxu0 0.0
      %2747 = vmatpush.msra.mxu0 0.0
      %2748 = vmatpush.msra.mxu0 0.0
      %2749 = vmatpush.msra.mxu0 0.0
      %2750 = vmatpush.msra.mxu0 0.0
      %2751 = vmatpush.msra.mxu0 0.0
      %2752 = vmatpush.msra.mxu0 %v2670
      %2753 = vmatmul.f32.gmra.mxu0 %v2675
      %v2754 = vpop.f32.mrf.mxu0
      %v2755 = vadd.f32 0.0, %v2754
      %2756 = vdwg.mxu0
      %v2757 = vadd.f32 %v2650, %v2695
      %v2758 = vadd.f32 %v2651, %v2715
      %v2759 = vadd.f32 %v2652, %v2735
      %v2760 = vadd.f32 %v2653, %v2755
      %2761 = vrot.lane.b32.xlu0 %v322, 72
      %v2762 = vpop.permute.xlu0 %2761
      %2763 = vrot.lane.b32.xlu0 %v316, 44
      %v2764 = vpop.permute.xlu0 %2763
      %2765 = vrot.lane.b32.xlu0 %v317, 44
      %v2766 = vpop.permute.xlu0 %2765
      %2767 = vrot.lane.b32.xlu0 %v318, 44
      %v2768 = vpop.permute.xlu0 %2767
      %2769 = vrot.lane.b32.xlu0 %v319, 44
      %v2770 = vpop.permute.xlu0 %2769
      %2771 = vrot.lane.b32.xlu0 %v320, 44
      %v2772 = vpop.permute.xlu0 %2771
      %vm2773 = vcmask 359424
      %v2774 = vsel %vm2773, %v2764, %v2766
      %v2775 = vsel %vm2773, %v2766, %v2768
      %v2776 = vsel %vm2773, %v2768, %v2770
      %v2777 = vsel %vm2773, %v2770, %v2772
      %v2782 = vsel %vm350, %v2762, 0
      %2784 = vmatpush.msra.mxu0 0.0
      %2785 = vmatpush.msra.mxu0 0.0
      %2786 = vmatpush.msra.mxu0 0.0
      %2787 = vmatpush.msra.mxu0 0.0
      %2788 = vmatpush.msra.mxu0 0.0
      %2789 = vmatpush.msra.mxu0 0.0
      %2790 = vmatpush.msra.mxu0 0.0
      %2791 = vmatpush.msra.mxu0 0.0
      %2792 = vmatpush.msra.mxu0 0.0
      %2793 = vmatpush.msra.mxu0 0.0
      %2794 = vmatpush.msra.mxu0 0.0
      %2795 = vmatpush.msra.mxu0 0.0
      %2796 = vmatpush.msra.mxu0 0.0
      %2797 = vmatpush.msra.mxu0 0.0
      %2798 = vmatpush.msra.mxu0 0.0
      %2799 = vmatpush.msra.mxu0 %v2774
      %2800 = vmatmul.f32.gmra.mxu0 %v2782
      %v2801 = vpop.f32.mrf.mxu0
      %v2802 = vadd.f32 0.0, %v2801
      %2803 = vdwg.mxu0
      %2804 = vmatpush.msra.mxu0 0.0
      %2805 = vmatpush.msra.mxu0 0.0
      %2806 = vmatpush.msra.mxu0 0.0
      %2807 = vmatpush.msra.mxu0 0.0
      %2808 = vmatpush.msra.mxu0 0.0
      %2809 = vmatpush.msra.mxu0 0.0
      %2810 = vmatpush.msra.mxu0 0.0
      %2811 = vmatpush.msra.mxu0 0.0
      %2812 = vmatpush.msra.mxu0 0.0
      %2813 = vmatpush.msra.mxu0 0.0
      %2814 = vmatpush.msra.mxu0 0.0
      %2815 = vmatpush.msra.mxu0 0.0
      %2816 = vmatpush.msra.mxu0 0.0
      %2817 = vmatpush.msra.mxu0 0.0
      %2818 = vmatpush.msra.mxu0 0.0
      %2819 = vmatpush.msra.mxu0 %v2775
      %2820 = vmatmul.f32.gmra.mxu0 %v2782
      %v2821 = vpop.f32.mrf.mxu0
      %v2822 = vadd.f32 0.0, %v2821
      %2823 = vdwg.mxu0
      %2824 = vmatpush.msra.mxu0 0.0
      %2825 = vmatpush.msra.mxu0 0.0
      %2826 = vmatpush.msra.mxu0 0.0
      %2827 = vmatpush.msra.mxu0 0.0
      %2828 = vmatpush.msra.mxu0 0.0
      %2829 = vmatpush.msra.mxu0 0.0
      %2830 = vmatpush.msra.mxu0 0.0
      %2831 = vmatpush.msra.mxu0 0.0
      %2832 = vmatpush.msra.mxu0 0.0
      %2833 = vmatpush.msra.mxu0 0.0
      %2834 = vmatpush.msra.mxu0 0.0
      %2835 = vmatpush.msra.mxu0 0.0
      %2836 = vmatpush.msra.mxu0 0.0
      %2837 = vmatpush.msra.mxu0 0.0
      %2838 = vmatpush.msra.mxu0 0.0
      %2839 = vmatpush.msra.mxu0 %v2776
      %2840 = vmatmul.f32.gmra.mxu0 %v2782
      %v2841 = vpop.f32.mrf.mxu0
      %v2842 = vadd.f32 0.0, %v2841
      %2843 = vdwg.mxu0
      %2844 = vmatpush.msra.mxu0 0.0
      %2845 = vmatpush.msra.mxu0 0.0
      %2846 = vmatpush.msra.mxu0 0.0
      %2847 = vmatpush.msra.mxu0 0.0
      %2848 = vmatpush.msra.mxu0 0.0
      %2849 = vmatpush.msra.mxu0 0.0
      %2850 = vmatpush.msra.mxu0 0.0
      %2851 = vmatpush.msra.mxu0 0.0
      %2852 = vmatpush.msra.mxu0 0.0
      %2853 = vmatpush.msra.mxu0 0.0
      %2854 = vmatpush.msra.mxu0 0.0
      %2855 = vmatpush.msra.mxu0 0.0
      %2856 = vmatpush.msra.mxu0 0.0
      %2857 = vmatpush.msra.mxu0 0.0
      %2858 = vmatpush.msra.mxu0 0.0
      %2859 = vmatpush.msra.mxu0 %v2777
      %2860 = vmatmul.f32.gmra.mxu0 %v2782
      %v2861 = vpop.f32.mrf.mxu0
      %v2862 = vadd.f32 0.0, %v2861
      %2863 = vdwg.mxu0
      %v2864 = vadd.f32 %v2757, %v2802
      %v2865 = vadd.f32 %v2758, %v2822
      %v2866 = vadd.f32 %v2759, %v2842
      %v2867 = vadd.f32 %v2760, %v2862
      %2868 = vrot.lane.b32.xlu0 %v322, 64
      %v2869 = vpop.permute.xlu0 %2868
      %2870 = vrot.lane.b32.xlu0 %v316, 36
      %v2871 = vpop.permute.xlu0 %2870
      %2872 = vrot.lane.b32.xlu0 %v317, 36
      %v2873 = vpop.permute.xlu0 %2872
      %2874 = vrot.lane.b32.xlu0 %v318, 36
      %v2875 = vpop.permute.xlu0 %2874
      %2876 = vrot.lane.b32.xlu0 %v319, 36
      %v2877 = vpop.permute.xlu0 %2876
      %2878 = vrot.lane.b32.xlu0 %v320, 36
      %v2879 = vpop.permute.xlu0 %2878
      %vm2880 = vcmask 293888
      %v2881 = vsel %vm2880, %v2871, %v2873
      %v2882 = vsel %vm2880, %v2873, %v2875
      %v2883 = vsel %vm2880, %v2875, %v2877
      %v2884 = vsel %vm2880, %v2877, %v2879
      %v2889 = vsel %vm350, %v2869, 0
      %2891 = vmatpush.msra.mxu0 0.0
      %2892 = vmatpush.msra.mxu0 0.0
      %2893 = vmatpush.msra.mxu0 0.0
      %2894 = vmatpush.msra.mxu0 0.0
      %2895 = vmatpush.msra.mxu0 0.0
      %2896 = vmatpush.msra.mxu0 0.0
      %2897 = vmatpush.msra.mxu0 0.0
      %2898 = vmatpush.msra.mxu0 0.0
      %2899 = vmatpush.msra.mxu0 0.0
      %2900 = vmatpush.msra.mxu0 0.0
      %2901 = vmatpush.msra.mxu0 0.0
      %2902 = vmatpush.msra.mxu0 0.0
      %2903 = vmatpush.msra.mxu0 0.0
      %2904 = vmatpush.msra.mxu0 0.0
      %2905 = vmatpush.msra.mxu0 0.0
      %2906 = vmatpush.msra.mxu0 %v2881
      %2907 = vmatmul.f32.gmra.mxu0 %v2889
      %v2908 = vpop.f32.mrf.mxu0
      %v2909 = vadd.f32 0.0, %v2908
      %2910 = vdwg.mxu0
      %2911 = vmatpush.msra.mxu0 0.0
      %2912 = vmatpush.msra.mxu0 0.0
      %2913 = vmatpush.msra.mxu0 0.0
      %2914 = vmatpush.msra.mxu0 0.0
      %2915 = vmatpush.msra.mxu0 0.0
      %2916 = vmatpush.msra.mxu0 0.0
      %2917 = vmatpush.msra.mxu0 0.0
      %2918 = vmatpush.msra.mxu0 0.0
      %2919 = vmatpush.msra.mxu0 0.0
      %2920 = vmatpush.msra.mxu0 0.0
      %2921 = vmatpush.msra.mxu0 0.0
      %2922 = vmatpush.msra.mxu0 0.0
      %2923 = vmatpush.msra.mxu0 0.0
      %2924 = vmatpush.msra.mxu0 0.0
      %2925 = vmatpush.msra.mxu0 0.0
      %2926 = vmatpush.msra.mxu0 %v2882
      %2927 = vmatmul.f32.gmra.mxu0 %v2889
      %v2928 = vpop.f32.mrf.mxu0
      %v2929 = vadd.f32 0.0, %v2928
      %2930 = vdwg.mxu0
      %2931 = vmatpush.msra.mxu0 0.0
      %2932 = vmatpush.msra.mxu0 0.0
      %2933 = vmatpush.msra.mxu0 0.0
      %2934 = vmatpush.msra.mxu0 0.0
      %2935 = vmatpush.msra.mxu0 0.0
      %2936 = vmatpush.msra.mxu0 0.0
      %2937 = vmatpush.msra.mxu0 0.0
      %2938 = vmatpush.msra.mxu0 0.0
      %2939 = vmatpush.msra.mxu0 0.0
      %2940 = vmatpush.msra.mxu0 0.0
      %2941 = vmatpush.msra.mxu0 0.0
      %2942 = vmatpush.msra.mxu0 0.0
      %2943 = vmatpush.msra.mxu0 0.0
      %2944 = vmatpush.msra.mxu0 0.0
      %2945 = vmatpush.msra.mxu0 0.0
      %2946 = vmatpush.msra.mxu0 %v2883
      %2947 = vmatmul.f32.gmra.mxu0 %v2889
      %v2948 = vpop.f32.mrf.mxu0
      %v2949 = vadd.f32 0.0, %v2948
      %2950 = vdwg.mxu0
      %2951 = vmatpush.msra.mxu0 0.0
      %2952 = vmatpush.msra.mxu0 0.0
      %2953 = vmatpush.msra.mxu0 0.0
      %2954 = vmatpush.msra.mxu0 0.0
      %2955 = vmatpush.msra.mxu0 0.0
      %2956 = vmatpush.msra.mxu0 0.0
      %2957 = vmatpush.msra.mxu0 0.0
      %2958 = vmatpush.msra.mxu0 0.0
      %2959 = vmatpush.msra.mxu0 0.0
      %2960 = vmatpush.msra.mxu0 0.0
      %2961 = vmatpush.msra.mxu0 0.0
      %2962 = vmatpush.msra.mxu0 0.0
      %2963 = vmatpush.msra.mxu0 0.0
      %2964 = vmatpush.msra.mxu0 0.0
      %2965 = vmatpush.msra.mxu0 0.0
      %2966 = vmatpush.msra.mxu0 %v2884
      %2967 = vmatmul.f32.gmra.mxu0 %v2889
      %v2968 = vpop.f32.mrf.mxu0
      %v2969 = vadd.f32 0.0, %v2968
      %2970 = vdwg.mxu0
      %v2971 = vadd.f32 %v2864, %v2909
      %v2972 = vadd.f32 %v2865, %v2929
      %v2973 = vadd.f32 %v2866, %v2949
      %v2974 = vadd.f32 %v2867, %v2969
      %2975 = vrot.lane.b32.xlu0 %v322, 56
      %v2976 = vpop.permute.xlu0 %2975
      %2977 = vrot.lane.b32.xlu0 %v316, 35
      %v2978 = vpop.permute.xlu0 %2977
      %2979 = vrot.lane.b32.xlu0 %v317, 35
      %v2980 = vpop.permute.xlu0 %2979
      %2981 = vrot.lane.b32.xlu0 %v318, 35
      %v2982 = vpop.permute.xlu0 %2981
      %2983 = vrot.lane.b32.xlu0 %v319, 35
      %v2984 = vpop.permute.xlu0 %2983
      %2985 = vrot.lane.b32.xlu0 %v320, 35
      %v2986 = vpop.permute.xlu0 %2985
      %vm2987 = vcmask 285696
      %v2988 = vsel %vm2987, %v2978, %v2980
      %v2989 = vsel %vm2987, %v2980, %v2982
      %v2990 = vsel %vm2987, %v2982, %v2984
      %v2991 = vsel %vm2987, %v2984, %v2986
      %v2996 = vsel %vm350, %v2976, 0
      %2998 = vmatpush.msra.mxu0 0.0
      %2999 = vmatpush.msra.mxu0 0.0
      %3000 = vmatpush.msra.mxu0 0.0
      %3001 = vmatpush.msra.mxu0 0.0
      %3002 = vmatpush.msra.mxu0 0.0
      %3003 = vmatpush.msra.mxu0 0.0
      %3004 = vmatpush.msra.mxu0 0.0
      %3005 = vmatpush.msra.mxu0 0.0
      %3006 = vmatpush.msra.mxu0 0.0
      %3007 = vmatpush.msra.mxu0 0.0
      %3008 = vmatpush.msra.mxu0 0.0
      %3009 = vmatpush.msra.mxu0 0.0
      %3010 = vmatpush.msra.mxu0 0.0
      %3011 = vmatpush.msra.mxu0 0.0
      %3012 = vmatpush.msra.mxu0 0.0
      %3013 = vmatpush.msra.mxu0 %v2988
      %3014 = vmatmul.f32.gmra.mxu0 %v2996
      %v3015 = vpop.f32.mrf.mxu0
      %v3016 = vadd.f32 0.0, %v3015
      %3017 = vdwg.mxu0
      %3018 = vmatpush.msra.mxu0 0.0
      %3019 = vmatpush.msra.mxu0 0.0
      %3020 = vmatpush.msra.mxu0 0.0
      %3021 = vmatpush.msra.mxu0 0.0
      %3022 = vmatpush.msra.mxu0 0.0
      %3023 = vmatpush.msra.mxu0 0.0
      %3024 = vmatpush.msra.mxu0 0.0
      %3025 = vmatpush.msra.mxu0 0.0
      %3026 = vmatpush.msra.mxu0 0.0
      %3027 = vmatpush.msra.mxu0 0.0
      %3028 = vmatpush.msra.mxu0 0.0
      %3029 = vmatpush.msra.mxu0 0.0
      %3030 = vmatpush.msra.mxu0 0.0
      %3031 = vmatpush.msra.mxu0 0.0
      %3032 = vmatpush.msra.mxu0 0.0
      %3033 = vmatpush.msra.mxu0 %v2989
      %3034 = vmatmul.f32.gmra.mxu0 %v2996
      %v3035 = vpop.f32.mrf.mxu0
      %v3036 = vadd.f32 0.0, %v3035
      %3037 = vdwg.mxu0
      %3038 = vmatpush.msra.mxu0 0.0
      %3039 = vmatpush.msra.mxu0 0.0
      %3040 = vmatpush.msra.mxu0 0.0
      %3041 = vmatpush.msra.mxu0 0.0
      %3042 = vmatpush.msra.mxu0 0.0
      %3043 = vmatpush.msra.mxu0 0.0
      %3044 = vmatpush.msra.mxu0 0.0
      %3045 = vmatpush.msra.mxu0 0.0
      %3046 = vmatpush.msra.mxu0 0.0
      %3047 = vmatpush.msra.mxu0 0.0
      %3048 = vmatpush.msra.mxu0 0.0
      %3049 = vmatpush.msra.mxu0 0.0
      %3050 = vmatpush.msra.mxu0 0.0
      %3051 = vmatpush.msra.mxu0 0.0
      %3052 = vmatpush.msra.mxu0 0.0
      %3053 = vmatpush.msra.mxu0 %v2990
      %3054 = vmatmul.f32.gmra.mxu0 %v2996
      %v3055 = vpop.f32.mrf.mxu0
      %v3056 = vadd.f32 0.0, %v3055
      %3057 = vdwg.mxu0
      %3058 = vmatpush.msra.mxu0 0.0
      %3059 = vmatpush.msra.mxu0 0.0
      %3060 = vmatpush.msra.mxu0 0.0
      %3061 = vmatpush.msra.mxu0 0.0
      %3062 = vmatpush.msra.mxu0 0.0
      %3063 = vmatpush.msra.mxu0 0.0
      %3064 = vmatpush.msra.mxu0 0.0
      %3065 = vmatpush.msra.mxu0 0.0
      %3066 = vmatpush.msra.mxu0 0.0
      %3067 = vmatpush.msra.mxu0 0.0
      %3068 = vmatpush.msra.mxu0 0.0
      %3069 = vmatpush.msra.mxu0 0.0
      %3070 = vmatpush.msra.mxu0 0.0
      %3071 = vmatpush.msra.mxu0 0.0
      %3072 = vmatpush.msra.mxu0 0.0
      %3073 = vmatpush.msra.mxu0 %v2991
      %3074 = vmatmul.f32.gmra.mxu0 %v2996
      %v3075 = vpop.f32.mrf.mxu0
      %v3076 = vadd.f32 0.0, %v3075
      %3077 = vdwg.mxu0
      %v3078 = vadd.f32 %v2971, %v3016
      %v3079 = vadd.f32 %v2972, %v3036
      %v3080 = vadd.f32 %v2973, %v3056
      %v3081 = vadd.f32 %v2974, %v3076
      %3082 = vrot.lane.b32.xlu0 %v322, 48
      %v3083 = vpop.permute.xlu0 %3082
      %3084 = vrot.lane.b32.xlu0 %v316, 34
      %v3085 = vpop.permute.xlu0 %3084
      %3086 = vrot.lane.b32.xlu0 %v317, 34
      %v3087 = vpop.permute.xlu0 %3086
      %3088 = vrot.lane.b32.xlu0 %v318, 34
      %v3089 = vpop.permute.xlu0 %3088
      %3090 = vrot.lane.b32.xlu0 %v319, 34
      %v3091 = vpop.permute.xlu0 %3090
      %3092 = vrot.lane.b32.xlu0 %v320, 34
      %v3093 = vpop.permute.xlu0 %3092
      %vm3094 = vcmask 277504
      %v3095 = vsel %vm3094, %v3085, %v3087
      %v3096 = vsel %vm3094, %v3087, %v3089
      %v3097 = vsel %vm3094, %v3089, %v3091
      %v3098 = vsel %vm3094, %v3091, %v3093
      %v3103 = vsel %vm350, %v3083, 0
      %3105 = vmatpush.msra.mxu0 0.0
      %3106 = vmatpush.msra.mxu0 0.0
      %3107 = vmatpush.msra.mxu0 0.0
      %3108 = vmatpush.msra.mxu0 0.0
      %3109 = vmatpush.msra.mxu0 0.0
      %3110 = vmatpush.msra.mxu0 0.0
      %3111 = vmatpush.msra.mxu0 0.0
      %3112 = vmatpush.msra.mxu0 0.0
      %3113 = vmatpush.msra.mxu0 0.0
      %3114 = vmatpush.msra.mxu0 0.0
      %3115 = vmatpush.msra.mxu0 0.0
      %3116 = vmatpush.msra.mxu0 0.0
      %3117 = vmatpush.msra.mxu0 0.0
      %3118 = vmatpush.msra.mxu0 0.0
      %3119 = vmatpush.msra.mxu0 0.0
      %3120 = vmatpush.msra.mxu0 %v3095
      %3121 = vmatmul.f32.gmra.mxu0 %v3103
      %v3122 = vpop.f32.mrf.mxu0
      %v3123 = vadd.f32 0.0, %v3122
      %3124 = vdwg.mxu0
      %3125 = vmatpush.msra.mxu0 0.0
      %3126 = vmatpush.msra.mxu0 0.0
      %3127 = vmatpush.msra.mxu0 0.0
      %3128 = vmatpush.msra.mxu0 0.0
      %3129 = vmatpush.msra.mxu0 0.0
      %3130 = vmatpush.msra.mxu0 0.0
      %3131 = vmatpush.msra.mxu0 0.0
      %3132 = vmatpush.msra.mxu0 0.0
      %3133 = vmatpush.msra.mxu0 0.0
      %3134 = vmatpush.msra.mxu0 0.0
      %3135 = vmatpush.msra.mxu0 0.0
      %3136 = vmatpush.msra.mxu0 0.0
      %3137 = vmatpush.msra.mxu0 0.0
      %3138 = vmatpush.msra.mxu0 0.0
      %3139 = vmatpush.msra.mxu0 0.0
      %3140 = vmatpush.msra.mxu0 %v3096
      %3141 = vmatmul.f32.gmra.mxu0 %v3103
      %v3142 = vpop.f32.mrf.mxu0
      %v3143 = vadd.f32 0.0, %v3142
      %3144 = vdwg.mxu0
      %3145 = vmatpush.msra.mxu0 0.0
      %3146 = vmatpush.msra.mxu0 0.0
      %3147 = vmatpush.msra.mxu0 0.0
      %3148 = vmatpush.msra.mxu0 0.0
      %3149 = vmatpush.msra.mxu0 0.0
      %3150 = vmatpush.msra.mxu0 0.0
      %3151 = vmatpush.msra.mxu0 0.0
      %3152 = vmatpush.msra.mxu0 0.0
      %3153 = vmatpush.msra.mxu0 0.0
      %3154 = vmatpush.msra.mxu0 0.0
      %3155 = vmatpush.msra.mxu0 0.0
      %3156 = vmatpush.msra.mxu0 0.0
      %3157 = vmatpush.msra.mxu0 0.0
      %3158 = vmatpush.msra.mxu0 0.0
      %3159 = vmatpush.msra.mxu0 0.0
      %3160 = vmatpush.msra.mxu0 %v3097
      %3161 = vmatmul.f32.gmra.mxu0 %v3103
      %v3162 = vpop.f32.mrf.mxu0
      %v3163 = vadd.f32 0.0, %v3162
      %3164 = vdwg.mxu0
      %3165 = vmatpush.msra.mxu0 0.0
      %3166 = vmatpush.msra.mxu0 0.0
      %3167 = vmatpush.msra.mxu0 0.0
      %3168 = vmatpush.msra.mxu0 0.0
      %3169 = vmatpush.msra.mxu0 0.0
      %3170 = vmatpush.msra.mxu0 0.0
      %3171 = vmatpush.msra.mxu0 0.0
      %3172 = vmatpush.msra.mxu0 0.0
      %3173 = vmatpush.msra.mxu0 0.0
      %3174 = vmatpush.msra.mxu0 0.0
      %3175 = vmatpush.msra.mxu0 0.0
      %3176 = vmatpush.msra.mxu0 0.0
      %3177 = vmatpush.msra.mxu0 0.0
      %3178 = vmatpush.msra.mxu0 0.0
      %3179 = vmatpush.msra.mxu0 0.0
      %3180 = vmatpush.msra.mxu0 %v3098
      %3181 = vmatmul.f32.gmra.mxu0 %v3103
      %v3182 = vpop.f32.mrf.mxu0
      %v3183 = vadd.f32 0.0, %v3182
      %3184 = vdwg.mxu0
      %v3185 = vadd.f32 %v3078, %v3123
      %v3186 = vadd.f32 %v3079, %v3143
      %v3187 = vadd.f32 %v3080, %v3163
      %v3188 = vadd.f32 %v3081, %v3183
      %v3189 = vld [vmem:[%s204] sm:$0xf]
      %v3191 = vperm.slane %v3189, 0
      %v3192 = vperm.slane %v3189, 1
      %v3193 = vperm.slane %v3189, 2
      %v3194 = vperm.slane %v3189, 3
      %v3199 = vmul.f32 %v3185, %v3191
      %v3200 = vmul.f32 %v3186, %v3192
      %v3201 = vmul.f32 %v3187, %v3193
      %v3202 = vmul.f32 %v3188, %v3194
      %v3203 = vadd.f32 %v3199, %v3200
      %v3204 = vadd.f32 %v3203, %v3201
      %v3205 = vadd.f32 %v3204, %v3202
      %3206 = vadd.xlane.f32.xlu0 %v3205
      %v3207 = vpop.xlane.xlu0 %3206
      %vm3208 = vcmask 7168
      %3209 = vst.msk [vmem:[%s215] sm:$0xff] %vm3208, %v3207
      %v3210 = vmul.f32 %v3199, %v3185
      %v3211 = vmul.f32 %v3200, %v3186
      %v3212 = vmul.f32 %v3201, %v3187
      %v3213 = vmul.f32 %v3202, %v3188
      %v3214 = vadd.f32 %v3210, %v3211
      %v3215 = vadd.f32 %v3214, %v3212
      %v3216 = vadd.f32 %v3215, %v3213
      %3217 = vadd.xlane.f32.xlu0 %v3216
      %v3218 = vpop.xlane.xlu0 %3217
      %3219 = vst.msk [vmem:[%s219] sm:$0xff] %vm3208, %v3218
      %3220 = vst [vmem:[%s210] sm:$0xff] %v3185
      %3221 = vst [vmem:[%s210 + $0x8] sm:$0xff] %v3186
      %3222 = vst [vmem:[%s210 + $0x10] sm:$0xff] %v3187
      %3223 = vst [vmem:[%s210 + $0x18] sm:$0xff] %v3188
      %s3224 = smul.u32 4, %s17
      %p3225 = scmp.lt.s32.totalorder %s3224, 15
      %s3226 = scalar_select %p3225, %s3224, 15
      %s3227 = smul.addr %s3226, 8
      %s3228 = scalar_lea.vmem %s3, %s3227
      %p3229 = scmp.lt.s32.totalorder %s17, 3
      %s3230 = scalar_select %p3229, %s17, 3
      %s3231 = smul.addr %s3230, 8
      %s3232 = scalar_lea.vmem %s4, %s3231
      %p3233 = scmp.lt.s32.totalorder %s17, 3
      %s3234 = scalar_select %p3233, %s17, 3
      %s3235 = smul.addr %s3234, 8
      %s3236 = scalar_lea.vmem %s5, %s3235
      // Predicated region
      $region75: #{encoder1_forward.4} parent=27 // pred_check
        %p3237 = pneg %p82
      $region76: #{encoder1_forward.4} parent=27 // pred_check_branch
        %3239 = sbr.rel (%p3237) target = $region78
      $region77: #{encoder1_forward.4} parent=27 // pred_region
        %s3240 = smul.u32 4, %s17
      $region78: #{encoder1_forward.4} parent=27 // pred_fallthru
        _
      // Predicated region
      $region79: #{encoder1_forward.4} parent=27 // pred_check
        %p3241 = pneg %p108
      $region80: #{encoder1_forward.4} parent=27 // pred_check_branch
        %3243 = sbr.rel (%p3241) target = $region82
      $region81: #{encoder1_forward.4} parent=27 // pred_region
        _
      $region82: #{encoder1_forward.4} parent=27 // pred_fallthru
        _
      // Predicated region
      $region83: #{encoder1_forward.4} parent=27 // pred_check
        %p3244 = pneg %p134
      $region84: #{encoder1_forward.4} parent=27 // pred_check_branch
        %3246 = sbr.rel (%p3244) target = $region86
      $region85: #{encoder1_forward.4} parent=27 // pred_region
        _
      $region86: #{encoder1_forward.4} parent=27 // pred_fallthru
        _
    $region28: #{encoder1_forward.4} parent=5 // pred_fallthru
      _
    %p3247 = scmp.le.s32.totalorder 2, %s12
    // Predicated region
    $region87: #{encoder1_forward.4} parent=5 // pred_check
      %p3248 = pneg %p3247
    $region88: #{encoder1_forward.4} parent=5 // pred_check_branch
      %3250 = sbr.rel (%p3248) target = $region90
    $region89: #{encoder1_forward.4} parent=5 // pred_region
      %s3251 = ssub.s32 %s12, 2
      // Predicated region
      $region91: #{encoder1_forward.4} parent=89 // pred_check
        %p3252 = pneg %p88
      $region92: #{encoder1_forward.4} parent=89 // pred_check_branch
        %3254 = sbr.rel (%p3252) target = $region94
      $region93: #{encoder1_forward.4} parent=89 // pred_region
        %s3255 = smul.u32 4, %s18
        %p3256 = scmp.lt.s32.totalorder %s3255, 15
        %s3257 = scalar_select %p3256, %s3255, 15
        %s3258 = smul.addr %s3257, 8
        %s3259 = scalar_lea.vmem %s3, %s3258
      $region94: #{encoder1_forward.4} parent=89 // pred_fallthru
        _
      // Predicated region
      $region95: #{encoder1_forward.4} parent=89 // pred_check
        %p3260 = pneg %p114
      $region96: #{encoder1_forward.4} parent=89 // pred_check_branch
        %3262 = sbr.rel (%p3260) target = $region98
      $region97: #{encoder1_forward.4} parent=89 // pred_region
        %p3263 = scmp.lt.s32.totalorder %s18, 3
        %s3264 = scalar_select %p3263, %s18, 3
        %s3265 = smul.addr %s3264, 8
        %s3266 = scalar_lea.vmem %s4, %s3265
      $region98: #{encoder1_forward.4} parent=89 // pred_fallthru
        _
      // Predicated region
      $region99: #{encoder1_forward.4} parent=89 // pred_check
        %p3267 = pneg %p140
      $region100: #{encoder1_forward.4} parent=89 // pred_check_branch
        %3269 = sbr.rel (%p3267) target = $region102
      $region101: #{encoder1_forward.4} parent=89 // pred_region
        %p3270 = scmp.lt.s32.totalorder %s18, 3
        %s3271 = scalar_select %p3270, %s18, 3
        %s3272 = smul.addr %s3271, 8
        %s3273 = scalar_lea.vmem %s5, %s3272
      $region102: #{encoder1_forward.4} parent=89 // pred_fallthru
        _
    $region90: #{encoder1_forward.4} parent=5 // pred_fallthru
      _
  $region6: #{encoder1_forward.4} parent=0 // loop_footer
    %s16 = sadd.s32 1, %s12
  $region7: #{encoder1_forward.4} parent=0 // loop_footer_branch
    %11 = sbr.rel target = $region3
  $region8: #{encoder1_forward.4} parent=0 // loop_exit
    _
  %3274 = vsyncmov [#allocation3]
  %s3275 = vpop.sfrf %3274
  %p3276 = scmp.eq.s32.totalorder %s3275, 0
  %p3277 = pneg %p3276
  %3279 = shalt.err (%p3277)
  %s3280 = scalar_lea.sflag [#allocation3], 1
  %3281 = vsyncmov %s3280
  %s3282 = vpop.sfrf %3281
  %p3283 = scmp.eq.s32.totalorder %s3282, 0
  %p3284 = pneg %p3283
  %3286 = shalt.err (%p3284)

</llo_original>
